<compile_context>
chip_gen: v6e
topology: v6e:2x2x1
jax: 0.10.0
libtpu: 0.0.40
codegen_flags: <defaults>
</compile_context>

<pallas_src>
import functools
import math

import jax
import jax.numpy as jnp
from jax.experimental import pallas as pl
from jax.experimental.pallas import tpu as pltpu


# ------------------------------ BlockSpec helper ----------------------------

def _full_spec(shape):
    """Whole-array-in-VMEM BlockSpec for a single-step grid."""
    nd = len(shape)
    return pl.BlockSpec(shape, lambda i, _nd=nd: (0,) * _nd)


# ----------------------------- Kernel 1: stage-1 ----------------------------

def _stage1_kernel(cols_ref, wc_ref, bc_ref, wn_ref, bn_ref, f_ref, n_ref):
    """3x3/s2 conv (im2col matmul) + bias + ReLU, fused with the 1x1 neck.

    Operates on all B*H1*W1 rows in one block (batch folded into rows).
    Outputs stored as bf16 (all downstream consumers feed the MXU in bf16).
    """
    f = jnp.dot(cols_ref[...], wc_ref[...],
                preferred_element_type=jnp.float32) + bc_ref[...]
    f = jnp.maximum(f, 0.0)
    n = jnp.dot(f.astype(jnp.bfloat16), wn_ref[...],
                preferred_element_type=jnp.float32) + bn_ref[...]
    f_ref[...] = f.astype(f_ref.dtype)
    n_ref[...] = n.astype(n_ref.dtype)


def stage1_conv_neck(cols1, wc, bc, wn, bn):
    M, K = cols1.shape
    Cf, Cn = wc.shape[1], wn.shape[1]
    flops = 2 * M * (K * Cf + Cf * Cn)
    bytes_acc = (cols1.size * cols1.dtype.itemsize + wc.size * 2 + wn.size * 2
                 + (Cf + Cn) * 4 + M * (Cf + Cn) * 2)
    return pl.pallas_call(
        _stage1_kernel,
        out_shape=(jax.ShapeDtypeStruct((M, Cf), jnp.bfloat16),
                   jax.ShapeDtypeStruct((M, Cn), jnp.bfloat16)),
        grid=(1,),
        in_specs=[_full_spec((M, K)),
                  _full_spec((K, Cf)), _full_spec((1, Cf)),
                  _full_spec((Cf, Cn)), _full_spec((1, Cn))],
        out_specs=(_full_spec((M, Cf)), _full_spec((M, Cn))),
        compiler_params=pltpu.CompilerParams(
            dimension_semantics=("arbitrary",)),
        cost_estimate=pl.CostEstimate(flops=int(flops), transcendentals=0,
                                      bytes_accessed=int(bytes_acc)),
    )(cols1, wc, bc.reshape(1, Cf), wn, bn.reshape(1, Cn))


# -------- Kernel 2: stage-2 conv + pixel decoder + decoder + heads ----------

def _decoder_heads_kernel(
        cols2_ref, cols3_ref, memf_ref, q0_ref,
        wc2_ref, bc2_ref, wn2_ref, bn2_ref, wmc_ref, bmc_ref,
        lvl_ref, wattn_ref, battn_ref, wf1_ref, bf1_ref, wf2_ref, bf2_ref,
        lng_ref, lnb_ref,
        wcls_ref, bcls_ref, wm1_ref, bm1_ref, wm2_ref, bm2_ref,
        out_ref, *, B, Q, D, HW, NC, num_layers, scale, eps, out_width):
    f32 = jnp.float32
    bf16 = jnp.bfloat16

    def mm(x, w, b):  # bf16 MXU matmul, f32 accumulation, bias epilogue
        return jnp.dot(x.astype(bf16), w, preferred_element_type=f32) + b

    # ---- backbone stage 2 + neck2 (coarse memory); f2 never leaves VMEM ----
    f2 = jnp.maximum(mm(cols2_ref[...], wc2_ref[...], bc2_ref[...]), 0.0)
    mem_coarse = mm(f2, wn2_ref[...], bn2_ref[...])            # [B*S2, D] f32

    # ---- pixel decoder: 3x3 conv -> mask feature ----
    mask_feat = jnp.maximum(mm(cols3_ref[...], wmc_ref[...], bmc_ref[...]),
                            0.0)                               # [B*HW, D] f32
    mem_fine = memf_ref[...].astype(f32)                       # [B*S1, D] f32
    memories = (mem_coarse, mem_fine)

    def layer_norm(x, l, i):                                   # f32 statistics
        mu = jnp.mean(x, axis=-1, keepdims=True)
        var = jnp.mean(jnp.square(x - mu), axis=-1, keepdims=True)
        return (x - mu) * jax.lax.rsqrt(var + eps) * lng_ref[l, i] \
            + lnb_ref[l, i]

    def attend(qp, kp, vp):
        """Single-head softmax attention; batch split only for the softmax."""
        qh = qp.reshape(B, Q, D).astype(bf16)
        kh = kp.reshape(B, -1, D).astype(bf16)
        vh = vp.reshape(B, -1, D).astype(bf16)
        s = jnp.einsum("bqd,bkd->bqk", qh, kh,
                       preferred_element_type=f32) * scale
        p = jnp.exp(s - jnp.max(s, axis=-1, keepdims=True))
        inv = pl.reciprocal(jnp.sum(p, axis=-1, keepdims=True), approx=True)
        o = jnp.einsum("bqk,bkd->bqd", (p * inv).astype(bf16), vh,
                       preferred_element_type=f32)
        return o.reshape(B * Q, D)

    # ---- transformer decoder: all layers unrolled, q stays resident ----
    q = q0_ref[...]                                            # [B*Q, D] f32
    for l in range(num_layers):
        mem = memories[l % 2] + lvl_ref[l % 2]                 # + level embed
        # cross attention (queries attend over multi-scale memory)
        qp = mm(q, wattn_ref[l, 0], battn_ref[l, 0])
        kp = mm(mem, wattn_ref[l, 1], battn_ref[l, 1])
        vp = mm(mem, wattn_ref[l, 2], battn_ref[l, 2])
        a = mm(attend(qp, kp, vp), wattn_ref[l, 3], battn_ref[l, 3])
        q = layer_norm(q + a, l, 0)
        # self attention
        sq = mm(q, wattn_ref[l, 4], battn_ref[l, 4])
        sk = mm(q, wattn_ref[l, 5], battn_ref[l, 5])
        sv = mm(q, wattn_ref[l, 6], battn_ref[l, 6])
        a = mm(attend(sq, sk, sv), wattn_ref[l, 7], battn_ref[l, 7])
        q = layer_norm(q + a, l, 1)
        # FFN
        h = jnp.maximum(mm(q, wf1_ref[l], bf1_ref[l]), 0.0)
        q = layer_norm(q + mm(h, wf2_ref[l], bf2_ref[l]), l, 2)

    # ---- prediction heads ----
    logits = mm(q, wcls_ref[...], bcls_ref[...])               # [B*Q, NC]
    h = jnp.maximum(mm(q, wm1_ref[...], bm1_ref[...]), 0.0)
    me = mm(h, wm2_ref[...], bm2_ref[...])                     # [B*Q, D]
    masks = jnp.einsum("bqd,bpd->bqp",
                       me.reshape(B, Q, D).astype(bf16),
                       mask_feat.reshape(B, HW, D).astype(bf16),
                       preferred_element_type=f32)             # [B, Q, HW]
    masks2d = masks.reshape(B * Q, HW)

    # lane-dense output slab: [masks | logits | zero pad] -> out_width lanes
    pieces = [masks2d, logits]
    if out_width > HW + NC:
        pieces.append(jnp.zeros((B * Q, out_width - HW - NC), f32))
    out_ref[...] = jnp.concatenate(pieces, axis=-1)


def fused_decoder(cols2, cols3, mem_fine, q0, p):
    B_Q, D = q0.shape
    L = p["dec_w_attn"].shape[0]
    Q = p["query_embed"].shape[0]
    B = B_Q // Q
    NC = p["cls_w"].shape[1]
    M2, K2 = cols2.shape
    M3, K3 = cols3.shape
    HW = M3 // B
    S1 = mem_fine.shape[0] // B
    S2 = M2 // B
    out_w = ((HW + NC + 127) // 128) * 128

    kernel = functools.partial(
        _decoder_heads_kernel, B=B, Q=Q, D=D, HW=HW, NC=NC, num_layers=L,
        scale=1.0 / math.sqrt(D), eps=1e-5, out_width=out_w)

    operands = (cols2, cols3, mem_fine, q0,
                p["conv2_w"], p["conv2_b"].reshape(1, -1),
                p["neck2_w"], p["neck2_b"].reshape(1, -1),
                p["maskconv_w"], p["maskconv_b"].reshape(1, -1),
                p["lvl_embed"].reshape(-1, 1, D),
                p["dec_w_attn"], p["dec_b_attn"],
                p["dec_w_f1"], p["dec_b_f1"],
                p["dec_w_f2"], p["dec_b_f2"],
                p["dec_ln_g"], p["dec_ln_b"],
                p["cls_w"], p["cls_b"].reshape(1, -1),
                p["mask_w1"], p["mask_b1"].reshape(1, -1),
                p["mask_w2"], p["mask_b2"].reshape(1, -1))

    # advisory cost estimate (matmuls dominate)
    flops = 2 * (M2 * K2 * D + M2 * D * D + M3 * K3 * D)
    trans = 0
    for l in range(L):
        S = S2 if l % 2 == 0 else S1
        flops += 2 * D * D * (2 * B_Q + 2 * B * S)      # cross q,o / k,v proj
        flops += 2 * B * Q * S * D * 2                  # cross attn matmuls
        flops += 2 * D * D * 4 * B_Q + 2 * B * Q * Q * D * 2   # self attn
        flops += 2 * B_Q * D * (2 * D) * 2              # FFN
        trans += B * Q * (S + Q)                        # exp count
    flops += 2 * B_Q * D * (NC + 2 * D) + 2 * B * Q * HW * D
    bytes_acc = int(sum(a.size * a.dtype.itemsize for a in operands)
                    + B_Q * out_w * 4)

    return pl.pallas_call(
        kernel,
        out_shape=jax.ShapeDtypeStruct((B_Q, out_w), jnp.float32),
        grid=(1,),
        in_specs=[_full_spec(a.shape) for a in operands],
        out_specs=_full_spec((B_Q, out_w)),
        compiler_params=pltpu.CompilerParams(
            dimension_semantics=("arbitrary",)),
        cost_estimate=pl.CostEstimate(flops=int(flops),
                                      transcendentals=int(trans),
                                      bytes_accessed=bytes_acc),
    )(*operands)


# ------------------------------ XLA glue helpers ----------------------------

def im2col(x, kh, kw, stride, pad):
    """x: NHWC. Returns patches [B*Ho*Wo, kh*kw*C] ordered (kh, kw, C)."""
    B, H, W, C = x.shape
    xp = jnp.pad(x, ((0, 0), (pad, pad), (pad, pad), (0, 0)))
    Ho = (H + 2 * pad - kh) // stride + 1
    Wo = (W + 2 * pad - kw) // stride + 1
    cols = []
    for i in range(kh):
        for j in range(kw):
            cols.append(xp[:, i:i + Ho * stride:stride,
                           j:j + Wo * stride:stride, :])
    cols = jnp.concatenate(cols, axis=-1)            # [B, Ho, Wo, kh*kw*C]
    return cols.reshape(B * Ho * Wo, kh * kw * C), Ho, Wo


# -------------------------------- parameters --------------------------------

def init_params(key, cin=4, c1=16, hidden=32, num_queries=8,
                num_classes=3, num_layers=2):
    keys = iter(jax.random.split(key, 32))

    def dense(shape, scale=0.02):
        return jax.random.normal(next(keys), shape, jnp.float32) * scale

    def w(shape):   # matmul weights in bf16 (MXU-native, half the HBM bytes)
        return dense(shape).astype(jnp.bfloat16)

    p = {}
    # backbone (3x3 stride-2 convs)
    p["conv1_w"] = w((3 * 3 * cin, c1))
    p["conv1_b"] = jnp.zeros((c1,), jnp.float32)
    p["conv2_w"] = w((3 * 3 * c1, hidden))
    p["conv2_b"] = jnp.zeros((hidden,), jnp.float32)
    # neck (1x1 lateral projections)
    p["neck1_w"] = w((c1, hidden))
    p["neck1_b"] = jnp.zeros((hidden,), jnp.float32)
    p["neck2_w"] = w((hidden, hidden))
    p["neck2_b"] = jnp.zeros((hidden,), jnp.float32)
    # pixel decoder
    p["maskconv_w"] = w((3 * 3 * hidden, hidden))
    p["maskconv_b"] = jnp.zeros((hidden,), jnp.float32)
    p["lvl_embed"] = dense((2, hidden))
    # transformer decoder: weights stacked over layers (one ref per role)
    p["query_embed"] = dense((num_queries, hidden))
    # attention roles: 0..3 = cross q,k,v,o ; 4..7 = self q,k,v,o
    p["dec_w_attn"] = w((num_layers, 8, hidden, hidden))
    p["dec_b_attn"] = jnp.zeros((num_layers, 8, 1, hidden), jnp.float32)
    p["dec_w_f1"] = w((num_layers, hidden, 2 * hidden))
    p["dec_b_f1"] = jnp.zeros((num_layers, 1, 2 * hidden), jnp.float32)
    p["dec_w_f2"] = w((num_layers, 2 * hidden, hidden))
    p["dec_b_f2"] = jnp.zeros((num_layers, 1, hidden), jnp.float32)
    # LayerNorms (rows: cross / self / ffn)
    p["dec_ln_g"] = jnp.ones((num_layers, 3, 1, hidden), jnp.float32)
    p["dec_ln_b"] = jnp.zeros((num_layers, 3, 1, hidden), jnp.float32)
    # heads
    p["cls_w"] = w((hidden, num_classes + 1))
    p["cls_b"] = jnp.zeros((num_classes + 1,), jnp.float32)
    p["mask_w1"] = w((hidden, hidden))
    p["mask_b1"] = jnp.zeros((hidden,), jnp.float32)
    p["mask_w2"] = w((hidden, hidden))
    p["mask_b2"] = jnp.zeros((hidden,), jnp.float32)
    return p


# ------------------------------- forward pass --------------------------------

def mask2former_forward(params, x_nchw):
    # PyTorch NCHW -> internal NHWC
    x = jnp.transpose(x_nchw, (0, 2, 3, 1)).astype(jnp.float32)
    B = x.shape[0]
    Q, D = params["query_embed"].shape
    NC = params["cls_w"].shape[1]

    # kernel 1: backbone stage 1 + neck1 (input patches extracted in XLA)
    cols1, H1, W1 = im2col(x, 3, 3, 2, 1)
    f1, n1 = stage1_conv_neck(cols1.astype(jnp.bfloat16),
                              params["conv1_w"], params["conv1_b"],
                              params["neck1_w"], params["neck1_b"])
    # f1: [B*H1*W1, c1] bf16, n1 (fine memory / mask-conv input): [.., D] bf16

    # inter-stage patch extraction (tiny bf16 XLA glue; see TODO at top)
    cols2, H2, W2 = im2col(f1.reshape(B, H1, W1, -1), 3, 3, 2, 1)
    cols3, Hm, Wm = im2col(n1.reshape(B, H1, W1, -1), 3, 3, 1, 1)

    # kernel 2: stage-2 conv+neck, mask feature, full decoder, heads
    q0 = jnp.tile(params["query_embed"], (B, 1)).astype(jnp.float32)
    out = fused_decoder(cols2, cols3, n1, q0, params)     # [B*Q, 128]

    HW = Hm * Wm
    pred_masks = out[:, :HW].reshape(B, Q, Hm, Wm)
    pred_logits = out[:, HW:HW + NC].reshape(B, Q, NC)
    return {"pred_logits": pred_logits, "pred_masks": pred_masks}


# ----------------------------------- main ------------------------------------

if __name__ == "__main__":
    key = jax.random.PRNGKey(0)
    pkey, xkey = jax.random.split(key)
    params = init_params(pkey)
    # PyTorch-style NCHW input: batch=2, channels=4, spatial=16x16
    x = jax.random.normal(xkey, (2, 4, 16, 16), jnp.float32)

    out = jax.jit(mask2former_forward)(params, x)
    out = jax.block_until_ready(out)

    assert out["pred_logits"].shape == (2, 8, 4)
    assert out["pred_masks"].shape == (2, 8, 8, 8)
    assert jnp.all(jnp.isfinite(out["pred_logits"]))
    assert jnp.all(jnp.isfinite(out["pred_masks"]))
    print("KERNEL_OK")
</pallas_src>

<mosaic_0001>
module attributes {stable_mosaic.version = 11 : i64} {
  func.func @_stage1_kernel(%arg0: i32, %arg1: memref<128x36xbf16, #tpu.memory_space<vmem>>, %arg2: memref<36x16xbf16, #tpu.memory_space<vmem>>, %arg3: memref<1x16xf32, #tpu.memory_space<vmem>>, %arg4: memref<16x32xbf16, #tpu.memory_space<vmem>>, %arg5: memref<1x32xf32, #tpu.memory_space<vmem>>, %arg6: memref<128x16xbf16, #tpu.memory_space<vmem>>, %arg7: memref<128x32xbf16, #tpu.memory_space<vmem>>) attributes {dimension_semantics = [#tpu.dimension_semantics<arbitrary>], iteration_bounds = array<i64: 1>, scalar_prefetch = 0 : i64, scratch_operands = 0 : i64, tpu.core_type = #tpu.core_type<tc>, window_params = [{pipeline_mode = #tpu.pipeline_mode<synchronous>, transform_indices = @transform_0, window_bounds = array<i64: 128, 36>}, {pipeline_mode = #tpu.pipeline_mode<synchronous>, transform_indices = @transform_1, window_bounds = array<i64: 36, 16>}, {pipeline_mode = #tpu.pipeline_mode<synchronous>, transform_indices = @transform_2, window_bounds = array<i64: 1, 16>}, {pipeline_mode = #tpu.pipeline_mode<synchronous>, transform_indices = @transform_3, window_bounds = array<i64: 16, 32>}, {pipeline_mode = #tpu.pipeline_mode<synchronous>, transform_indices = @transform_4, window_bounds = array<i64: 1, 32>}, {pipeline_mode = #tpu.pipeline_mode<synchronous>, transform_indices = @transform_5, window_bounds = array<i64: 128, 16>}, {pipeline_mode = #tpu.pipeline_mode<synchronous>, transform_indices = @transform_6, window_bounds = array<i64: 128, 32>}]} {
    %c0 = arith.constant 0 : index
    %c0_0 = arith.constant 0 : index
    %0 = vector.load %arg1[%c0, %c0_0] : memref<128x36xbf16, #tpu.memory_space<vmem>>, vector<128x36xbf16>
    %c0_1 = arith.constant 0 : index
    %c0_2 = arith.constant 0 : index
    %1 = vector.load %arg2[%c0_1, %c0_2] : memref<36x16xbf16, #tpu.memory_space<vmem>>, vector<36x16xbf16>
    %cst = arith.constant dense<0.000000e+00> : vector<128x16xf32>
    %2 = tpu.matmul %0, %1, %cst {dimension_numbers = #tpu.dot_dimension_numbers<[1], [0], [0], [1], [0, 0, 1, 1], [], []>} : vector<128x36xbf16>, vector<36x16xbf16>, vector<128x16xf32> -> vector<128x16xf32>
    %c0_3 = arith.constant 0 : index
    %c0_4 = arith.constant 0 : index
    %3 = vector.load %arg3[%c0_3, %c0_4] : memref<1x16xf32, #tpu.memory_space<vmem>>, vector<1x16xf32>
    %4 = vector.broadcast %3 : vector<1x16xf32> to vector<128x16xf32>
    %5 = arith.addf %2, %4 : vector<128x16xf32>
    %cst_5 = arith.constant 0.000000e+00 : f32
    %6 = vector.broadcast %cst_5 : f32 to vector<128x16xf32>
    %7 = arith.maximumf %5, %6 : vector<128x16xf32>
    %8 = arith.truncf %7 : vector<128x16xf32> to vector<128x16xbf16>
    %c0_6 = arith.constant 0 : index
    %c0_7 = arith.constant 0 : index
    %9 = vector.load %arg4[%c0_6, %c0_7] : memref<16x32xbf16, #tpu.memory_space<vmem>>, vector<16x32xbf16>
    %cst_8 = arith.constant dense<0.000000e+00> : vector<128x32xf32>
    %10 = tpu.matmul %8, %9, %cst_8 {dimension_numbers = #tpu.dot_dimension_numbers<[1], [0], [0], [1], [0, 0, 1, 1], [], []>} : vector<128x16xbf16>, vector<16x32xbf16>, vector<128x32xf32> -> vector<128x32xf32>
    %c0_9 = arith.constant 0 : index
    %c0_10 = arith.constant 0 : index
    %11 = vector.load %arg5[%c0_9, %c0_10] : memref<1x32xf32, #tpu.memory_space<vmem>>, vector<1x32xf32>
    %12 = vector.broadcast %11 : vector<1x32xf32> to vector<128x32xf32>
    %13 = arith.addf %10, %12 : vector<128x32xf32>
    %14 = arith.truncf %7 : vector<128x16xf32> to vector<128x16xbf16>
    %c0_11 = arith.constant 0 : index
    %c0_12 = arith.constant 0 : index
    %15 = vector.load %arg6[%c0_11, %c0_12] : memref<128x16xbf16, #tpu.memory_space<vmem>>, vector<128x16xbf16>
    tpu.vector_store %arg6[%c0_11, %c0_12], %14 {strides = array<i32>} : memref<128x16xbf16, #tpu.memory_space<vmem>>, vector<128x16xbf16>,
    %16 = arith.truncf %13 : vector<128x32xf32> to vector<128x32xbf16>
    %c0_13 = arith.constant 0 : index
    %c0_14 = arith.constant 0 : index
    %17 = vector.load %arg7[%c0_13, %c0_14] : memref<128x32xbf16, #tpu.memory_space<vmem>>, vector<128x32xbf16>
    tpu.vector_store %arg7[%c0_13, %c0_14], %16 {strides = array<i32>} : memref<128x32xbf16, #tpu.memory_space<vmem>>, vector<128x32xbf16>,
    return
  }
  func.func @transform_0(%arg0: i32) -> (i32, i32) {
    %c0_i32 = arith.constant 0 : i32
    %c0_i32_0 = arith.constant 0 : i32
    %c0_i32_1 = arith.constant 0 : i32
    return %c0_i32, %c0_i32_0 : i32, i32
  }
  func.func @transform_1(%arg0: i32) -> (i32, i32) {
    %c0_i32 = arith.constant 0 : i32
    %c0_i32_0 = arith.constant 0 : i32
    %c0_i32_1 = arith.constant 0 : i32
    return %c0_i32, %c0_i32_0 : i32, i32
  }
  func.func @transform_2(%arg0: i32) -> (i32, i32) {
    %c0_i32 = arith.constant 0 : i32
    %c0_i32_0 = arith.constant 0 : i32
    %c0_i32_1 = arith.constant 0 : i32
    return %c0_i32, %c0_i32_0 : i32, i32
  }
  func.func @transform_3(%arg0: i32) -> (i32, i32) {
    %c0_i32 = arith.constant 0 : i32
    %c0_i32_0 = arith.constant 0 : i32
    %c0_i32_1 = arith.constant 0 : i32
    return %c0_i32, %c0_i32_0 : i32, i32
  }
  func.func @transform_4(%arg0: i32) -> (i32, i32) {
    %c0_i32 = arith.constant 0 : i32
    %c0_i32_0 = arith.constant 0 : i32
    %c0_i32_1 = arith.constant 0 : i32
    return %c0_i32, %c0_i32_0 : i32, i32
  }
  func.func @transform_5(%arg0: i32) -> (i32, i32) {
    %c0_i32 = arith.constant 0 : i32
    %c0_i32_0 = arith.constant 0 : i32
    %c0_i32_1 = arith.constant 0 : i32
    return %c0_i32, %c0_i32_0 : i32, i32
  }
  func.func @transform_6(%arg0: i32) -> (i32, i32) {
    %c0_i32 = arith.constant 0 : i32
    %c0_i32_0 = arith.constant 0 : i32
    %c0_i32_1 = arith.constant 0 : i32
    return %c0_i32, %c0_i32_0 : i32, i32
  }
}

module attributes {stable_mosaic.version = 11 : i64} {
  func.func @_decoder_heads_kernel(%arg0: i32, %arg1: memref<32x144xbf16, #tpu.memory_space<vmem>>, %arg2: memref<128x288xbf16, #tpu.memory_space<vmem>>, %arg3: memref<128x32xbf16, #tpu.memory_space<vmem>>, %arg4: memref<16x32xf32, #tpu.memory_space<vmem>>, %arg5: memref<144x32xbf16, #tpu.memory_space<vmem>>, %arg6: memref<1x32xf32, #tpu.memory_space<vmem>>, %arg7: memref<32x32xbf16, #tpu.memory_space<vmem>>, %arg8: memref<1x32xf32, #tpu.memory_space<vmem>>, %arg9: memref<288x32xbf16, #tpu.memory_space<vmem>>, %arg10: memref<1x32xf32, #tpu.memory_space<vmem>>, %arg11: memref<2x1x32xf32, #tpu.memory_space<vmem>>, %arg12: memref<2x8x32x32xbf16, #tpu.memory_space<vmem>>, %arg13: memref<2x8x1x32xf32, #tpu.memory_space<vmem>>, %arg14: memref<2x32x64xbf16, #tpu.memory_space<vmem>>, %arg15: memref<2x1x64xf32, #tpu.memory_space<vmem>>, %arg16: memref<2x64x32xbf16, #tpu.memory_space<vmem>>, %arg17: memref<2x1x32xf32, #tpu.memory_space<vmem>>, %arg18: memref<2x3x1x32xf32, #tpu.memory_space<vmem>>, %arg19: memref<2x3x1x32xf32, #tpu.memory_space<vmem>>, %arg20: memref<32x4xbf16, #tpu.memory_space<vmem>>, %arg21: memref<1x4xf32, #tpu.memory_space<vmem>>, %arg22: memref<32x32xbf16, #tpu.memory_space<vmem>>, %arg23: memref<1x32xf32, #tpu.memory_space<vmem>>, %arg24: memref<32x32xbf16, #tpu.memory_space<vmem>>, %arg25: memref<1x32xf32, #tpu.memory_space<vmem>>, %arg26: memref<16x128xf32, #tpu.memory_space<vmem>>) attributes {dimension_semantics = [#tpu.dimension_semantics<arbitrary>], iteration_bounds = array<i64: 1>, scalar_prefetch = 0 : i64, scratch_operands = 0 : i64, tpu.core_type = #tpu.core_type<tc>, window_params = [{pipeline_mode = #tpu.pipeline_mode<synchronous>, transform_indices = @transform_0, window_bounds = array<i64: 32, 144>}, {pipeline_mode = #tpu.pipeline_mode<synchronous>, transform_indices = @transform_1, window_bounds = array<i64: 128, 288>}, {pipeline_mode = #tpu.pipeline_mode<synchronous>, transform_indices = @transform_2, window_bounds = array<i64: 128, 32>}, {pipeline_mode = #tpu.pipeline_mode<synchronous>, transform_indices = @transform_3, window_bounds = array<i64: 16, 32>}, {pipeline_mode = #tpu.pipeline_mode<synchronous>, transform_indices = @transform_4, window_bounds = array<i64: 144, 32>}, {pipeline_mode = #tpu.pipeline_mode<synchronous>, transform_indices = @transform_5, window_bounds = array<i64: 1, 32>}, {pipeline_mode = #tpu.pipeline_mode<synchronous>, transform_indices = @transform_6, window_bounds = array<i64: 32, 32>}, {pipeline_mode = #tpu.pipeline_mode<synchronous>, transform_indices = @transform_7, window_bounds = array<i64: 1, 32>}, {pipeline_mode = #tpu.pipeline_mode<synchronous>, transform_indices = @transform_8, window_bounds = array<i64: 288, 32>}, {pipeline_mode = #tpu.pipeline_mode<synchronous>, transform_indices = @transform_9, window_bounds = array<i64: 1, 32>}, {pipeline_mode = #tpu.pipeline_mode<synchronous>, transform_indices = @transform_10, window_bounds = array<i64: 2, 1, 32>}, {pipeline_mode = #tpu.pipeline_mode<synchronous>, transform_indices = @transform_11, window_bounds = array<i64: 2, 8, 32, 32>}, {pipeline_mode = #tpu.pipeline_mode<synchronous>, transform_indices = @transform_12, window_bounds = array<i64: 2, 8, 1, 32>}, {pipeline_mode = #tpu.pipeline_mode<synchronous>, transform_indices = @transform_13, window_bounds = array<i64: 2, 32, 64>}, {pipeline_mode = #tpu.pipeline_mode<synchronous>, transform_indices = @transform_14, window_bounds = array<i64: 2, 1, 64>}, {pipeline_mode = #tpu.pipeline_mode<synchronous>, transform_indices = @transform_15, window_bounds = array<i64: 2, 64, 32>}, {pipeline_mode = #tpu.pipeline_mode<synchronous>, transform_indices = @transform_16, window_bounds = array<i64: 2, 1, 32>}, {pipeline_mode = #tpu.pipeline_mode<synchronous>, transform_indices = @transform_17, window_bounds = array<i64: 2, 3, 1, 32>}, {pipeline_mode = #tpu.pipeline_mode<synchronous>, transform_indices = @transform_18, window_bounds = array<i64: 2, 3, 1, 32>}, {pipeline_mode = #tpu.pipeline_mode<synchronous>, transform_indices = @transform_19, window_bounds = array<i64: 32, 4>}, {pipeline_mode = #tpu.pipeline_mode<synchronous>, transform_indices = @transform_20, window_bounds = array<i64: 1, 4>}, {pipeline_mode = #tpu.pipeline_mode<synchronous>, transform_indices = @transform_21, window_bounds = array<i64: 32, 32>}, {pipeline_mode = #tpu.pipeline_mode<synchronous>, transform_indices = @transform_22, window_bounds = array<i64: 1, 32>}, {pipeline_mode = #tpu.pipeline_mode<synchronous>, transform_indices = @transform_23, window_bounds = array<i64: 32, 32>}, {pipeline_mode = #tpu.pipeline_mode<synchronous>, transform_indices = @transform_24, window_bounds = array<i64: 1, 32>}, {pipeline_mode = #tpu.pipeline_mode<synchronous>, transform_indices = @transform_25, window_bounds = array<i64: 16, 128>}]} {
    %c0 = arith.constant 0 : index
    %c0_0 = arith.constant 0 : index
    %0 = vector.load %arg1[%c0, %c0_0] : memref<32x144xbf16, #tpu.memory_space<vmem>>, vector<32x144xbf16>
    %c0_1 = arith.constant 0 : index
    %c0_2 = arith.constant 0 : index
    %1 = vector.load %arg5[%c0_1, %c0_2] : memref<144x32xbf16, #tpu.memory_space<vmem>>, vector<144x32xbf16>
    %c0_3 = arith.constant 0 : index
    %c0_4 = arith.constant 0 : index
    %2 = vector.load %arg6[%c0_3, %c0_4] : memref<1x32xf32, #tpu.memory_space<vmem>>, vector<1x32xf32>
    %cst = arith.constant dense<0.000000e+00> : vector<32x32xf32>
    %3 = tpu.matmul %0, %1, %cst {dimension_numbers = #tpu.dot_dimension_numbers<[1], [0], [0], [1], [0, 0, 1, 1], [], []>} : vector<32x144xbf16>, vector<144x32xbf16>, vector<32x32xf32> -> vector<32x32xf32>
    %4 = vector.broadcast %2 : vector<1x32xf32> to vector<32x32xf32>
    %5 = arith.addf %3, %4 : vector<32x32xf32>
    %cst_5 = arith.constant 0.000000e+00 : f32
    %6 = vector.broadcast %cst_5 : f32 to vector<32x32xf32>
    %7 = arith.maximumf %5, %6 : vector<32x32xf32>
    %c0_6 = arith.constant 0 : index
    %c0_7 = arith.constant 0 : index
    %8 = vector.load %arg7[%c0_6, %c0_7] : memref<32x32xbf16, #tpu.memory_space<vmem>>, vector<32x32xbf16>
    %c0_8 = arith.constant 0 : index
    %c0_9 = arith.constant 0 : index
    %9 = vector.load %arg8[%c0_8, %c0_9] : memref<1x32xf32, #tpu.memory_space<vmem>>, vector<1x32xf32>
    %10 = arith.truncf %7 : vector<32x32xf32> to vector<32x32xbf16>
    %cst_10 = arith.constant dense<0.000000e+00> : vector<32x32xf32>
    %11 = tpu.matmul %10, %8, %cst_10 {dimension_numbers = #tpu.dot_dimension_numbers<[1], [0], [0], [1], [0, 0, 1, 1], [], []>} : vector<32x32xbf16>, vector<32x32xbf16>, vector<32x32xf32> -> vector<32x32xf32>
    %12 = vector.broadcast %9 : vector<1x32xf32> to vector<32x32xf32>
    %13 = arith.addf %11, %12 : vector<32x32xf32>
    %c0_11 = arith.constant 0 : index
    %c0_12 = arith.constant 0 : index
    %14 = vector.load %arg2[%c0_11, %c0_12] : memref<128x288xbf16, #tpu.memory_space<vmem>>, vector<128x288xbf16>
    %c0_13 = arith.constant 0 : index
    %c0_14 = arith.constant 0 : index
    %15 = vector.load %arg9[%c0_13, %c0_14] : memref<288x32xbf16, #tpu.memory_space<vmem>>, vector<288x32xbf16>
    %c0_15 = arith.constant 0 : index
    %c0_16 = arith.constant 0 : index
    %16 = vector.load %arg10[%c0_15, %c0_16] : memref<1x32xf32, #tpu.memory_space<vmem>>, vector<1x32xf32>
    %cst_17 = arith.constant dense<0.000000e+00> : vector<128x32xf32>
    %17 = tpu.matmul %14, %15, %cst_17 {dimension_numbers = #tpu.dot_dimension_numbers<[1], [0], [0], [1], [0, 0, 1, 1], [], []>} : vector<128x288xbf16>, vector<288x32xbf16>, vector<128x32xf32> -> vector<128x32xf32>
    %18 = vector.broadcast %16 : vector<1x32xf32> to vector<128x32xf32>
    %19 = arith.addf %17, %18 : vector<128x32xf32>
    %cst_18 = arith.constant 0.000000e+00 : f32
    %20 = vector.broadcast %cst_18 : f32 to vector<128x32xf32>
    %21 = arith.maximumf %19, %20 : vector<128x32xf32>
    %c0_19 = arith.constant 0 : index
    %c0_20 = arith.constant 0 : index
    %22 = vector.load %arg3[%c0_19, %c0_20] : memref<128x32xbf16, #tpu.memory_space<vmem>>, vector<128x32xbf16>
    %23 = arith.extf %22 : vector<128x32xbf16> to vector<128x32xf32>
    %c0_21 = arith.constant 0 : index
    %c0_22 = arith.constant 0 : index
    %24 = vector.load %arg4[%c0_21, %c0_22] : memref<16x32xf32, #tpu.memory_space<vmem>>, vector<16x32xf32>
    %c0_23 = arith.constant 0 : index
    %c0_24 = arith.constant 0 : index
    %c0_25 = arith.constant 0 : index
    %25 = vector.load %arg11[%c0_23, %c0_24, %c0_25] : memref<2x1x32xf32, #tpu.memory_space<vmem>>, vector<1x1x32xf32>
    %26 = vector.shape_cast %25 : vector<1x1x32xf32> to vector<1x32xf32>
    %27 = vector.broadcast %26 : vector<1x32xf32> to vector<32x32xf32>
    %28 = arith.addf %13, %27 : vector<32x32xf32>
    %c0_26 = arith.constant 0 : index
    %c0_27 = arith.constant 0 : index
    %c0_28 = arith.constant 0 : index
    %c0_29 = arith.constant 0 : index
    %29 = vector.load %arg12[%c0_26, %c0_27, %c0_28, %c0_29] : memref<2x8x32x32xbf16, #tpu.memory_space<vmem>>, vector<1x1x32x32xbf16>
    %30 = vector.shape_cast %29 : vector<1x1x32x32xbf16> to vector<32x32xbf16>
    %c0_30 = arith.constant 0 : index
    %c0_31 = arith.constant 0 : index
    %c0_32 = arith.constant 0 : index
    %c0_33 = arith.constant 0 : index
    %31 = vector.load %arg13[%c0_30, %c0_31, %c0_32, %c0_33] : memref<2x8x1x32xf32, #tpu.memory_space<vmem>>, vector<1x1x1x32xf32>
    %32 = vector.shape_cast %31 : vector<1x1x1x32xf32> to vector<1x32xf32>
    %33 = arith.truncf %24 : vector<16x32xf32> to vector<16x32xbf16>
    %cst_34 = arith.constant dense<0.000000e+00> : vector<16x32xf32>
    %34 = tpu.matmul %33, %30, %cst_34 {dimension_numbers = #tpu.dot_dimension_numbers<[1], [0], [0], [1], [0, 0, 1, 1], [], []>} : vector<16x32xbf16>, vector<32x32xbf16>, vector<16x32xf32> -> vector<16x32xf32>
    %35 = vector.broadcast %32 : vector<1x32xf32> to vector<16x32xf32>
    %36 = arith.addf %34, %35 : vector<16x32xf32>
    %c0_35 = arith.constant 0 : index
    %c1 = arith.constant 1 : index
    %c0_36 = arith.constant 0 : index
    %c0_37 = arith.constant 0 : index
    %37 = vector.load %arg12[%c0_35, %c1, %c0_36, %c0_37] : memref<2x8x32x32xbf16, #tpu.memory_space<vmem>>, vector<1x1x32x32xbf16>
    %38 = vector.shape_cast %37 : vector<1x1x32x32xbf16> to vector<32x32xbf16>
    %c0_38 = arith.constant 0 : index
    %c1_39 = arith.constant 1 : index
    %c0_40 = arith.constant 0 : index
    %c0_41 = arith.constant 0 : index
    %39 = vector.load %arg13[%c0_38, %c1_39, %c0_40, %c0_41] : memref<2x8x1x32xf32, #tpu.memory_space<vmem>>, vector<1x1x1x32xf32>
    %40 = vector.shape_cast %39 : vector<1x1x1x32xf32> to vector<1x32xf32>
    %41 = arith.truncf %28 : vector<32x32xf32> to vector<32x32xbf16>
    %cst_42 = arith.constant dense<0.000000e+00> : vector<32x32xf32>
    %42 = tpu.matmul %41, %38, %cst_42 {dimension_numbers = #tpu.dot_dimension_numbers<[1], [0], [0], [1], [0, 0, 1, 1], [], []>} : vector<32x32xbf16>, vector<32x32xbf16>, vector<32x32xf32> -> vector<32x32xf32>
    %43 = vector.broadcast %40 : vector<1x32xf32> to vector<32x32xf32>
    %44 = arith.addf %42, %43 : vector<32x32xf32>
    %c0_43 = arith.constant 0 : index
    %c2 = arith.constant 2 : index
    %c0_44 = arith.constant 0 : index
    %c0_45 = arith.constant 0 : index
    %45 = vector.load %arg12[%c0_43, %c2, %c0_44, %c0_45] : memref<2x8x32x32xbf16, #tpu.memory_space<vmem>>, vector<1x1x32x32xbf16>
    %46 = vector.shape_cast %45 : vector<1x1x32x32xbf16> to vector<32x32xbf16>
    %c0_46 = arith.constant 0 : index
    %c2_47 = arith.constant 2 : index
    %c0_48 = arith.constant 0 : index
    %c0_49 = arith.constant 0 : index
    %47 = vector.load %arg13[%c0_46, %c2_47, %c0_48, %c0_49] : memref<2x8x1x32xf32, #tpu.memory_space<vmem>>, vector<1x1x1x32xf32>
    %48 = vector.shape_cast %47 : vector<1x1x1x32xf32> to vector<1x32xf32>
    %49 = arith.truncf %28 : vector<32x32xf32> to vector<32x32xbf16>
    %cst_50 = arith.constant dense<0.000000e+00> : vector<32x32xf32>
    %50 = tpu.matmul %49, %46, %cst_50 {dimension_numbers = #tpu.dot_dimension_numbers<[1], [0], [0], [1], [0, 0, 1, 1], [], []>} : vector<32x32xbf16>, vector<32x32xbf16>, vector<32x32xf32> -> vector<32x32xf32>
    %51 = vector.broadcast %48 : vector<1x32xf32> to vector<32x32xf32>
    %52 = arith.addf %50, %51 : vector<32x32xf32>
    %53 = vector.shape_cast %36 : vector<16x32xf32> to vector<2x8x32xf32>
    %54 = arith.truncf %53 : vector<2x8x32xf32> to vector<2x8x32xbf16>
    %55 = vector.shape_cast %44 : vector<32x32xf32> to vector<2x16x32xf32>
    %56 = arith.truncf %55 : vector<2x16x32xf32> to vector<2x16x32xbf16>
    %57 = vector.shape_cast %52 : vector<32x32xf32> to vector<2x16x32xf32>
    %58 = arith.truncf %57 : vector<2x16x32xf32> to vector<2x16x32xbf16>
    "tpu.trace_start"() <{level = 10 : i32, message = "bqd,bkd->bqk"}> : () -> ()
    %cst_51 = arith.constant dense<0.000000e+00> : vector<2x8x16xf32>
    %59 = tpu.matmul %54, %56, %cst_51 {dimension_numbers = #tpu.dot_dimension_numbers<[2], [2], [1], [1], [0, 0, 0, 1, 1, 1], [0], [0]>} : vector<2x8x32xbf16>, vector<2x16x32xbf16>, vector<2x8x16xf32> -> vector<2x8x16xf32>
    "tpu.trace_stop"() : () -> ()
    %cst_52 = arith.constant 0.176776692 : f32
    %60 = vector.broadcast %cst_52 : f32 to vector<2x8x16xf32>
    %61 = arith.mulf %59, %60 : vector<2x8x16xf32>
    %cst_53 = arith.constant dense<0xFF800000> : vector<2x8xf32>
    %62 = vector.multi_reduction <maximumf>, %61, %cst_53 [2] : vector<2x8x16xf32> to vector<2x8xf32>
    %63 = vector.shape_cast %62 : vector<2x8xf32> to vector<2x8x1xf32>
    %64 = vector.broadcast %63 : vector<2x8x1xf32> to vector<2x8x16xf32>
    %65 = arith.subf %61, %64 : vector<2x8x16xf32>
    %66 = math.exp %65 : vector<2x8x16xf32>
    %cst_54 = arith.constant dense<0.000000e+00> : vector<2x8xf32>
    %67 = vector.multi_reduction <add>, %66, %cst_54 [2] : vector<2x8x16xf32> to vector<2x8xf32>
    %68 = vector.shape_cast %67 : vector<2x8xf32> to vector<2x8x1xf32>
    %69 = tpu.reciprocal %68 {approx = true} : vector<2x8x1xf32> -> vector<2x8x1xf32>
    %70 = vector.broadcast %69 : vector<2x8x1xf32> to vector<2x8x16xf32>
    %71 = arith.mulf %66, %70 : vector<2x8x16xf32>
    %72 = arith.truncf %71 : vector<2x8x16xf32> to vector<2x8x16xbf16>
    "tpu.trace_start"() <{level = 10 : i32, message = "bqk,bkd->bqd"}> : () -> ()
    %cst_55 = arith.constant dense<0.000000e+00> : vector<2x8x32xf32>
    %73 = tpu.matmul %72, %58, %cst_55 {dimension_numbers = #tpu.dot_dimension_numbers<[2], [1], [1], [2], [0, 0, 0, 1, 1, 2], [0], [0]>} : vector<2x8x16xbf16>, vector<2x16x32xbf16>, vector<2x8x32xf32> -> vector<2x8x32xf32>
    "tpu.trace_stop"() : () -> ()
    %74 = vector.shape_cast %73 : vector<2x8x32xf32> to vector<16x32xf32>
    %c0_56 = arith.constant 0 : index
    %c3 = arith.constant 3 : index
    %c0_57 = arith.constant 0 : index
    %c0_58 = arith.constant 0 : index
    %75 = vector.load %arg12[%c0_56, %c3, %c0_57, %c0_58] : memref<2x8x32x32xbf16, #tpu.memory_space<vmem>>, vector<1x1x32x32xbf16>
    %76 = vector.shape_cast %75 : vector<1x1x32x32xbf16> to vector<32x32xbf16>
    %c0_59 = arith.constant 0 : index
    %c3_60 = arith.constant 3 : index
    %c0_61 = arith.constant 0 : index
    %c0_62 = arith.constant 0 : index
    %77 = vector.load %arg13[%c0_59, %c3_60, %c0_61, %c0_62] : memref<2x8x1x32xf32, #tpu.memory_space<vmem>>, vector<1x1x1x32xf32>
    %78 = vector.shape_cast %77 : vector<1x1x1x32xf32> to vector<1x32xf32>
    %79 = arith.truncf %74 : vector<16x32xf32> to vector<16x32xbf16>
    %cst_63 = arith.constant dense<0.000000e+00> : vector<16x32xf32>
    %80 = tpu.matmul %79, %76, %cst_63 {dimension_numbers = #tpu.dot_dimension_numbers<[1], [0], [0], [1], [0, 0, 1, 1], [], []>} : vector<16x32xbf16>, vector<32x32xbf16>, vector<16x32xf32> -> vector<16x32xf32>
    %81 = vector.broadcast %78 : vector<1x32xf32> to vector<16x32xf32>
    %82 = arith.addf %80, %81 : vector<16x32xf32>
    %83 = arith.addf %24, %82 : vector<16x32xf32>
    %cst_64 = arith.constant dense<0.000000e+00> : vector<16xf32>
    %84 = vector.multi_reduction <add>, %83, %cst_64 [1] : vector<16x32xf32> to vector<16xf32>
    %85 = vector.shape_cast %84 : vector<16xf32> to vector<16x1xf32>
    %cst_65 = arith.constant 3.200000e+01 : f32
    %86 = vector.broadcast %cst_65 : f32 to vector<16x1xf32>
    %87 = arith.divf %85, %86 : vector<16x1xf32>
    %88 = vector.broadcast %87 : vector<16x1xf32> to vector<16x32xf32>
    %89 = arith.subf %83, %88 : vector<16x32xf32>
    %90 = arith.mulf %89, %89 : vector<16x32xf32>
    %cst_66 = arith.constant dense<0.000000e+00> : vector<16xf32>
    %91 = vector.multi_reduction <add>, %90, %cst_66 [1] : vector<16x32xf32> to vector<16xf32>
    %92 = vector.shape_cast %91 : vector<16xf32> to vector<16x1xf32>
    %cst_67 = arith.constant 3.200000e+01 : f32
    %93 = vector.broadcast %cst_67 : f32 to vector<16x1xf32>
    %94 = arith.divf %92, %93 : vector<16x1xf32>
    %95 = vector.broadcast %87 : vector<16x1xf32> to vector<16x32xf32>
    %96 = arith.subf %83, %95 : vector<16x32xf32>
    %cst_68 = arith.constant 9.99999974E-6 : f32
    %97 = vector.broadcast %cst_68 : f32 to vector<16x1xf32>
    %98 = arith.addf %94, %97 : vector<16x1xf32>
    %99 = math.rsqrt %98 : vector<16x1xf32>
    %100 = vector.broadcast %99 : vector<16x1xf32> to vector<16x32xf32>
    %101 = arith.mulf %96, %100 : vector<16x32xf32>
    %c0_69 = arith.constant 0 : index
    %c0_70 = arith.constant 0 : index
    %c0_71 = arith.constant 0 : index
    %c0_72 = arith.constant 0 : index
    %102 = vector.load %arg18[%c0_69, %c0_70, %c0_71, %c0_72] : memref<2x3x1x32xf32, #tpu.memory_space<vmem>>, vector<1x1x1x32xf32>
    %103 = vector.shape_cast %102 : vector<1x1x1x32xf32> to vector<1x32xf32>
    %104 = vector.broadcast %103 : vector<1x32xf32> to vector<16x32xf32>
    %105 = arith.mulf %101, %104 : vector<16x32xf32>
    %c0_73 = arith.constant 0 : index
    %c0_74 = arith.constant 0 : index
    %c0_75 = arith.constant 0 : index
    %c0_76 = arith.constant 0 : index
    %106 = vector.load %arg19[%c0_73, %c0_74, %c0_75, %c0_76] : memref<2x3x1x32xf32, #tpu.memory_space<vmem>>, vector<1x1x1x32xf32>
    %107 = vector.shape_cast %106 : vector<1x1x1x32xf32> to vector<1x32xf32>
    %108 = vector.broadcast %107 : vector<1x32xf32> to vector<16x32xf32>
    %109 = arith.addf %105, %108 : vector<16x32xf32>
    %c0_77 = arith.constant 0 : index
    %c4 = arith.constant 4 : index
    %c0_78 = arith.constant 0 : index
    %c0_79 = arith.constant 0 : index
    %110 = vector.load %arg12[%c0_77, %c4, %c0_78, %c0_79] : memref<2x8x32x32xbf16, #tpu.memory_space<vmem>>, vector<1x1x32x32xbf16>
    %111 = vector.shape_cast %110 : vector<1x1x32x32xbf16> to vector<32x32xbf16>
    %c0_80 = arith.constant 0 : index
    %c4_81 = arith.constant 4 : index
    %c0_82 = arith.constant 0 : index
    %c0_83 = arith.constant 0 : index
    %112 = vector.load %arg13[%c0_80, %c4_81, %c0_82, %c0_83] : memref<2x8x1x32xf32, #tpu.memory_space<vmem>>, vector<1x1x1x32xf32>
    %113 = vector.shape_cast %112 : vector<1x1x1x32xf32> to vector<1x32xf32>
    %114 = arith.truncf %109 : vector<16x32xf32> to vector<16x32xbf16>
    %cst_84 = arith.constant dense<0.000000e+00> : vector<16x32xf32>
    %115 = tpu.matmul %114, %111, %cst_84 {dimension_numbers = #tpu.dot_dimension_numbers<[1], [0], [0], [1], [0, 0, 1, 1], [], []>} : vector<16x32xbf16>, vector<32x32xbf16>, vector<16x32xf32> -> vector<16x32xf32>
    %116 = vector.broadcast %113 : vector<1x32xf32> to vector<16x32xf32>
    %117 = arith.addf %115, %116 : vector<16x32xf32>
    %c0_85 = arith.constant 0 : index
    %c5 = arith.constant 5 : index
    %c0_86 = arith.constant 0 : index
    %c0_87 = arith.constant 0 : index
    %118 = vector.load %arg12[%c0_85, %c5, %c0_86, %c0_87] : memref<2x8x32x32xbf16, #tpu.memory_space<vmem>>, vector<1x1x32x32xbf16>
    %119 = vector.shape_cast %118 : vector<1x1x32x32xbf16> to vector<32x32xbf16>
    %c0_88 = arith.constant 0 : index
    %c5_89 = arith.constant 5 : index
    %c0_90 = arith.constant 0 : index
    %c0_91 = arith.constant 0 : index
    %120 = vector.load %arg13[%c0_88, %c5_89, %c0_90, %c0_91] : memref<2x8x1x32xf32, #tpu.memory_space<vmem>>, vector<1x1x1x32xf32>
    %121 = vector.shape_cast %120 : vector<1x1x1x32xf32> to vector<1x32xf32>
    %122 = arith.truncf %109 : vector<16x32xf32> to vector<16x32xbf16>
    %cst_92 = arith.constant dense<0.000000e+00> : vector<16x32xf32>
    %123 = tpu.matmul %122, %119, %cst_92 {dimension_numbers = #tpu.dot_dimension_numbers<[1], [0], [0], [1], [0, 0, 1, 1], [], []>} : vector<16x32xbf16>, vector<32x32xbf16>, vector<16x32xf32> -> vector<16x32xf32>
    %124 = vector.broadcast %121 : vector<1x32xf32> to vector<16x32xf32>
    %125 = arith.addf %123, %124 : vector<16x32xf32>
    %c0_93 = arith.constant 0 : index
    %c6 = arith.constant 6 : index
    %c0_94 = arith.constant 0 : index
    %c0_95 = arith.constant 0 : index
    %126 = vector.load %arg12[%c0_93, %c6, %c0_94, %c0_95] : memref<2x8x32x32xbf16, #tpu.memory_space<vmem>>, vector<1x1x32x32xbf16>
    %127 = vector.shape_cast %126 : vector<1x1x32x32xbf16> to vector<32x32xbf16>
    %c0_96 = arith.constant 0 : index
    %c6_97 = arith.constant 6 : index
    %c0_98 = arith.constant 0 : index
    %c0_99 = arith.constant 0 : index
    %128 = vector.load %arg13[%c0_96, %c6_97, %c0_98, %c0_99] : memref<2x8x1x32xf32, #tpu.memory_space<vmem>>, vector<1x1x1x32xf32>
    %129 = vector.shape_cast %128 : vector<1x1x1x32xf32> to vector<1x32xf32>
    %130 = arith.truncf %109 : vector<16x32xf32> to vector<16x32xbf16>
    %cst_100 = arith.constant dense<0.000000e+00> : vector<16x32xf32>
    %131 = tpu.matmul %130, %127, %cst_100 {dimension_numbers = #tpu.dot_dimension_numbers<[1], [0], [0], [1], [0, 0, 1, 1], [], []>} : vector<16x32xbf16>, vector<32x32xbf16>, vector<16x32xf32> -> vector<16x32xf32>
    %132 = vector.broadcast %129 : vector<1x32xf32> to vector<16x32xf32>
    %133 = arith.addf %131, %132 : vector<16x32xf32>
    %134 = vector.shape_cast %117 : vector<16x32xf32> to vector<2x8x32xf32>
    %135 = arith.truncf %134 : vector<2x8x32xf32> to vector<2x8x32xbf16>
    %136 = vector.shape_cast %125 : vector<16x32xf32> to vector<2x8x32xf32>
    %137 = arith.truncf %136 : vector<2x8x32xf32> to vector<2x8x32xbf16>
    %138 = vector.shape_cast %133 : vector<16x32xf32> to vector<2x8x32xf32>
    %139 = arith.truncf %138 : vector<2x8x32xf32> to vector<2x8x32xbf16>
    "tpu.trace_start"() <{level = 10 : i32, message = "bqd,bkd->bqk"}> : () -> ()
    %cst_101 = arith.constant dense<0.000000e+00> : vector<2x8x8xf32>
    %140 = tpu.matmul %135, %137, %cst_101 {dimension_numbers = #tpu.dot_dimension_numbers<[2], [2], [1], [1], [0, 0, 0, 1, 1, 1], [0], [0]>} : vector<2x8x32xbf16>, vector<2x8x32xbf16>, vector<2x8x8xf32> -> vector<2x8x8xf32>
    "tpu.trace_stop"() : () -> ()
    %cst_102 = arith.constant 0.176776692 : f32
    %141 = vector.broadcast %cst_102 : f32 to vector<2x8x8xf32>
    %142 = arith.mulf %140, %141 : vector<2x8x8xf32>
    %cst_103 = arith.constant dense<0xFF800000> : vector<2x8xf32>
    %143 = vector.multi_reduction <maximumf>, %142, %cst_103 [2] : vector<2x8x8xf32> to vector<2x8xf32>
    %144 = vector.shape_cast %143 : vector<2x8xf32> to vector<2x8x1xf32>
    %145 = vector.broadcast %144 : vector<2x8x1xf32> to vector<2x8x8xf32>
    %146 = arith.subf %142, %145 : vector<2x8x8xf32>
    %147 = math.exp %146 : vector<2x8x8xf32>
    %cst_104 = arith.constant dense<0.000000e+00> : vector<2x8xf32>
    %148 = vector.multi_reduction <add>, %147, %cst_104 [2] : vector<2x8x8xf32> to vector<2x8xf32>
    %149 = vector.shape_cast %148 : vector<2x8xf32> to vector<2x8x1xf32>
    %150 = tpu.reciprocal %149 {approx = true} : vector<2x8x1xf32> -> vector<2x8x1xf32>
    %151 = vector.broadcast %150 : vector<2x8x1xf32> to vector<2x8x8xf32>
    %152 = arith.mulf %147, %151 : vector<2x8x8xf32>
    %153 = arith.truncf %152 : vector<2x8x8xf32> to vector<2x8x8xbf16>
    "tpu.trace_start"() <{level = 10 : i32, message = "bqk,bkd->bqd"}> : () -> ()
    %cst_105 = arith.constant dense<0.000000e+00> : vector<2x8x32xf32>
    %154 = tpu.matmul %153, %139, %cst_105 {dimension_numbers = #tpu.dot_dimension_numbers<[2], [1], [1], [2], [0, 0, 0, 1, 1, 2], [0], [0]>} : vector<2x8x8xbf16>, vector<2x8x32xbf16>, vector<2x8x32xf32> -> vector<2x8x32xf32>
    "tpu.trace_stop"() : () -> ()
    %155 = vector.shape_cast %154 : vector<2x8x32xf32> to vector<16x32xf32>
    %c0_106 = arith.constant 0 : index
    %c7 = arith.constant 7 : index
    %c0_107 = arith.constant 0 : index
    %c0_108 = arith.constant 0 : index
    %156 = vector.load %arg12[%c0_106, %c7, %c0_107, %c0_108] : memref<2x8x32x32xbf16, #tpu.memory_space<vmem>>, vector<1x1x32x32xbf16>
    %157 = vector.shape_cast %156 : vector<1x1x32x32xbf16> to vector<32x32xbf16>
    %c0_109 = arith.constant 0 : index
    %c7_110 = arith.constant 7 : index
    %c0_111 = arith.constant 0 : index
    %c0_112 = arith.constant 0 : index
    %158 = vector.load %arg13[%c0_109, %c7_110, %c0_111, %c0_112] : memref<2x8x1x32xf32, #tpu.memory_space<vmem>>, vector<1x1x1x32xf32>
    %159 = vector.shape_cast %158 : vector<1x1x1x32xf32> to vector<1x32xf32>
    %160 = arith.truncf %155 : vector<16x32xf32> to vector<16x32xbf16>
    %cst_113 = arith.constant dense<0.000000e+00> : vector<16x32xf32>
    %161 = tpu.matmul %160, %157, %cst_113 {dimension_numbers = #tpu.dot_dimension_numbers<[1], [0], [0], [1], [0, 0, 1, 1], [], []>} : vector<16x32xbf16>, vector<32x32xbf16>, vector<16x32xf32> -> vector<16x32xf32>
    %162 = vector.broadcast %159 : vector<1x32xf32> to vector<16x32xf32>
    %163 = arith.addf %161, %162 : vector<16x32xf32>
    %164 = arith.addf %109, %163 : vector<16x32xf32>
    %cst_114 = arith.constant dense<0.000000e+00> : vector<16xf32>
    %165 = vector.multi_reduction <add>, %164, %cst_114 [1] : vector<16x32xf32> to vector<16xf32>
    %166 = vector.shape_cast %165 : vector<16xf32> to vector<16x1xf32>
    %cst_115 = arith.constant 3.200000e+01 : f32
    %167 = vector.broadcast %cst_115 : f32 to vector<16x1xf32>
    %168 = arith.divf %166, %167 : vector<16x1xf32>
    %169 = vector.broadcast %168 : vector<16x1xf32> to vector<16x32xf32>
    %170 = arith.subf %164, %169 : vector<16x32xf32>
    %171 = arith.mulf %170, %170 : vector<16x32xf32>
    %cst_116 = arith.constant dense<0.000000e+00> : vector<16xf32>
    %172 = vector.multi_reduction <add>, %171, %cst_116 [1] : vector<16x32xf32> to vector<16xf32>
    %173 = vector.shape_cast %172 : vector<16xf32> to vector<16x1xf32>
    %cst_117 = arith.constant 3.200000e+01 : f32
    %174 = vector.broadcast %cst_117 : f32 to vector<16x1xf32>
    %175 = arith.divf %173, %174 : vector<16x1xf32>
    %176 = vector.broadcast %168 : vector<16x1xf32> to vector<16x32xf32>
    %177 = arith.subf %164, %176 : vector<16x32xf32>
    %cst_118 = arith.constant 9.99999974E-6 : f32
    %178 = vector.broadcast %cst_118 : f32 to vector<16x1xf32>
    %179 = arith.addf %175, %178 : vector<16x1xf32>
    %180 = math.rsqrt %179 : vector<16x1xf32>
    %181 = vector.broadcast %180 : vector<16x1xf32> to vector<16x32xf32>
    %182 = arith.mulf %177, %181 : vector<16x32xf32>
    %c0_119 = arith.constant 0 : index
    %c1_120 = arith.constant 1 : index
    %c0_121 = arith.constant 0 : index
    %c0_122 = arith.constant 0 : index
    %183 = vector.load %arg18[%c0_119, %c1_120, %c0_121, %c0_122] : memref<2x3x1x32xf32, #tpu.memory_space<vmem>>, vector<1x1x1x32xf32>
    %184 = vector.shape_cast %183 : vector<1x1x1x32xf32> to vector<1x32xf32>
    %185 = vector.broadcast %184 : vector<1x32xf32> to vector<16x32xf32>
    %186 = arith.mulf %182, %185 : vector<16x32xf32>
    %c0_123 = arith.constant 0 : index
    %c1_124 = arith.constant 1 : index
    %c0_125 = arith.constant 0 : index
    %c0_126 = arith.constant 0 : index
    %187 = vector.load %arg19[%c0_123, %c1_124, %c0_125, %c0_126] : memref<2x3x1x32xf32, #tpu.memory_space<vmem>>, vector<1x1x1x32xf32>
    %188 = vector.shape_cast %187 : vector<1x1x1x32xf32> to vector<1x32xf32>
    %189 = vector.broadcast %188 : vector<1x32xf32> to vector<16x32xf32>
    %190 = arith.addf %186, %189 : vector<16x32xf32>
    %c0_127 = arith.constant 0 : index
    %c0_128 = arith.constant 0 : index
    %c0_129 = arith.constant 0 : index
    %191 = vector.load %arg14[%c0_127, %c0_128, %c0_129] : memref<2x32x64xbf16, #tpu.memory_space<vmem>>, vector<1x32x64xbf16>
    %192 = vector.shape_cast %191 : vector<1x32x64xbf16> to vector<32x64xbf16>
    %c0_130 = arith.constant 0 : index
    %c0_131 = arith.constant 0 : index
    %c0_132 = arith.constant 0 : index
    %193 = vector.load %arg15[%c0_130, %c0_131, %c0_132] : memref<2x1x64xf32, #tpu.memory_space<vmem>>, vector<1x1x64xf32>
    %194 = vector.shape_cast %193 : vector<1x1x64xf32> to vector<1x64xf32>
    %195 = arith.truncf %190 : vector<16x32xf32> to vector<16x32xbf16>
    %cst_133 = arith.constant dense<0.000000e+00> : vector<16x64xf32>
    %196 = tpu.matmul %195, %192, %cst_133 {dimension_numbers = #tpu.dot_dimension_numbers<[1], [0], [0], [1], [0, 0, 1, 1], [], []>} : vector<16x32xbf16>, vector<32x64xbf16>, vector<16x64xf32> -> vector<16x64xf32>
    %197 = vector.broadcast %194 : vector<1x64xf32> to vector<16x64xf32>
    %198 = arith.addf %196, %197 : vector<16x64xf32>
    %cst_134 = arith.constant 0.000000e+00 : f32
    %199 = vector.broadcast %cst_134 : f32 to vector<16x64xf32>
    %200 = arith.maximumf %198, %199 : vector<16x64xf32>
    %c0_135 = arith.constant 0 : index
    %c0_136 = arith.constant 0 : index
    %c0_137 = arith.constant 0 : index
    %201 = vector.load %arg16[%c0_135, %c0_136, %c0_137] : memref<2x64x32xbf16, #tpu.memory_space<vmem>>, vector<1x64x32xbf16>
    %202 = vector.shape_cast %201 : vector<1x64x32xbf16> to vector<64x32xbf16>
    %c0_138 = arith.constant 0 : index
    %c0_139 = arith.constant 0 : index
    %c0_140 = arith.constant 0 : index
    %203 = vector.load %arg17[%c0_138, %c0_139, %c0_140] : memref<2x1x32xf32, #tpu.memory_space<vmem>>, vector<1x1x32xf32>
    %204 = vector.shape_cast %203 : vector<1x1x32xf32> to vector<1x32xf32>
    %205 = arith.truncf %200 : vector<16x64xf32> to vector<16x64xbf16>
    %cst_141 = arith.constant dense<0.000000e+00> : vector<16x32xf32>
    %206 = tpu.matmul %205, %202, %cst_141 {dimension_numbers = #tpu.dot_dimension_numbers<[1], [0], [0], [1], [0, 0, 1, 1], [], []>} : vector<16x64xbf16>, vector<64x32xbf16>, vector<16x32xf32> -> vector<16x32xf32>
    %207 = vector.broadcast %204 : vector<1x32xf32> to vector<16x32xf32>
    %208 = arith.addf %206, %207 : vector<16x32xf32>
    %209 = arith.addf %190, %208 : vector<16x32xf32>
    %cst_142 = arith.constant dense<0.000000e+00> : vector<16xf32>
    %210 = vector.multi_reduction <add>, %209, %cst_142 [1] : vector<16x32xf32> to vector<16xf32>
    %211 = vector.shape_cast %210 : vector<16xf32> to vector<16x1xf32>
    %cst_143 = arith.constant 3.200000e+01 : f32
    %212 = vector.broadcast %cst_143 : f32 to vector<16x1xf32>
    %213 = arith.divf %211, %212 : vector<16x1xf32>
    %214 = vector.broadcast %213 : vector<16x1xf32> to vector<16x32xf32>
    %215 = arith.subf %209, %214 : vector<16x32xf32>
    %216 = arith.mulf %215, %215 : vector<16x32xf32>
    %cst_144 = arith.constant dense<0.000000e+00> : vector<16xf32>
    %217 = vector.multi_reduction <add>, %216, %cst_144 [1] : vector<16x32xf32> to vector<16xf32>
    %218 = vector.shape_cast %217 : vector<16xf32> to vector<16x1xf32>
    %cst_145 = arith.constant 3.200000e+01 : f32
    %219 = vector.broadcast %cst_145 : f32 to vector<16x1xf32>
    %220 = arith.divf %218, %219 : vector<16x1xf32>
    %221 = vector.broadcast %213 : vector<16x1xf32> to vector<16x32xf32>
    %222 = arith.subf %209, %221 : vector<16x32xf32>
    %cst_146 = arith.constant 9.99999974E-6 : f32
    %223 = vector.broadcast %cst_146 : f32 to vector<16x1xf32>
    %224 = arith.addf %220, %223 : vector<16x1xf32>
    %225 = math.rsqrt %224 : vector<16x1xf32>
    %226 = vector.broadcast %225 : vector<16x1xf32> to vector<16x32xf32>
    %227 = arith.mulf %222, %226 : vector<16x32xf32>
    %c0_147 = arith.constant 0 : index
    %c2_148 = arith.constant 2 : index
    %c0_149 = arith.constant 0 : index
    %c0_150 = arith.constant 0 : index
    %228 = vector.load %arg18[%c0_147, %c2_148, %c0_149, %c0_150] : memref<2x3x1x32xf32, #tpu.memory_space<vmem>>, vector<1x1x1x32xf32>
    %229 = vector.shape_cast %228 : vector<1x1x1x32xf32> to vector<1x32xf32>
    %230 = vector.broadcast %229 : vector<1x32xf32> to vector<16x32xf32>
    %231 = arith.mulf %227, %230 : vector<16x32xf32>
    %c0_151 = arith.constant 0 : index
    %c2_152 = arith.constant 2 : index
    %c0_153 = arith.constant 0 : index
    %c0_154 = arith.constant 0 : index
    %232 = vector.load %arg19[%c0_151, %c2_152, %c0_153, %c0_154] : memref<2x3x1x32xf32, #tpu.memory_space<vmem>>, vector<1x1x1x32xf32>
    %233 = vector.shape_cast %232 : vector<1x1x1x32xf32> to vector<1x32xf32>
    %234 = vector.broadcast %233 : vector<1x32xf32> to vector<16x32xf32>
    %235 = arith.addf %231, %234 : vector<16x32xf32>
    %c1_155 = arith.constant 1 : index
    %c0_156 = arith.constant 0 : index
    %c0_157 = arith.constant 0 : index
    %236 = vector.load %arg11[%c1_155, %c0_156, %c0_157] : memref<2x1x32xf32, #tpu.memory_space<vmem>>, vector<1x1x32xf32>
    %237 = vector.shape_cast %236 : vector<1x1x32xf32> to vector<1x32xf32>
    %238 = vector.broadcast %237 : vector<1x32xf32> to vector<128x32xf32>
    %239 = arith.addf %23, %238 : vector<128x32xf32>
    %c1_158 = arith.constant 1 : index
    %c0_159 = arith.constant 0 : index
    %c0_160 = arith.constant 0 : index
    %c0_161 = arith.constant 0 : index
    %240 = vector.load %arg12[%c1_158, %c0_159, %c0_160, %c0_161] : memref<2x8x32x32xbf16, #tpu.memory_space<vmem>>, vector<1x1x32x32xbf16>
    %241 = vector.shape_cast %240 : vector<1x1x32x32xbf16> to vector<32x32xbf16>
    %c1_162 = arith.constant 1 : index
    %c0_163 = arith.constant 0 : index
    %c0_164 = arith.constant 0 : index
    %c0_165 = arith.constant 0 : index
    %242 = vector.load %arg13[%c1_162, %c0_163, %c0_164, %c0_165] : memref<2x8x1x32xf32, #tpu.memory_space<vmem>>, vector<1x1x1x32xf32>
    %243 = vector.shape_cast %242 : vector<1x1x1x32xf32> to vector<1x32xf32>
    %244 = arith.truncf %235 : vector<16x32xf32> to vector<16x32xbf16>
    %cst_166 = arith.constant dense<0.000000e+00> : vector<16x32xf32>
    %245 = tpu.matmul %244, %241, %cst_166 {dimension_numbers = #tpu.dot_dimension_numbers<[1], [0], [0], [1], [0, 0, 1, 1], [], []>} : vector<16x32xbf16>, vector<32x32xbf16>, vector<16x32xf32> -> vector<16x32xf32>
    %246 = vector.broadcast %243 : vector<1x32xf32> to vector<16x32xf32>
    %247 = arith.addf %245, %246 : vector<16x32xf32>
    %c1_167 = arith.constant 1 : index
    %c1_168 = arith.constant 1 : index
    %c0_169 = arith.constant 0 : index
    %c0_170 = arith.constant 0 : index
    %248 = vector.load %arg12[%c1_167, %c1_168, %c0_169, %c0_170] : memref<2x8x32x32xbf16, #tpu.memory_space<vmem>>, vector<1x1x32x32xbf16>
    %249 = vector.shape_cast %248 : vector<1x1x32x32xbf16> to vector<32x32xbf16>
    %c1_171 = arith.constant 1 : index
    %c1_172 = arith.constant 1 : index
    %c0_173 = arith.constant 0 : index
    %c0_174 = arith.constant 0 : index
    %250 = vector.load %arg13[%c1_171, %c1_172, %c0_173, %c0_174] : memref<2x8x1x32xf32, #tpu.memory_space<vmem>>, vector<1x1x1x32xf32>
    %251 = vector.shape_cast %250 : vector<1x1x1x32xf32> to vector<1x32xf32>
    %252 = arith.truncf %239 : vector<128x32xf32> to vector<128x32xbf16>
    %cst_175 = arith.constant dense<0.000000e+00> : vector<128x32xf32>
    %253 = tpu.matmul %252, %249, %cst_175 {dimension_numbers = #tpu.dot_dimension_numbers<[1], [0], [0], [1], [0, 0, 1, 1], [], []>} : vector<128x32xbf16>, vector<32x32xbf16>, vector<128x32xf32> -> vector<128x32xf32>
    %254 = vector.broadcast %251 : vector<1x32xf32> to vector<128x32xf32>
    %255 = arith.addf %253, %254 : vector<128x32xf32>
    %c1_176 = arith.constant 1 : index
    %c2_177 = arith.constant 2 : index
    %c0_178 = arith.constant 0 : index
    %c0_179 = arith.constant 0 : index
    %256 = vector.load %arg12[%c1_176, %c2_177, %c0_178, %c0_179] : memref<2x8x32x32xbf16, #tpu.memory_space<vmem>>, vector<1x1x32x32xbf16>
    %257 = vector.shape_cast %256 : vector<1x1x32x32xbf16> to vector<32x32xbf16>
    %c1_180 = arith.constant 1 : index
    %c2_181 = arith.constant 2 : index
    %c0_182 = arith.constant 0 : index
    %c0_183 = arith.constant 0 : index
    %258 = vector.load %arg13[%c1_180, %c2_181, %c0_182, %c0_183] : memref<2x8x1x32xf32, #tpu.memory_space<vmem>>, vector<1x1x1x32xf32>
    %259 = vector.shape_cast %258 : vector<1x1x1x32xf32> to vector<1x32xf32>
    %260 = arith.truncf %239 : vector<128x32xf32> to vector<128x32xbf16>
    %cst_184 = arith.constant dense<0.000000e+00> : vector<128x32xf32>
    %261 = tpu.matmul %260, %257, %cst_184 {dimension_numbers = #tpu.dot_dimension_numbers<[1], [0], [0], [1], [0, 0, 1, 1], [], []>} : vector<128x32xbf16>, vector<32x32xbf16>, vector<128x32xf32> -> vector<128x32xf32>
    %262 = vector.broadcast %259 : vector<1x32xf32> to vector<128x32xf32>
    %263 = arith.addf %261, %262 : vector<128x32xf32>
    %264 = vector.shape_cast %247 : vector<16x32xf32> to vector<2x8x32xf32>
    %265 = arith.truncf %264 : vector<2x8x32xf32> to vector<2x8x32xbf16>
    %266 = vector.shape_cast %255 : vector<128x32xf32> to vector<2x64x32xf32>
    %267 = arith.truncf %266 : vector<2x64x32xf32> to vector<2x64x32xbf16>
    %268 = vector.shape_cast %263 : vector<128x32xf32> to vector<2x64x32xf32>
    %269 = arith.truncf %268 : vector<2x64x32xf32> to vector<2x64x32xbf16>
    "tpu.trace_start"() <{level = 10 : i32, message = "bqd,bkd->bqk"}> : () -> ()
    %cst_185 = arith.constant dense<0.000000e+00> : vector<2x8x64xf32>
    %270 = tpu.matmul %265, %267, %cst_185 {dimension_numbers = #tpu.dot_dimension_numbers<[2], [2], [1], [1], [0, 0, 0, 1, 1, 1], [0], [0]>} : vector<2x8x32xbf16>, vector<2x64x32xbf16>, vector<2x8x64xf32> -> vector<2x8x64xf32>
    "tpu.trace_stop"() : () -> ()
    %cst_186 = arith.constant 0.176776692 : f32
    %271 = vector.broadcast %cst_186 : f32 to vector<2x8x64xf32>
    %272 = arith.mulf %270, %271 : vector<2x8x64xf32>
    %cst_187 = arith.constant dense<0xFF800000> : vector<2x8xf32>
    %273 = vector.multi_reduction <maximumf>, %272, %cst_187 [2] : vector<2x8x64xf32> to vector<2x8xf32>
    %274 = vector.shape_cast %273 : vector<2x8xf32> to vector<2x8x1xf32>
    %275 = vector.broadcast %274 : vector<2x8x1xf32> to vector<2x8x64xf32>
    %276 = arith.subf %272, %275 : vector<2x8x64xf32>
    %277 = math.exp %276 : vector<2x8x64xf32>
    %cst_188 = arith.constant dense<0.000000e+00> : vector<2x8xf32>
    %278 = vector.multi_reduction <add>, %277, %cst_188 [2] : vector<2x8x64xf32> to vector<2x8xf32>
    %279 = vector.shape_cast %278 : vector<2x8xf32> to vector<2x8x1xf32>
    %280 = tpu.reciprocal %279 {approx = true} : vector<2x8x1xf32> -> vector<2x8x1xf32>
    %281 = vector.broadcast %280 : vector<2x8x1xf32> to vector<2x8x64xf32>
    %282 = arith.mulf %277, %281 : vector<2x8x64xf32>
    %283 = arith.truncf %282 : vector<2x8x64xf32> to vector<2x8x64xbf16>
    "tpu.trace_start"() <{level = 10 : i32, message = "bqk,bkd->bqd"}> : () -> ()
    %cst_189 = arith.constant dense<0.000000e+00> : vector<2x8x32xf32>
    %284 = tpu.matmul %283, %269, %cst_189 {dimension_numbers = #tpu.dot_dimension_numbers<[2], [1], [1], [2], [0, 0, 0, 1, 1, 2], [0], [0]>} : vector<2x8x64xbf16>, vector<2x64x32xbf16>, vector<2x8x32xf32> -> vector<2x8x32xf32>
    "tpu.trace_stop"() : () -> ()
    %285 = vector.shape_cast %284 : vector<2x8x32xf32> to vector<16x32xf32>
    %c1_190 = arith.constant 1 : index
    %c3_191 = arith.constant 3 : index
    %c0_192 = arith.constant 0 : index
    %c0_193 = arith.constant 0 : index
    %286 = vector.load %arg12[%c1_190, %c3_191, %c0_192, %c0_193] : memref<2x8x32x32xbf16, #tpu.memory_space<vmem>>, vector<1x1x32x32xbf16>
    %287 = vector.shape_cast %286 : vector<1x1x32x32xbf16> to vector<32x32xbf16>
    %c1_194 = arith.constant 1 : index
    %c3_195 = arith.constant 3 : index
    %c0_196 = arith.constant 0 : index
    %c0_197 = arith.constant 0 : index
    %288 = vector.load %arg13[%c1_194, %c3_195, %c0_196, %c0_197] : memref<2x8x1x32xf32, #tpu.memory_space<vmem>>, vector<1x1x1x32xf32>
    %289 = vector.shape_cast %288 : vector<1x1x1x32xf32> to vector<1x32xf32>
    %290 = arith.truncf %285 : vector<16x32xf32> to vector<16x32xbf16>
    %cst_198 = arith.constant dense<0.000000e+00> : vector<16x32xf32>
    %291 = tpu.matmul %290, %287, %cst_198 {dimension_numbers = #tpu.dot_dimension_numbers<[1], [0], [0], [1], [0, 0, 1, 1], [], []>} : vector<16x32xbf16>, vector<32x32xbf16>, vector<16x32xf32> -> vector<16x32xf32>
    %292 = vector.broadcast %289 : vector<1x32xf32> to vector<16x32xf32>
    %293 = arith.addf %291, %292 : vector<16x32xf32>
    %294 = arith.addf %235, %293 : vector<16x32xf32>
    %cst_199 = arith.constant dense<0.000000e+00> : vector<16xf32>
    %295 = vector.multi_reduction <add>, %294, %cst_199 [1] : vector<16x32xf32> to vector<16xf32>
    %296 = vector.shape_cast %295 : vector<16xf32> to vector<16x1xf32>
    %cst_200 = arith.constant 3.200000e+01 : f32
    %297 = vector.broadcast %cst_200 : f32 to vector<16x1xf32>
    %298 = arith.divf %296, %297 : vector<16x1xf32>
    %299 = vector.broadcast %298 : vector<16x1xf32> to vector<16x32xf32>
    %300 = arith.subf %294, %299 : vector<16x32xf32>
    %301 = arith.mulf %300, %300 : vector<16x32xf32>
    %cst_201 = arith.constant dense<0.000000e+00> : vector<16xf32>
    %302 = vector.multi_reduction <add>, %301, %cst_201 [1] : vector<16x32xf32> to vector<16xf32>
    %303 = vector.shape_cast %302 : vector<16xf32> to vector<16x1xf32>
    %cst_202 = arith.constant 3.200000e+01 : f32
    %304 = vector.broadcast %cst_202 : f32 to vector<16x1xf32>
    %305 = arith.divf %303, %304 : vector<16x1xf32>
    %306 = vector.broadcast %298 : vector<16x1xf32> to vector<16x32xf32>
    %307 = arith.subf %294, %306 : vector<16x32xf32>
    %cst_203 = arith.constant 9.99999974E-6 : f32
    %308 = vector.broadcast %cst_203 : f32 to vector<16x1xf32>
    %309 = arith.addf %305, %308 : vector<16x1xf32>
    %310 = math.rsqrt %309 : vector<16x1xf32>
    %311 = vector.broadcast %310 : vector<16x1xf32> to vector<16x32xf32>
    %312 = arith.mulf %307, %311 : vector<16x32xf32>
    %c1_204 = arith.constant 1 : index
    %c0_205 = arith.constant 0 : index
    %c0_206 = arith.constant 0 : index
    %c0_207 = arith.constant 0 : index
    %313 = vector.load %arg18[%c1_204, %c0_205, %c0_206, %c0_207] : memref<2x3x1x32xf32, #tpu.memory_space<vmem>>, vector<1x1x1x32xf32>
    %314 = vector.shape_cast %313 : vector<1x1x1x32xf32> to vector<1x32xf32>
    %315 = vector.broadcast %314 : vector<1x32xf32> to vector<16x32xf32>
    %316 = arith.mulf %312, %315 : vector<16x32xf32>
    %c1_208 = arith.constant 1 : index
    %c0_209 = arith.constant 0 : index
    %c0_210 = arith.constant 0 : index
    %c0_211 = arith.constant 0 : index
    %317 = vector.load %arg19[%c1_208, %c0_209, %c0_210, %c0_211] : memref<2x3x1x32xf32, #tpu.memory_space<vmem>>, vector<1x1x1x32xf32>
    %318 = vector.shape_cast %317 : vector<1x1x1x32xf32> to vector<1x32xf32>
    %319 = vector.broadcast %318 : vector<1x32xf32> to vector<16x32xf32>
    %320 = arith.addf %316, %319 : vector<16x32xf32>
    %c1_212 = arith.constant 1 : index
    %c4_213 = arith.constant 4 : index
    %c0_214 = arith.constant 0 : index
    %c0_215 = arith.constant 0 : index
    %321 = vector.load %arg12[%c1_212, %c4_213, %c0_214, %c0_215] : memref<2x8x32x32xbf16, #tpu.memory_space<vmem>>, vector<1x1x32x32xbf16>
    %322 = vector.shape_cast %321 : vector<1x1x32x32xbf16> to vector<32x32xbf16>
    %c1_216 = arith.constant 1 : index
    %c4_217 = arith.constant 4 : index
    %c0_218 = arith.constant 0 : index
    %c0_219 = arith.constant 0 : index
    %323 = vector.load %arg13[%c1_216, %c4_217, %c0_218, %c0_219] : memref<2x8x1x32xf32, #tpu.memory_space<vmem>>, vector<1x1x1x32xf32>
    %324 = vector.shape_cast %323 : vector<1x1x1x32xf32> to vector<1x32xf32>
    %325 = arith.truncf %320 : vector<16x32xf32> to vector<16x32xbf16>
    %cst_220 = arith.constant dense<0.000000e+00> : vector<16x32xf32>
    %326 = tpu.matmul %325, %322, %cst_220 {dimension_numbers = #tpu.dot_dimension_numbers<[1], [0], [0], [1], [0, 0, 1, 1], [], []>} : vector<16x32xbf16>, vector<32x32xbf16>, vector<16x32xf32> -> vector<16x32xf32>
    %327 = vector.broadcast %324 : vector<1x32xf32> to vector<16x32xf32>
    %328 = arith.addf %326, %327 : vector<16x32xf32>
    %c1_221 = arith.constant 1 : index
    %c5_222 = arith.constant 5 : index
    %c0_223 = arith.constant 0 : index
    %c0_224 = arith.constant 0 : index
    %329 = vector.load %arg12[%c1_221, %c5_222, %c0_223, %c0_224] : memref<2x8x32x32xbf16, #tpu.memory_space<vmem>>, vector<1x1x32x32xbf16>
    %330 = vector.shape_cast %329 : vector<1x1x32x32xbf16> to vector<32x32xbf16>
    %c1_225 = arith.constant 1 : index
    %c5_226 = arith.constant 5 : index
    %c0_227 = arith.constant 0 : index
    %c0_228 = arith.constant 0 : index
    %331 = vector.load %arg13[%c1_225, %c5_226, %c0_227, %c0_228] : memref<2x8x1x32xf32, #tpu.memory_space<vmem>>, vector<1x1x1x32xf32>
    %332 = vector.shape_cast %331 : vector<1x1x1x32xf32> to vector<1x32xf32>
    %333 = arith.truncf %320 : vector<16x32xf32> to vector<16x32xbf16>
    %cst_229 = arith.constant dense<0.000000e+00> : vector<16x32xf32>
    %334 = tpu.matmul %333, %330, %cst_229 {dimension_numbers = #tpu.dot_dimension_numbers<[1], [0], [0], [1], [0, 0, 1, 1], [], []>} : vector<16x32xbf16>, vector<32x32xbf16>, vector<16x32xf32> -> vector<16x32xf32>
    %335 = vector.broadcast %332 : vector<1x32xf32> to vector<16x32xf32>
    %336 = arith.addf %334, %335 : vector<16x32xf32>
    %c1_230 = arith.constant 1 : index
    %c6_231 = arith.constant 6 : index
    %c0_232 = arith.constant 0 : index
    %c0_233 = arith.constant 0 : index
    %337 = vector.load %arg12[%c1_230, %c6_231, %c0_232, %c0_233] : memref<2x8x32x32xbf16, #tpu.memory_space<vmem>>, vector<1x1x32x32xbf16>
    %338 = vector.shape_cast %337 : vector<1x1x32x32xbf16> to vector<32x32xbf16>
    %c1_234 = arith.constant 1 : index
    %c6_235 = arith.constant 6 : index
    %c0_236 = arith.constant 0 : index
    %c0_237 = arith.constant 0 : index
    %339 = vector.load %arg13[%c1_234, %c6_235, %c0_236, %c0_237] : memref<2x8x1x32xf32, #tpu.memory_space<vmem>>, vector<1x1x1x32xf32>
    %340 = vector.shape_cast %339 : vector<1x1x1x32xf32> to vector<1x32xf32>
    %341 = arith.truncf %320 : vector<16x32xf32> to vector<16x32xbf16>
    %cst_238 = arith.constant dense<0.000000e+00> : vector<16x32xf32>
    %342 = tpu.matmul %341, %338, %cst_238 {dimension_numbers = #tpu.dot_dimension_numbers<[1], [0], [0], [1], [0, 0, 1, 1], [], []>} : vector<16x32xbf16>, vector<32x32xbf16>, vector<16x32xf32> -> vector<16x32xf32>
    %343 = vector.broadcast %340 : vector<1x32xf32> to vector<16x32xf32>
    %344 = arith.addf %342, %343 : vector<16x32xf32>
    %345 = vector.shape_cast %328 : vector<16x32xf32> to vector<2x8x32xf32>
    %346 = arith.truncf %345 : vector<2x8x32xf32> to vector<2x8x32xbf16>
    %347 = vector.shape_cast %336 : vector<16x32xf32> to vector<2x8x32xf32>
    %348 = arith.truncf %347 : vector<2x8x32xf32> to vector<2x8x32xbf16>
    %349 = vector.shape_cast %344 : vector<16x32xf32> to vector<2x8x32xf32>
    %350 = arith.truncf %349 : vector<2x8x32xf32> to vector<2x8x32xbf16>
    "tpu.trace_start"() <{level = 10 : i32, message = "bqd,bkd->bqk"}> : () -> ()
    %cst_239 = arith.constant dense<0.000000e+00> : vector<2x8x8xf32>
    %351 = tpu.matmul %346, %348, %cst_239 {dimension_numbers = #tpu.dot_dimension_numbers<[2], [2], [1], [1], [0, 0, 0, 1, 1, 1], [0], [0]>} : vector<2x8x32xbf16>, vector<2x8x32xbf16>, vector<2x8x8xf32> -> vector<2x8x8xf32>
    "tpu.trace_stop"() : () -> ()
    %cst_240 = arith.constant 0.176776692 : f32
    %352 = vector.broadcast %cst_240 : f32 to vector<2x8x8xf32>
    %353 = arith.mulf %351, %352 : vector<2x8x8xf32>
    %cst_241 = arith.constant dense<0xFF800000> : vector<2x8xf32>
    %354 = vector.multi_reduction <maximumf>, %353, %cst_241 [2] : vector<2x8x8xf32> to vector<2x8xf32>
    %355 = vector.shape_cast %354 : vector<2x8xf32> to vector<2x8x1xf32>
    %356 = vector.broadcast %355 : vector<2x8x1xf32> to vector<2x8x8xf32>
    %357 = arith.subf %353, %356 : vector<2x8x8xf32>
    %358 = math.exp %357 : vector<2x8x8xf32>
    %cst_242 = arith.constant dense<0.000000e+00> : vector<2x8xf32>
    %359 = vector.multi_reduction <add>, %358, %cst_242 [2] : vector<2x8x8xf32> to vector<2x8xf32>
    %360 = vector.shape_cast %359 : vector<2x8xf32> to vector<2x8x1xf32>
    %361 = tpu.reciprocal %360 {approx = true} : vector<2x8x1xf32> -> vector<2x8x1xf32>
    %362 = vector.broadcast %361 : vector<2x8x1xf32> to vector<2x8x8xf32>
    %363 = arith.mulf %358, %362 : vector<2x8x8xf32>
    %364 = arith.truncf %363 : vector<2x8x8xf32> to vector<2x8x8xbf16>
    "tpu.trace_start"() <{level = 10 : i32, message = "bqk,bkd->bqd"}> : () -> ()
    %cst_243 = arith.constant dense<0.000000e+00> : vector<2x8x32xf32>
    %365 = tpu.matmul %364, %350, %cst_243 {dimension_numbers = #tpu.dot_dimension_numbers<[2], [1], [1], [2], [0, 0, 0, 1, 1, 2], [0], [0]>} : vector<2x8x8xbf16>, vector<2x8x32xbf16>, vector<2x8x32xf32> -> vector<2x8x32xf32>
    "tpu.trace_stop"() : () -> ()
    %366 = vector.shape_cast %365 : vector<2x8x32xf32> to vector<16x32xf32>
    %c1_244 = arith.constant 1 : index
    %c7_245 = arith.constant 7 : index
    %c0_246 = arith.constant 0 : index
    %c0_247 = arith.constant 0 : index
    %367 = vector.load %arg12[%c1_244, %c7_245, %c0_246, %c0_247] : memref<2x8x32x32xbf16, #tpu.memory_space<vmem>>, vector<1x1x32x32xbf16>
    %368 = vector.shape_cast %367 : vector<1x1x32x32xbf16> to vector<32x32xbf16>
    %c1_248 = arith.constant 1 : index
    %c7_249 = arith.constant 7 : index
    %c0_250 = arith.constant 0 : index
    %c0_251 = arith.constant 0 : index
    %369 = vector.load %arg13[%c1_248, %c7_249, %c0_250, %c0_251] : memref<2x8x1x32xf32, #tpu.memory_space<vmem>>, vector<1x1x1x32xf32>
    %370 = vector.shape_cast %369 : vector<1x1x1x32xf32> to vector<1x32xf32>
    %371 = arith.truncf %366 : vector<16x32xf32> to vector<16x32xbf16>
    %cst_252 = arith.constant dense<0.000000e+00> : vector<16x32xf32>
    %372 = tpu.matmul %371, %368, %cst_252 {dimension_numbers = #tpu.dot_dimension_numbers<[1], [0], [0], [1], [0, 0, 1, 1], [], []>} : vector<16x32xbf16>, vector<32x32xbf16>, vector<16x32xf32> -> vector<16x32xf32>
    %373 = vector.broadcast %370 : vector<1x32xf32> to vector<16x32xf32>
    %374 = arith.addf %372, %373 : vector<16x32xf32>
    %375 = arith.addf %320, %374 : vector<16x32xf32>
    %cst_253 = arith.constant dense<0.000000e+00> : vector<16xf32>
    %376 = vector.multi_reduction <add>, %375, %cst_253 [1] : vector<16x32xf32> to vector<16xf32>
    %377 = vector.shape_cast %376 : vector<16xf32> to vector<16x1xf32>
    %cst_254 = arith.constant 3.200000e+01 : f32
    %378 = vector.broadcast %cst_254 : f32 to vector<16x1xf32>
    %379 = arith.divf %377, %378 : vector<16x1xf32>
    %380 = vector.broadcast %379 : vector<16x1xf32> to vector<16x32xf32>
    %381 = arith.subf %375, %380 : vector<16x32xf32>
    %382 = arith.mulf %381, %381 : vector<16x32xf32>
    %cst_255 = arith.constant dense<0.000000e+00> : vector<16xf32>
    %383 = vector.multi_reduction <add>, %382, %cst_255 [1] : vector<16x32xf32> to vector<16xf32>
    %384 = vector.shape_cast %383 : vector<16xf32> to vector<16x1xf32>
    %cst_256 = arith.constant 3.200000e+01 : f32
    %385 = vector.broadcast %cst_256 : f32 to vector<16x1xf32>
    %386 = arith.divf %384, %385 : vector<16x1xf32>
    %387 = vector.broadcast %379 : vector<16x1xf32> to vector<16x32xf32>
    %388 = arith.subf %375, %387 : vector<16x32xf32>
    %cst_257 = arith.constant 9.99999974E-6 : f32
    %389 = vector.broadcast %cst_257 : f32 to vector<16x1xf32>
    %390 = arith.addf %386, %389 : vector<16x1xf32>
    %391 = math.rsqrt %390 : vector<16x1xf32>
    %392 = vector.broadcast %391 : vector<16x1xf32> to vector<16x32xf32>
    %393 = arith.mulf %388, %392 : vector<16x32xf32>
    %c1_258 = arith.constant 1 : index
    %c1_259 = arith.constant 1 : index
    %c0_260 = arith.constant 0 : index
    %c0_261 = arith.constant 0 : index
    %394 = vector.load %arg18[%c1_258, %c1_259, %c0_260, %c0_261] : memref<2x3x1x32xf32, #tpu.memory_space<vmem>>, vector<1x1x1x32xf32>
    %395 = vector.shape_cast %394 : vector<1x1x1x32xf32> to vector<1x32xf32>
    %396 = vector.broadcast %395 : vector<1x32xf32> to vector<16x32xf32>
    %397 = arith.mulf %393, %396 : vector<16x32xf32>
    %c1_262 = arith.constant 1 : index
    %c1_263 = arith.constant 1 : index
    %c0_264 = arith.constant 0 : index
    %c0_265 = arith.constant 0 : index
    %398 = vector.load %arg19[%c1_262, %c1_263, %c0_264, %c0_265] : memref<2x3x1x32xf32, #tpu.memory_space<vmem>>, vector<1x1x1x32xf32>
    %399 = vector.shape_cast %398 : vector<1x1x1x32xf32> to vector<1x32xf32>
    %400 = vector.broadcast %399 : vector<1x32xf32> to vector<16x32xf32>
    %401 = arith.addf %397, %400 : vector<16x32xf32>
    %c1_266 = arith.constant 1 : index
    %c0_267 = arith.constant 0 : index
    %c0_268 = arith.constant 0 : index
    %402 = vector.load %arg14[%c1_266, %c0_267, %c0_268] : memref<2x32x64xbf16, #tpu.memory_space<vmem>>, vector<1x32x64xbf16>
    %403 = vector.shape_cast %402 : vector<1x32x64xbf16> to vector<32x64xbf16>
    %c1_269 = arith.constant 1 : index
    %c0_270 = arith.constant 0 : index
    %c0_271 = arith.constant 0 : index
    %404 = vector.load %arg15[%c1_269, %c0_270, %c0_271] : memref<2x1x64xf32, #tpu.memory_space<vmem>>, vector<1x1x64xf32>
    %405 = vector.shape_cast %404 : vector<1x1x64xf32> to vector<1x64xf32>
    %406 = arith.truncf %401 : vector<16x32xf32> to vector<16x32xbf16>
    %cst_272 = arith.constant dense<0.000000e+00> : vector<16x64xf32>
    %407 = tpu.matmul %406, %403, %cst_272 {dimension_numbers = #tpu.dot_dimension_numbers<[1], [0], [0], [1], [0, 0, 1, 1], [], []>} : vector<16x32xbf16>, vector<32x64xbf16>, vector<16x64xf32> -> vector<16x64xf32>
    %408 = vector.broadcast %405 : vector<1x64xf32> to vector<16x64xf32>
    %409 = arith.addf %407, %408 : vector<16x64xf32>
    %cst_273 = arith.constant 0.000000e+00 : f32
    %410 = vector.broadcast %cst_273 : f32 to vector<16x64xf32>
    %411 = arith.maximumf %409, %410 : vector<16x64xf32>
    %c1_274 = arith.constant 1 : index
    %c0_275 = arith.constant 0 : index
    %c0_276 = arith.constant 0 : index
    %412 = vector.load %arg16[%c1_274, %c0_275, %c0_276] : memref<2x64x32xbf16, #tpu.memory_space<vmem>>, vector<1x64x32xbf16>
    %413 = vector.shape_cast %412 : vector<1x64x32xbf16> to vector<64x32xbf16>
    %c1_277 = arith.constant 1 : index
    %c0_278 = arith.constant 0 : index
    %c0_279 = arith.constant 0 : index
    %414 = vector.load %arg17[%c1_277, %c0_278, %c0_279] : memref<2x1x32xf32, #tpu.memory_space<vmem>>, vector<1x1x32xf32>
    %415 = vector.shape_cast %414 : vector<1x1x32xf32> to vector<1x32xf32>
    %416 = arith.truncf %411 : vector<16x64xf32> to vector<16x64xbf16>
    %cst_280 = arith.constant dense<0.000000e+00> : vector<16x32xf32>
    %417 = tpu.matmul %416, %413, %cst_280 {dimension_numbers = #tpu.dot_dimension_numbers<[1], [0], [0], [1], [0, 0, 1, 1], [], []>} : vector<16x64xbf16>, vector<64x32xbf16>, vector<16x32xf32> -> vector<16x32xf32>
    %418 = vector.broadcast %415 : vector<1x32xf32> to vector<16x32xf32>
    %419 = arith.addf %417, %418 : vector<16x32xf32>
    %420 = arith.addf %401, %419 : vector<16x32xf32>
    %cst_281 = arith.constant dense<0.000000e+00> : vector<16xf32>
    %421 = vector.multi_reduction <add>, %420, %cst_281 [1] : vector<16x32xf32> to vector<16xf32>
    %422 = vector.shape_cast %421 : vector<16xf32> to vector<16x1xf32>
    %cst_282 = arith.constant 3.200000e+01 : f32
    %423 = vector.broadcast %cst_282 : f32 to vector<16x1xf32>
    %424 = arith.divf %422, %423 : vector<16x1xf32>
    %425 = vector.broadcast %424 : vector<16x1xf32> to vector<16x32xf32>
    %426 = arith.subf %420, %425 : vector<16x32xf32>
    %427 = arith.mulf %426, %426 : vector<16x32xf32>
    %cst_283 = arith.constant dense<0.000000e+00> : vector<16xf32>
    %428 = vector.multi_reduction <add>, %427, %cst_283 [1] : vector<16x32xf32> to vector<16xf32>
    %429 = vector.shape_cast %428 : vector<16xf32> to vector<16x1xf32>
    %cst_284 = arith.constant 3.200000e+01 : f32
    %430 = vector.broadcast %cst_284 : f32 to vector<16x1xf32>
    %431 = arith.divf %429, %430 : vector<16x1xf32>
    %432 = vector.broadcast %424 : vector<16x1xf32> to vector<16x32xf32>
    %433 = arith.subf %420, %432 : vector<16x32xf32>
    %cst_285 = arith.constant 9.99999974E-6 : f32
    %434 = vector.broadcast %cst_285 : f32 to vector<16x1xf32>
    %435 = arith.addf %431, %434 : vector<16x1xf32>
    %436 = math.rsqrt %435 : vector<16x1xf32>
    %437 = vector.broadcast %436 : vector<16x1xf32> to vector<16x32xf32>
    %438 = arith.mulf %433, %437 : vector<16x32xf32>
    %c1_286 = arith.constant 1 : index
    %c2_287 = arith.constant 2 : index
    %c0_288 = arith.constant 0 : index
    %c0_289 = arith.constant 0 : index
    %439 = vector.load %arg18[%c1_286, %c2_287, %c0_288, %c0_289] : memref<2x3x1x32xf32, #tpu.memory_space<vmem>>, vector<1x1x1x32xf32>
    %440 = vector.shape_cast %439 : vector<1x1x1x32xf32> to vector<1x32xf32>
    %441 = vector.broadcast %440 : vector<1x32xf32> to vector<16x32xf32>
    %442 = arith.mulf %438, %441 : vector<16x32xf32>
    %c1_290 = arith.constant 1 : index
    %c2_291 = arith.constant 2 : index
    %c0_292 = arith.constant 0 : index
    %c0_293 = arith.constant 0 : index
    %443 = vector.load %arg19[%c1_290, %c2_291, %c0_292, %c0_293] : memref<2x3x1x32xf32, #tpu.memory_space<vmem>>, vector<1x1x1x32xf32>
    %444 = vector.shape_cast %443 : vector<1x1x1x32xf32> to vector<1x32xf32>
    %445 = vector.broadcast %444 : vector<1x32xf32> to vector<16x32xf32>
    %446 = arith.addf %442, %445 : vector<16x32xf32>
    %c0_294 = arith.constant 0 : index
    %c0_295 = arith.constant 0 : index
    %447 = vector.load %arg20[%c0_294, %c0_295] : memref<32x4xbf16, #tpu.memory_space<vmem>>, vector<32x4xbf16>
    %c0_296 = arith.constant 0 : index
    %c0_297 = arith.constant 0 : index
    %448 = vector.load %arg21[%c0_296, %c0_297] : memref<1x4xf32, #tpu.memory_space<vmem>>, vector<1x4xf32>
    %449 = arith.truncf %446 : vector<16x32xf32> to vector<16x32xbf16>
    %cst_298 = arith.constant dense<0.000000e+00> : vector<16x4xf32>
    %450 = tpu.matmul %449, %447, %cst_298 {dimension_numbers = #tpu.dot_dimension_numbers<[1], [0], [0], [1], [0, 0, 1, 1], [], []>} : vector<16x32xbf16>, vector<32x4xbf16>, vector<16x4xf32> -> vector<16x4xf32>
    %451 = vector.broadcast %448 : vector<1x4xf32> to vector<16x4xf32>
    %452 = arith.addf %450, %451 : vector<16x4xf32>
    %c0_299 = arith.constant 0 : index
    %c0_300 = arith.constant 0 : index
    %453 = vector.load %arg22[%c0_299, %c0_300] : memref<32x32xbf16, #tpu.memory_space<vmem>>, vector<32x32xbf16>
    %c0_301 = arith.constant 0 : index
    %c0_302 = arith.constant 0 : index
    %454 = vector.load %arg23[%c0_301, %c0_302] : memref<1x32xf32, #tpu.memory_space<vmem>>, vector<1x32xf32>
    %455 = arith.truncf %446 : vector<16x32xf32> to vector<16x32xbf16>
    %cst_303 = arith.constant dense<0.000000e+00> : vector<16x32xf32>
    %456 = tpu.matmul %455, %453, %cst_303 {dimension_numbers = #tpu.dot_dimension_numbers<[1], [0], [0], [1], [0, 0, 1, 1], [], []>} : vector<16x32xbf16>, vector<32x32xbf16>, vector<16x32xf32> -> vector<16x32xf32>
    %457 = vector.broadcast %454 : vector<1x32xf32> to vector<16x32xf32>
    %458 = arith.addf %456, %457 : vector<16x32xf32>
    %cst_304 = arith.constant 0.000000e+00 : f32
    %459 = vector.broadcast %cst_304 : f32 to vector<16x32xf32>
    %460 = arith.maximumf %458, %459 : vector<16x32xf32>
    %c0_305 = arith.constant 0 : index
    %c0_306 = arith.constant 0 : index
    %461 = vector.load %arg24[%c0_305, %c0_306] : memref<32x32xbf16, #tpu.memory_space<vmem>>, vector<32x32xbf16>
    %c0_307 = arith.constant 0 : index
    %c0_308 = arith.constant 0 : index
    %462 = vector.load %arg25[%c0_307, %c0_308] : memref<1x32xf32, #tpu.memory_space<vmem>>, vector<1x32xf32>
    %463 = arith.truncf %460 : vector<16x32xf32> to vector<16x32xbf16>
    %cst_309 = arith.constant dense<0.000000e+00> : vector<16x32xf32>
    %464 = tpu.matmul %463, %461, %cst_309 {dimension_numbers = #tpu.dot_dimension_numbers<[1], [0], [0], [1], [0, 0, 1, 1], [], []>} : vector<16x32xbf16>, vector<32x32xbf16>, vector<16x32xf32> -> vector<16x32xf32>
    %465 = vector.broadcast %462 : vector<1x32xf32> to vector<16x32xf32>
    %466 = arith.addf %464, %465 : vector<16x32xf32>
    %467 = vector.shape_cast %466 : vector<16x32xf32> to vector<2x8x32xf32>
    %468 = arith.truncf %467 : vector<2x8x32xf32> to vector<2x8x32xbf16>
    %469 = vector.shape_cast %21 : vector<128x32xf32> to vector<2x64x32xf32>
    %470 = arith.truncf %469 : vector<2x64x32xf32> to vector<2x64x32xbf16>
    "tpu.trace_start"() <{level = 10 : i32, message = "bqd,bpd->bqp"}> : () -> ()
    %cst_310 = arith.constant dense<0.000000e+00> : vector<2x8x64xf32>
    %471 = tpu.matmul %468, %470, %cst_310 {dimension_numbers = #tpu.dot_dimension_numbers<[2], [2], [1], [1], [0, 0, 0, 1, 1, 1], [0], [0]>} : vector<2x8x32xbf16>, vector<2x64x32xbf16>, vector<2x8x64xf32> -> vector<2x8x64xf32>
    "tpu.trace_stop"() : () -> ()
    %472 = vector.shape_cast %471 : vector<2x8x64xf32> to vector<16x64xf32>
    %cst_311 = arith.constant 0.000000e+00 : f32
    %473 = vector.broadcast %cst_311 : f32 to vector<16x60xf32>
    %474 = tpu.concatenate %472, %452, %473 in 1 : vector<16x64xf32>, vector<16x4xf32>, vector<16x60xf32> -> vector<16x128xf32>
    %c0_312 = arith.constant 0 : index
    %c0_313 = arith.constant 0 : index
    %475 = vector.load %arg26[%c0_312, %c0_313] : memref<16x128xf32, #tpu.memory_space<vmem>>, vector<16x128xf32>
    tpu.vector_store %arg26[%c0_312, %c0_313], %474 {strides = array<i32>} : memref<16x128xf32, #tpu.memory_space<vmem>>, vector<16x128xf32>,
    return
  }
  func.func @transform_0(%arg0: i32) -> (i32, i32) {
    %c0_i32 = arith.constant 0 : i32
    %c0_i32_0 = arith.constant 0 : i32
    %c0_i32_1 = arith.constant 0 : i32
    return %c0_i32, %c0_i32_0 : i32, i32
  }
  func.func @transform_1(%arg0: i32) -> (i32, i32) {
    %c0_i32 = arith.constant 0 : i32
    %c0_i32_0 = arith.constant 0 : i32
    %c0_i32_1 = arith.constant 0 : i32
    return %c0_i32, %c0_i32_0 : i32, i32
  }
  func.func @transform_2(%arg0: i32) -> (i32, i32) {
    %c0_i32 = arith.constant 0 : i32
    %c0_i32_0 = arith.constant 0 : i32
    %c0_i32_1 = arith.constant 0 : i32
    return %c0_i32, %c0_i32_0 : i32, i32
  }
  func.func @transform_3(%arg0: i32) -> (i32, i32) {
    %c0_i32 = arith.constant 0 : i32
    %c0_i32_0 = arith.constant 0 : i32
    %c0_i32_1 = arith.constant 0 : i32
    return %c0_i32, %c0_i32_0 : i32, i32
  }
  func.func @transform_4(%arg0: i32) -> (i32, i32) {
    %c0_i32 = arith.constant 0 : i32
    %c0_i32_0 = arith.constant 0 : i32
    %c0_i32_1 = arith.constant 0 : i32
    return %c0_i32, %c0_i32_0 : i32, i32
  }
  func.func @transform_5(%arg0: i32) -> (i32, i32) {
    %c0_i32 = arith.constant 0 : i32
    %c0_i32_0 = arith.constant 0 : i32
    %c0_i32_1 = arith.constant 0 : i32
    return %c0_i32, %c0_i32_0 : i32, i32
  }
  func.func @transform_6(%arg0: i32) -> (i32, i32) {
    %c0_i32 = arith.constant 0 : i32
    %c0_i32_0 = arith.constant 0 : i32
    %c0_i32_1 = arith.constant 0 : i32
    return %c0_i32, %c0_i32_0 : i32, i32
  }
  func.func @transform_7(%arg0: i32) -> (i32, i32) {
    %c0_i32 = arith.constant 0 : i32
    %c0_i32_0 = arith.constant 0 : i32
    %c0_i32_1 = arith.constant 0 : i32
    return %c0_i32, %c0_i32_0 : i32, i32
  }
  func.func @transform_8(%arg0: i32) -> (i32, i32) {
    %c0_i32 = arith.constant 0 : i32
    %c0_i32_0 = arith.constant 0 : i32
    %c0_i32_1 = arith.constant 0 : i32
    return %c0_i32, %c0_i32_0 : i32, i32
  }
  func.func @transform_9(%arg0: i32) -> (i32, i32) {
    %c0_i32 = arith.constant 0 : i32
    %c0_i32_0 = arith.constant 0 : i32
    %c0_i32_1 = arith.constant 0 : i32
    return %c0_i32, %c0_i32_0 : i32, i32
  }
  func.func @transform_10(%arg0: i32) -> (i32, i32, i32) {
    %c0_i32 = arith.constant 0 : i32
    %c0_i32_0 = arith.constant 0 : i32
    %c0_i32_1 = arith.constant 0 : i32
    %c0_i32_2 = arith.constant 0 : i32
    return %c0_i32, %c0_i32_0, %c0_i32_1 : i32, i32, i32
  }
  func.func @transform_11(%arg0: i32) -> (i32, i32, i32, i32) {
    %c0_i32 = arith.constant 0 : i32
    %c0_i32_0 = arith.constant 0 : i32
    %c0_i32_1 = arith.constant 0 : i32
    %c0_i32_2 = arith.constant 0 : i32
    %c0_i32_3 = arith.constant 0 : i32
    return %c0_i32, %c0_i32_0, %c0_i32_1, %c0_i32_2 : i32, i32, i32, i32
  }
  func.func @transform_12(%arg0: i32) -> (i32, i32, i32, i32) {
    %c0_i32 = arith.constant 0 : i32
    %c0_i32_0 = arith.constant 0 : i32
    %c0_i32_1 = arith.constant 0 : i32
    %c0_i32_2 = arith.constant 0 : i32
    %c0_i32_3 = arith.constant 0 : i32
    return %c0_i32, %c0_i32_0, %c0_i32_1, %c0_i32_2 : i32, i32, i32, i32
  }
  func.func @transform_13(%arg0: i32) -> (i32, i32, i32) {
    %c0_i32 = arith.constant 0 : i32
    %c0_i32_0 = arith.constant 0 : i32
    %c0_i32_1 = arith.constant 0 : i32
    %c0_i32_2 = arith.constant 0 : i32
    return %c0_i32, %c0_i32_0, %c0_i32_1 : i32, i32, i32
  }
  func.func @transform_14(%arg0: i32) -> (i32, i32, i32) {
    %c0_i32 = arith.constant 0 : i32
    %c0_i32_0 = arith.constant 0 : i32
    %c0_i32_1 = arith.constant 0 : i32
    %c0_i32_2 = arith.constant 0 : i32
    return %c0_i32, %c0_i32_0, %c0_i32_1 : i32, i32, i32
  }
  func.func @transform_15(%arg0: i32) -> (i32, i32, i32) {
    %c0_i32 = arith.constant 0 : i32
    %c0_i32_0 = arith.constant 0 : i32
    %c0_i32_1 = arith.constant 0 : i32
    %c0_i32_2 = arith.constant 0 : i32
    return %c0_i32, %c0_i32_0, %c0_i32_1 : i32, i32, i32
  }
  func.func @transform_16(%arg0: i32) -> (i32, i32, i32) {
    %c0_i32 = arith.constant 0 : i32
    %c0_i32_0 = arith.constant 0 : i32
    %c0_i32_1 = arith.constant 0 : i32
    %c0_i32_2 = arith.constant 0 : i32
    return %c0_i32, %c0_i32_0, %c0_i32_1 : i32, i32, i32
  }
  func.func @transform_17(%arg0: i32) -> (i32, i32, i32, i32) {
    %c0_i32 = arith.constant 0 : i32
    %c0_i32_0 = arith.constant 0 : i32
    %c0_i32_1 = arith.constant 0 : i32
    %c0_i32_2 = arith.constant 0 : i32
    %c0_i32_3 = arith.constant 0 : i32
    return %c0_i32, %c0_i32_0, %c0_i32_1, %c0_i32_2 : i32, i32, i32, i32
  }
  func.func @transform_18(%arg0: i32) -> (i32, i32, i32, i32) {
    %c0_i32 = arith.constant 0 : i32
    %c0_i32_0 = arith.constant 0 : i32
    %c0_i32_1 = arith.constant 0 : i32
    %c0_i32_2 = arith.constant 0 : i32
    %c0_i32_3 = arith.constant 0 : i32
    return %c0_i32, %c0_i32_0, %c0_i32_1, %c0_i32_2 : i32, i32, i32, i32
  }
  func.func @transform_19(%arg0: i32) -> (i32, i32) {
    %c0_i32 = arith.constant 0 : i32
    %c0_i32_0 = arith.constant 0 : i32
    %c0_i32_1 = arith.constant 0 : i32
    return %c0_i32, %c0_i32_0 : i32, i32
  }
  func.func @transform_20(%arg0: i32) -> (i32, i32) {
    %c0_i32 = arith.constant 0 : i32
    %c0_i32_0 = arith.constant 0 : i32
    %c0_i32_1 = arith.constant 0 : i32
    return %c0_i32, %c0_i32_0 : i32, i32
  }
  func.func @transform_21(%arg0: i32) -> (i32, i32) {
    %c0_i32 = arith.constant 0 : i32
    %c0_i32_0 = arith.constant 0 : i32
    %c0_i32_1 = arith.constant 0 : i32
    return %c0_i32, %c0_i32_0 : i32, i32
  }
  func.func @transform_22(%arg0: i32) -> (i32, i32) {
    %c0_i32 = arith.constant 0 : i32
    %c0_i32_0 = arith.constant 0 : i32
    %c0_i32_1 = arith.constant 0 : i32
    return %c0_i32, %c0_i32_0 : i32, i32
  }
  func.func @transform_23(%arg0: i32) -> (i32, i32) {
    %c0_i32 = arith.constant 0 : i32
    %c0_i32_0 = arith.constant 0 : i32
    %c0_i32_1 = arith.constant 0 : i32
    return %c0_i32, %c0_i32_0 : i32, i32
  }
  func.func @transform_24(%arg0: i32) -> (i32, i32) {
    %c0_i32 = arith.constant 0 : i32
    %c0_i32_0 = arith.constant 0 : i32
    %c0_i32_1 = arith.constant 0 : i32
    return %c0_i32, %c0_i32_0 : i32, i32
  }
  func.func @transform_25(%arg0: i32) -> (i32, i32) {
    %c0_i32 = arith.constant 0 : i32
    %c0_i32_0 = arith.constant 0 : i32
    %c0_i32_1 = arith.constant 0 : i32
    return %c0_i32, %c0_i32_0 : i32, i32
  }
}

</mosaic_0001>

<llo_original>
// kernel: mask2former_forward.2
$region0: #{mask2former_forward.2}
  #allocation0 [shape = 'u32[]', space=smem, size = 0x4, offset = 0x4, fixed_abs, tag = 'smem constant byte address 0x4 - core index']
  #allocation1 [shape = 'u32[144,128]{1,0:T(1,128)}', space=vmem, size = 0x12000, scoped, tag = 'internal scratch']
  %s0 = inlined_call_operand.vmem [shape: bf16[128,36], index: 0, kind: input, shape index: {}]
  %s1 = inlined_call_operand.vmem [shape: bf16[36,16], index: 1, kind: input, shape index: {}]
  %s2 = inlined_call_operand.vmem [shape: f32[1,16], index: 2, kind: input, shape index: {}]
  %s3 = inlined_call_operand.vmem [shape: bf16[16,32], index: 3, kind: input, shape index: {}]
  %s4 = inlined_call_operand.vmem [shape: f32[1,32], index: 4, kind: input, shape index: {}]
  %s5 = inlined_call_operand.vmem [shape: bf16[128,16], index: 5, kind: output, shape index: {0}]
  %s6 = inlined_call_operand.vmem [shape: bf16[128,32], index: 6, kind: output, shape index: {1}]
  %7 = xla_tuple %s5, %s6
  %s8 = sld [smem:[#allocation0]]
  $region38: #{mask2former_forward.2} parent=0
    _
  %s10 = ssub.s32 1, %s8
  %s11 = scalar_select 0, %s10, %s8
  // Predicated region
  $region2: #{mask2former_forward.2} parent=0 // pred_check
    _
  $region3: #{mask2former_forward.2} parent=0 // pred_check_branch
    %13 = sbr.rel (0) target = $region5
  $region4: #{mask2former_forward.2} parent=0 // pred_region
    _
  $region5: #{mask2former_forward.2} parent=0 // pred_fallthru
    _
  // Predicated region
  $region6: #{mask2former_forward.2} parent=0 // pred_check
    _
  $region7: #{mask2former_forward.2} parent=0 // pred_check_branch
    %15 = sbr.rel (0) target = $region9
  $region8: #{mask2former_forward.2} parent=0 // pred_region
    _
  $region9: #{mask2former_forward.2} parent=0 // pred_fallthru
    _
  // Predicated region
  $region10: #{mask2former_forward.2} parent=0 // pred_check
    _
  $region11: #{mask2former_forward.2} parent=0 // pred_check_branch
    %17 = sbr.rel (0) target = $region13
  $region12: #{mask2former_forward.2} parent=0 // pred_region
    _
  $region13: #{mask2former_forward.2} parent=0 // pred_fallthru
    _
  // Predicated region
  $region14: #{mask2former_forward.2} parent=0 // pred_check
    _
  $region15: #{mask2former_forward.2} parent=0 // pred_check_branch
    %19 = sbr.rel (0) target = $region17
  $region16: #{mask2former_forward.2} parent=0 // pred_region
    _
  $region17: #{mask2former_forward.2} parent=0 // pred_fallthru
    _
  // Predicated region
  $region18: #{mask2former_forward.2} parent=0 // pred_check
    _
  $region19: #{mask2former_forward.2} parent=0 // pred_check_branch
    %21 = sbr.rel (0) target = $region21
  $region20: #{mask2former_forward.2} parent=0 // pred_region
    _
  $region21: #{mask2former_forward.2} parent=0 // pred_fallthru
    _
  %v23 = vld [vmem:[%s0] sm:$0xf]
  %v24 = vld [vmem:[%s0 + $0x4] sm:$0xf]
  %v25 = vld [vmem:[%s0 + $0x8] sm:$0xf]
  %v26 = vld [vmem:[%s0 + $0xc] sm:$0xf]
  %v27 = vld [vmem:[%s0 + $0x10] sm:$0xf]
  %v28 = vld [vmem:[%s0 + $0x14] sm:$0xf]
  %v29 = vld [vmem:[%s0 + $0x18] sm:$0xf]
  %v30 = vld [vmem:[%s0 + $0x1c] sm:$0xf]
  %v31 = vld [vmem:[%s0 + $0x20] sm:$0xf]
  %v32 = vld [vmem:[%s0 + $0x24] sm:$0xf]
  %v33 = vld [vmem:[%s0 + $0x28] sm:$0xf]
  %v34 = vld [vmem:[%s0 + $0x2c] sm:$0xf]
  %v35 = vld [vmem:[%s0 + $0x30] sm:$0xf]
  %v36 = vld [vmem:[%s0 + $0x34] sm:$0xf]
  %v37 = vld [vmem:[%s0 + $0x38] sm:$0xf]
  %v38 = vld [vmem:[%s0 + $0x3c] sm:$0xf]
  %v39 = vld [vmem:[%s1] sm:$0xf]
  %v40 = vld [vmem:[%s1 + $0x4] sm:$0xf]
  %v41 = vld [vmem:[%s1 + $0x8] sm:$0xf]
  %v42 = vld [vmem:[%s1 + $0xc] sm:$0xf]
  %v43 = vld [vmem:[%s1 + $0x10] sm:$0x3]
  %v44 = vld [vmem:[%s2] sm:$0x1]
  %v46 = vlaneseq
  %v47 = vshrl.u32 %v46, 7
  %v48 = vsub.s32 0, %v47
  %v49 = vrot.slane %v44, %v48
  %v67 = vunpack.c.l.b16 %v23
  %v68 = vunpack.c.l.b16 %v24
  %v69 = vunpack.c.l.b16 %v25
  %v70 = vunpack.c.l.b16 %v26
  %v71 = vunpack.c.l.b16 %v27
  %v72 = vunpack.c.l.b16 %v28
  %v73 = vunpack.c.l.b16 %v29
  %v74 = vunpack.c.l.b16 %v30
  %v75 = vunpack.c.l.b16 %v31
  %v76 = vunpack.c.l.b16 %v32
  %v77 = vunpack.c.l.b16 %v33
  %v78 = vunpack.c.l.b16 %v34
  %v79 = vunpack.c.l.b16 %v35
  %v80 = vunpack.c.l.b16 %v36
  %v81 = vunpack.c.l.b16 %v37
  %v82 = vunpack.c.l.b16 %v38
  %v83 = vpack.c.b16 %v68, %v67
  %v84 = vpack.c.b16 %v70, %v69
  %v85 = vpack.c.b16 %v72, %v71
  %v86 = vpack.c.b16 %v74, %v73
  %v87 = vpack.c.b16 %v76, %v75
  %v88 = vpack.c.b16 %v78, %v77
  %v89 = vpack.c.b16 %v80, %v79
  %v90 = vpack.c.b16 %v82, %v81
  %v96 = vunpack.c.l.b16 %v39
  %v97 = vunpack.c.l.b16 %v40
  %v98 = vunpack.c.l.b16 %v41
  %v99 = vunpack.c.l.b16 %v42
  %v100 = vunpack.c.l.b16 %v43
  %v101 = vpack.c.b16 %v97, %v96
  %v102 = vpack.c.b16 %v99, %v98
  %v103 = vpack.c.b16 %v100, %v100
  %vm106 = vcmask 293888
  %v108 = vsel %vm106, %v83, 0
  %v111 = vsel %vm106, %v84, 0
  %v114 = vsel %vm106, %v85, 0
  %v117 = vsel %vm106, %v86, 0
  %v120 = vsel %vm106, %v87, 0
  %v123 = vsel %vm106, %v88, 0
  %v126 = vsel %vm106, %v89, 0
  %v129 = vsel %vm106, %v90, 0
  %vm131 = vcmask 1041408
  %v133 = vsel %vm131, %v103, 0
  %135 = vmatprep.subr.bf16.mxu0 0
  %136 = vmatpush1.bf16.msra.mxu0 0
  %137 = vmatprep.subr.bf16.mxu0 0
  %138 = vmatpush1.bf16.msra.mxu0 0
  %139 = vmatprep.subr.bf16.mxu0 0
  %140 = vmatpush1.bf16.msra.mxu0 0
  %141 = vmatprep.subr.bf16.mxu0 0
  %142 = vmatpush1.bf16.msra.mxu0 0
  %143 = vmatprep.subr.bf16.mxu0 0
  %144 = vmatpush1.bf16.msra.mxu0 0
  %145 = vmatprep.subr.bf16.mxu0 0
  %146 = vmatpush1.bf16.msra.mxu0 %v133
  %147 = vmatprep.subr.bf16.mxu0 0
  %148 = vmatpush1.bf16.msra.mxu0 %v102
  %149 = vmatprep.subr.bf16.mxu0 0
  %150 = vmatpush1.bf16.msra.mxu0 %v101
  %151 = vmatprep.subr.bf16.mxu0 0
  %152 = vmatpush2.bf16.msra.mxu0 0
  %153 = vmatprep.subr.bf16.mxu0 0
  %154 = vmatpush2.bf16.msra.mxu0 0
  %155 = vmatprep.subr.bf16.mxu0 0
  %156 = vmatpush2.bf16.msra.mxu0 0
  %157 = vmatprep.subr.bf16.mxu0 0
  %158 = vmatpush2.bf16.msra.mxu0 0
  %159 = vmatprep.subr.bf16.mxu0 0
  %160 = vmatpush2.bf16.msra.mxu0 0
  %161 = vmatprep.subr.bf16.mxu0 0
  %162 = vmatpush2.bf16.msra.mxu0 0
  %163 = vmatprep.subr.bf16.mxu0 0
  %164 = vmatpush2.bf16.msra.mxu0 0
  %165 = vmatprep.subr.bf16.mxu0 0
  %166 = vmatpush2.bf16.msra.mxu0 0
  %167 = vmatprep.mubr.bf16.mxu0 0
  %168 = vmatmul.mubr.bf16.gmra.mxu0 %v108
  %v169 = vpop.f32.mrf.mxu0
  %v170 = vadd.f32 %v49, %v169
  %v171 = vpop.f32.mrf.mxu0
  %v172 = vpop.f32.mrf.mxu0
  %v173 = vadd.f32 %v49, %v172
  %v174 = vpop.f32.mrf.mxu0
  %175 = vmatprep.mubr.bf16.mxu0 0
  %176 = vmatmul.mubr.bf16.gmra.mxu0 %v111
  %v177 = vpop.f32.mrf.mxu0
  %v178 = vadd.f32 %v49, %v177
  %v179 = vpop.f32.mrf.mxu0
  %v180 = vpop.f32.mrf.mxu0
  %v181 = vadd.f32 %v49, %v180
  %v182 = vpop.f32.mrf.mxu0
  %183 = vmatprep.mubr.bf16.mxu0 0
  %184 = vmatmul.mubr.bf16.gmra.mxu0 %v114
  %v185 = vpop.f32.mrf.mxu0
  %v186 = vadd.f32 %v49, %v185
  %v187 = vpop.f32.mrf.mxu0
  %v188 = vpop.f32.mrf.mxu0
  %v189 = vadd.f32 %v49, %v188
  %v190 = vpop.f32.mrf.mxu0
  %191 = vmatprep.mubr.bf16.mxu0 0
  %192 = vmatmul.mubr.bf16.gmra.mxu0 %v117
  %v193 = vpop.f32.mrf.mxu0
  %v194 = vadd.f32 %v49, %v193
  %v195 = vpop.f32.mrf.mxu0
  %v196 = vpop.f32.mrf.mxu0
  %v197 = vadd.f32 %v49, %v196
  %v198 = vpop.f32.mrf.mxu0
  %199 = vmatprep.mubr.bf16.mxu0 0
  %200 = vmatmul.mubr.bf16.gmra.mxu0 %v120
  %v201 = vpop.f32.mrf.mxu0
  %v202 = vadd.f32 %v49, %v201
  %v203 = vpop.f32.mrf.mxu0
  %v204 = vpop.f32.mrf.mxu0
  %v205 = vadd.f32 %v49, %v204
  %v206 = vpop.f32.mrf.mxu0
  %207 = vmatprep.mubr.bf16.mxu0 0
  %208 = vmatmul.mubr.bf16.gmra.mxu0 %v123
  %v209 = vpop.f32.mrf.mxu0
  %v210 = vadd.f32 %v49, %v209
  %v211 = vpop.f32.mrf.mxu0
  %v212 = vpop.f32.mrf.mxu0
  %v213 = vadd.f32 %v49, %v212
  %v214 = vpop.f32.mrf.mxu0
  %215 = vmatprep.mubr.bf16.mxu0 0
  %216 = vmatmul.mubr.bf16.gmra.mxu0 %v126
  %v217 = vpop.f32.mrf.mxu0
  %v218 = vadd.f32 %v49, %v217
  %v219 = vpop.f32.mrf.mxu0
  %v220 = vpop.f32.mrf.mxu0
  %v221 = vadd.f32 %v49, %v220
  %v222 = vpop.f32.mrf.mxu0
  %223 = vmatprep.mubr.bf16.mxu0 0
  %224 = vmatmul.mubr.bf16.gmra.mxu0 %v129
  %v225 = vpop.f32.mrf.mxu0
  %v226 = vadd.f32 %v49, %v225
  %v227 = vpop.f32.mrf.mxu0
  %v228 = vpop.f32.mrf.mxu0
  %v229 = vadd.f32 %v49, %v228
  %v230 = vpop.f32.mrf.mxu0
  %231 = vdwg.mxu0
  %v232 = vmax.f32 %v170, 0.0
  %v233 = vmax.f32 %v173, 0.0
  %v234 = vmax.f32 %v178, 0.0
  %v235 = vmax.f32 %v181, 0.0
  %v236 = vmax.f32 %v186, 0.0
  %v237 = vmax.f32 %v189, 0.0
  %v238 = vmax.f32 %v194, 0.0
  %v239 = vmax.f32 %v197, 0.0
  %v240 = vmax.f32 %v202, 0.0
  %v241 = vmax.f32 %v205, 0.0
  %v242 = vmax.f32 %v210, 0.0
  %v243 = vmax.f32 %v213, 0.0
  %v244 = vmax.f32 %v218, 0.0
  %v245 = vmax.f32 %v221, 0.0
  %v246 = vmax.f32 %v226, 0.0
  %v247 = vmax.f32 %v229, 0.0
  %v248 = vpack.c.bf16 %v233, %v232
  %v249 = vpack.c.bf16 %v235, %v234
  %v250 = vpack.c.bf16 %v237, %v236
  %v251 = vpack.c.bf16 %v239, %v238
  %v252 = vpack.c.bf16 %v241, %v240
  %v253 = vpack.c.bf16 %v243, %v242
  %v254 = vpack.c.bf16 %v245, %v244
  %v255 = vpack.c.bf16 %v247, %v246
  %v256 = vld [vmem:[%s3] sm:$0xf]
  %v257 = vld [vmem:[%s3 + $0x4] sm:$0xf]
  %v258 = vld [vmem:[%s4] sm:$0x1]
  %v260 = vlaneseq
  %v261 = vshrl.u32 %v260, 7
  %v262 = vsub.s32 0, %v261
  %v263 = vrot.slane %v258, %v262
  %v267 = vunpack.c.l.b16 %v256
  %v268 = vunpack.c.l.b16 %v257
  %v269 = vpack.c.b16 %v268, %v267
  %vm271 = vcmask 130048
  %v273 = vsel %vm271, %v248, 0
  %v276 = vsel %vm271, %v249, 0
  %v279 = vsel %vm271, %v250, 0
  %v282 = vsel %vm271, %v251, 0
  %v285 = vsel %vm271, %v252, 0
  %v288 = vsel %vm271, %v253, 0
  %v291 = vsel %vm271, %v254, 0
  %v294 = vsel %vm271, %v255, 0
  %296 = vmatprep.subr.bf16.mxu0 0
  %297 = vmatpush1.bf16.msra.mxu0 0
  %298 = vmatprep.subr.bf16.mxu0 0
  %299 = vmatpush1.bf16.msra.mxu0 0
  %300 = vmatprep.subr.bf16.mxu0 0
  %301 = vmatpush1.bf16.msra.mxu0 0
  %302 = vmatprep.subr.bf16.mxu0 0
  %303 = vmatpush1.bf16.msra.mxu0 0
  %304 = vmatprep.subr.bf16.mxu0 0
  %305 = vmatpush1.bf16.msra.mxu0 0
  %306 = vmatprep.subr.bf16.mxu0 0
  %307 = vmatpush1.bf16.msra.mxu0 0
  %308 = vmatprep.subr.bf16.mxu0 0
  %309 = vmatpush1.bf16.msra.mxu0 0
  %310 = vmatprep.subr.bf16.mxu0 0
  %311 = vmatpush1.bf16.msra.mxu0 %v269
  %312 = vmatprep.subr.bf16.mxu0 0
  %313 = vmatpush2.bf16.msra.mxu0 0
  %314 = vmatprep.subr.bf16.mxu0 0
  %315 = vmatpush2.bf16.msra.mxu0 0
  %316 = vmatprep.subr.bf16.mxu0 0
  %317 = vmatpush2.bf16.msra.mxu0 0
  %318 = vmatprep.subr.bf16.mxu0 0
  %319 = vmatpush2.bf16.msra.mxu0 0
  %320 = vmatprep.subr.bf16.mxu0 0
  %321 = vmatpush2.bf16.msra.mxu0 0
  %322 = vmatprep.subr.bf16.mxu0 0
  %323 = vmatpush2.bf16.msra.mxu0 0
  %324 = vmatprep.subr.bf16.mxu0 0
  %325 = vmatpush2.bf16.msra.mxu0 0
  %326 = vmatprep.subr.bf16.mxu0 0
  %327 = vmatpush2.bf16.msra.mxu0 0
  %328 = vmatprep.mubr.bf16.mxu0 0
  %329 = vmatmul.mubr.bf16.gmra.mxu0 %v273
  %v330 = vpop.f32.mrf.mxu0
  %v331 = vadd.f32 %v263, %v330
  %v332 = vpop.f32.mrf.mxu0
  %v333 = vpop.f32.mrf.mxu0
  %v334 = vadd.f32 %v263, %v333
  %v335 = vpop.f32.mrf.mxu0
  %336 = vmatprep.mubr.bf16.mxu0 0
  %337 = vmatmul.mubr.bf16.gmra.mxu0 %v276
  %v338 = vpop.f32.mrf.mxu0
  %v339 = vadd.f32 %v263, %v338
  %v340 = vpop.f32.mrf.mxu0
  %v341 = vpop.f32.mrf.mxu0
  %v342 = vadd.f32 %v263, %v341
  %v343 = vpop.f32.mrf.mxu0
  %344 = vmatprep.mubr.bf16.mxu0 0
  %345 = vmatmul.mubr.bf16.gmra.mxu0 %v279
  %v346 = vpop.f32.mrf.mxu0
  %v347 = vadd.f32 %v263, %v346
  %v348 = vpop.f32.mrf.mxu0
  %v349 = vpop.f32.mrf.mxu0
  %v350 = vadd.f32 %v263, %v349
  %v351 = vpop.f32.mrf.mxu0
  %352 = vmatprep.mubr.bf16.mxu0 0
  %353 = vmatmul.mubr.bf16.gmra.mxu0 %v282
  %v354 = vpop.f32.mrf.mxu0
  %v355 = vadd.f32 %v263, %v354
  %v356 = vpop.f32.mrf.mxu0
  %v357 = vpop.f32.mrf.mxu0
  %v358 = vadd.f32 %v263, %v357
  %v359 = vpop.f32.mrf.mxu0
  %360 = vmatprep.mubr.bf16.mxu0 0
  %361 = vmatmul.mubr.bf16.gmra.mxu0 %v285
  %v362 = vpop.f32.mrf.mxu0
  %v363 = vadd.f32 %v263, %v362
  %v364 = vpop.f32.mrf.mxu0
  %v365 = vpop.f32.mrf.mxu0
  %v366 = vadd.f32 %v263, %v365
  %v367 = vpop.f32.mrf.mxu0
  %368 = vmatprep.mubr.bf16.mxu0 0
  %369 = vmatmul.mubr.bf16.gmra.mxu0 %v288
  %v370 = vpop.f32.mrf.mxu0
  %v371 = vadd.f32 %v263, %v370
  %v372 = vpop.f32.mrf.mxu0
  %v373 = vpop.f32.mrf.mxu0
  %v374 = vadd.f32 %v263, %v373
  %v375 = vpop.f32.mrf.mxu0
  %376 = vmatprep.mubr.bf16.mxu0 0
  %377 = vmatmul.mubr.bf16.gmra.mxu0 %v291
  %v378 = vpop.f32.mrf.mxu0
  %v379 = vadd.f32 %v263, %v378
  %v380 = vpop.f32.mrf.mxu0
  %v381 = vpop.f32.mrf.mxu0
  %v382 = vadd.f32 %v263, %v381
  %v383 = vpop.f32.mrf.mxu0
  %384 = vmatprep.mubr.bf16.mxu0 0
  %385 = vmatmul.mubr.bf16.gmra.mxu0 %v294
  %v386 = vpop.f32.mrf.mxu0
  %v387 = vadd.f32 %v263, %v386
  %v388 = vpop.f32.mrf.mxu0
  %v389 = vpop.f32.mrf.mxu0
  %v390 = vadd.f32 %v263, %v389
  %v391 = vpop.f32.mrf.mxu0
  %392 = vdwg.mxu0
  %v401 = vunpack.c.l.b16 %v248
  %v402 = vunpack.c.h.b16 %v248
  %v403 = vunpack.c.l.b16 %v249
  %v404 = vunpack.c.h.b16 %v249
  %v405 = vunpack.c.l.b16 %v250
  %v406 = vunpack.c.h.b16 %v250
  %v407 = vunpack.c.l.b16 %v251
  %v408 = vunpack.c.h.b16 %v251
  %v409 = vunpack.c.l.b16 %v252
  %v410 = vunpack.c.h.b16 %v252
  %v411 = vunpack.c.l.b16 %v253
  %v412 = vunpack.c.h.b16 %v253
  %v413 = vunpack.c.l.b16 %v254
  %v414 = vunpack.c.h.b16 %v254
  %v415 = vunpack.c.l.b16 %v255
  %v416 = vunpack.c.h.b16 %v255
  %v417 = vpack.c.b16 %v401, %v401
  %v418 = vpack.c.b16 %v402, %v402
  %v419 = vpack.c.b16 %v403, %v403
  %v420 = vpack.c.b16 %v404, %v404
  %v421 = vpack.c.b16 %v405, %v405
  %v422 = vpack.c.b16 %v406, %v406
  %v423 = vpack.c.b16 %v407, %v407
  %v424 = vpack.c.b16 %v408, %v408
  %v425 = vpack.c.b16 %v409, %v409
  %v426 = vpack.c.b16 %v410, %v410
  %v427 = vpack.c.b16 %v411, %v411
  %v428 = vpack.c.b16 %v412, %v412
  %v429 = vpack.c.b16 %v413, %v413
  %v430 = vpack.c.b16 %v414, %v414
  %v431 = vpack.c.b16 %v415, %v415
  %v432 = vpack.c.b16 %v416, %v416
  %vm449 = vcmask 125952
  %450 = vst.msk [vmem:[%s5] sm:$0xf] %vm449, %v417
  %451 = vst.msk [vmem:[%s5 + $0x4] sm:$0xf] %vm449, %v418
  %452 = vst.msk [vmem:[%s5 + $0x8] sm:$0xf] %vm449, %v419
  %453 = vst.msk [vmem:[%s5 + $0xc] sm:$0xf] %vm449, %v420
  %454 = vst.msk [vmem:[%s5 + $0x10] sm:$0xf] %vm449, %v421
  %455 = vst.msk [vmem:[%s5 + $0x14] sm:$0xf] %vm449, %v422
  %456 = vst.msk [vmem:[%s5 + $0x18] sm:$0xf] %vm449, %v423
  %457 = vst.msk [vmem:[%s5 + $0x1c] sm:$0xf] %vm449, %v424
  %458 = vst.msk [vmem:[%s5 + $0x20] sm:$0xf] %vm449, %v425
  %459 = vst.msk [vmem:[%s5 + $0x24] sm:$0xf] %vm449, %v426
  %460 = vst.msk [vmem:[%s5 + $0x28] sm:$0xf] %vm449, %v427
  %461 = vst.msk [vmem:[%s5 + $0x2c] sm:$0xf] %vm449, %v428
  %462 = vst.msk [vmem:[%s5 + $0x30] sm:$0xf] %vm449, %v429
  %463 = vst.msk [vmem:[%s5 + $0x34] sm:$0xf] %vm449, %v430
  %464 = vst.msk [vmem:[%s5 + $0x38] sm:$0xf] %vm449, %v431
  %465 = vst.msk [vmem:[%s5 + $0x3c] sm:$0xf] %vm449, %v432
  %v466 = vpack.c.bf16 %v334, %v331
  %v467 = vpack.c.bf16 %v342, %v339
  %v468 = vpack.c.bf16 %v350, %v347
  %v469 = vpack.c.bf16 %v358, %v355
  %v470 = vpack.c.bf16 %v366, %v363
  %v471 = vpack.c.bf16 %v374, %v371
  %v472 = vpack.c.bf16 %v382, %v379
  %v473 = vpack.c.bf16 %v390, %v387
  %v482 = vunpack.c.l.b16 %v466
  %v483 = vunpack.c.h.b16 %v466
  %v484 = vunpack.c.l.b16 %v467
  %v485 = vunpack.c.h.b16 %v467
  %v486 = vunpack.c.l.b16 %v468
  %v487 = vunpack.c.h.b16 %v468
  %v488 = vunpack.c.l.b16 %v469
  %v489 = vunpack.c.h.b16 %v469
  %v490 = vunpack.c.l.b16 %v470
  %v491 = vunpack.c.h.b16 %v470
  %v492 = vunpack.c.l.b16 %v471
  %v493 = vunpack.c.h.b16 %v471
  %v494 = vunpack.c.l.b16 %v472
  %v495 = vunpack.c.h.b16 %v472
  %v496 = vunpack.c.l.b16 %v473
  %v497 = vunpack.c.h.b16 %v473
  %v498 = vpack.c.b16 %v482, %v482
  %v499 = vpack.c.b16 %v483, %v483
  %v500 = vpack.c.b16 %v484, %v484
  %v501 = vpack.c.b16 %v485, %v485
  %v502 = vpack.c.b16 %v486, %v486
  %v503 = vpack.c.b16 %v487, %v487
  %v504 = vpack.c.b16 %v488, %v488
  %v505 = vpack.c.b16 %v489, %v489
  %v506 = vpack.c.b16 %v490, %v490
  %v507 = vpack.c.b16 %v491, %v491
  %v508 = vpack.c.b16 %v492, %v492
  %v509 = vpack.c.b16 %v493, %v493
  %v510 = vpack.c.b16 %v494, %v494
  %v511 = vpack.c.b16 %v495, %v495
  %v512 = vpack.c.b16 %v496, %v496
  %v513 = vpack.c.b16 %v497, %v497
  %vm530 = vcmask 257024
  %531 = vst.msk [vmem:[%s6] sm:$0xf] %vm530, %v498
  %532 = vst.msk [vmem:[%s6 + $0x4] sm:$0xf] %vm530, %v499
  %533 = vst.msk [vmem:[%s6 + $0x8] sm:$0xf] %vm530, %v500
  %534 = vst.msk [vmem:[%s6 + $0xc] sm:$0xf] %vm530, %v501
  %535 = vst.msk [vmem:[%s6 + $0x10] sm:$0xf] %vm530, %v502
  %536 = vst.msk [vmem:[%s6 + $0x14] sm:$0xf] %vm530, %v503
  %537 = vst.msk [vmem:[%s6 + $0x18] sm:$0xf] %vm530, %v504
  %538 = vst.msk [vmem:[%s6 + $0x1c] sm:$0xf] %vm530, %v505
  %539 = vst.msk [vmem:[%s6 + $0x20] sm:$0xf] %vm530, %v506
  %540 = vst.msk [vmem:[%s6 + $0x24] sm:$0xf] %vm530, %v507
  %541 = vst.msk [vmem:[%s6 + $0x28] sm:$0xf] %vm530, %v508
  %542 = vst.msk [vmem:[%s6 + $0x2c] sm:$0xf] %vm530, %v509
  %543 = vst.msk [vmem:[%s6 + $0x30] sm:$0xf] %vm530, %v510
  %544 = vst.msk [vmem:[%s6 + $0x34] sm:$0xf] %vm530, %v511
  %545 = vst.msk [vmem:[%s6 + $0x38] sm:$0xf] %vm530, %v512
  %546 = vst.msk [vmem:[%s6 + $0x3c] sm:$0xf] %vm530, %v513
  // Predicated region
  $region22: #{mask2former_forward.2} parent=0 // pred_check
    _
  $region23: #{mask2former_forward.2} parent=0 // pred_check_branch
    %548 = sbr.rel (0) target = $region25
  $region24: #{mask2former_forward.2} parent=0 // pred_region
    _
  $region25: #{mask2former_forward.2} parent=0 // pred_fallthru
    _
  // Predicated region
  $region26: #{mask2former_forward.2} parent=0 // pred_check
    _
  $region27: #{mask2former_forward.2} parent=0 // pred_check_branch
    %550 = sbr.rel (0) target = $region29
  $region28: #{mask2former_forward.2} parent=0 // pred_region
    _
  $region29: #{mask2former_forward.2} parent=0 // pred_fallthru
    _
  // Predicated region
  $region30: #{mask2former_forward.2} parent=0 // pred_check
    _
  $region31: #{mask2former_forward.2} parent=0 // pred_check_branch
    %552 = sbr.rel (0) target = $region33
  $region32: #{mask2former_forward.2} parent=0 // pred_region
    _
  $region33: #{mask2former_forward.2} parent=0 // pred_fallthru
    _
  // Predicated region
  $region34: #{mask2former_forward.2} parent=0 // pred_check
    _
  $region35: #{mask2former_forward.2} parent=0 // pred_check_branch
    %554 = sbr.rel (0) target = $region37
  $region36: #{mask2former_forward.2} parent=0 // pred_region
    _
  $region37: #{mask2former_forward.2} parent=0 // pred_fallthru
    _

// kernel: mask2former_forward.3
$region0: #{mask2former_forward.3}
  #allocation0 [shape = 'u32[]', space=smem, size = 0x4, offset = 0x4, fixed_abs, tag = 'smem constant byte address 0x4 - core index']
  #allocation1 [shape = 'u32[144,128]{1,0:T(1,128)}', space=vmem, size = 0x12000, scoped, tag = 'internal scratch']
  %s0 = inlined_call_operand.vmem [shape: bf16[32,144], index: 0, kind: input, shape index: {}]
  %s1 = inlined_call_operand.vmem [shape: bf16[128,288], index: 1, kind: input, shape index: {}]
  %s2 = inlined_call_operand.vmem [shape: bf16[128,32], index: 2, kind: input, shape index: {}]
  %s3 = inlined_call_operand.vmem [shape: f32[16,32], index: 3, kind: input, shape index: {}]
  %s4 = inlined_call_operand.vmem [shape: bf16[144,32], index: 4, kind: input, shape index: {}]
  %s5 = inlined_call_operand.vmem [shape: f32[1,32], index: 5, kind: input, shape index: {}]
  %s6 = inlined_call_operand.vmem [shape: bf16[32,32], index: 6, kind: input, shape index: {}]
  %s7 = inlined_call_operand.vmem [shape: f32[1,32], index: 7, kind: input, shape index: {}]
  %s8 = inlined_call_operand.vmem [shape: bf16[288,32], index: 8, kind: input, shape index: {}]
  %s9 = inlined_call_operand.vmem [shape: f32[1,32], index: 9, kind: input, shape index: {}]
  %s10 = inlined_call_operand.vmem [shape: f32[2,1,32], index: 10, kind: input, shape index: {}]
  %s11 = inlined_call_operand.vmem [shape: bf16[2,8,32,32], index: 11, kind: input, shape index: {}]
  %s12 = inlined_call_operand.vmem [shape: f32[2,8,1,32], index: 12, kind: input, shape index: {}]
  %s13 = inlined_call_operand.vmem [shape: bf16[2,32,64], index: 13, kind: input, shape index: {}]
  %s14 = inlined_call_operand.vmem [shape: f32[2,1,64], index: 14, kind: input, shape index: {}]
  %s15 = inlined_call_operand.vmem [shape: bf16[2,64,32], index: 15, kind: input, shape index: {}]
  %s16 = inlined_call_operand.vmem [shape: f32[2,1,32], index: 16, kind: input, shape index: {}]
  %s17 = inlined_call_operand.vmem [shape: f32[2,3,1,32], index: 17, kind: input, shape index: {}]
  %s18 = inlined_call_operand.vmem [shape: f32[2,3,1,32], index: 18, kind: input, shape index: {}]
  %s19 = inlined_call_operand.vmem [shape: bf16[32,4], index: 19, kind: input, shape index: {}]
  %s20 = inlined_call_operand.vmem [shape: f32[1,4], index: 20, kind: input, shape index: {}]
  %s21 = inlined_call_operand.vmem [shape: bf16[32,32], index: 21, kind: input, shape index: {}]
  %s22 = inlined_call_operand.vmem [shape: f32[1,32], index: 22, kind: input, shape index: {}]
  %s23 = inlined_call_operand.vmem [shape: bf16[32,32], index: 23, kind: input, shape index: {}]
  %s24 = inlined_call_operand.vmem [shape: f32[1,32], index: 24, kind: input, shape index: {}]
  %s25 = inlined_call_operand.vmem [shape: f32[16,128], index: 25, kind: output, shape index: {}]
  %s26 = sld [smem:[#allocation0]]
  $region110: #{mask2former_forward.3} parent=0
    _
  %s28 = ssub.s32 1, %s26
  %s29 = scalar_select 0, %s28, %s26
  // Predicated region
  $region2: #{mask2former_forward.3} parent=0 // pred_check
    _
  $region3: #{mask2former_forward.3} parent=0 // pred_check_branch
    %31 = sbr.rel (0) target = $region5
  $region4: #{mask2former_forward.3} parent=0 // pred_region
    _
  $region5: #{mask2former_forward.3} parent=0 // pred_fallthru
    _
  // Predicated region
  $region6: #{mask2former_forward.3} parent=0 // pred_check
    _
  $region7: #{mask2former_forward.3} parent=0 // pred_check_branch
    %33 = sbr.rel (0) target = $region9
  $region8: #{mask2former_forward.3} parent=0 // pred_region
    _
  $region9: #{mask2former_forward.3} parent=0 // pred_fallthru
    _
  // Predicated region
  $region10: #{mask2former_forward.3} parent=0 // pred_check
    _
  $region11: #{mask2former_forward.3} parent=0 // pred_check_branch
    %35 = sbr.rel (0) target = $region13
  $region12: #{mask2former_forward.3} parent=0 // pred_region
    _
  $region13: #{mask2former_forward.3} parent=0 // pred_fallthru
    _
  // Predicated region
  $region14: #{mask2former_forward.3} parent=0 // pred_check
    _
  $region15: #{mask2former_forward.3} parent=0 // pred_check_branch
    %37 = sbr.rel (0) target = $region17
  $region16: #{mask2former_forward.3} parent=0 // pred_region
    _
  $region17: #{mask2former_forward.3} parent=0 // pred_fallthru
    _
  // Predicated region
  $region18: #{mask2former_forward.3} parent=0 // pred_check
    _
  $region19: #{mask2former_forward.3} parent=0 // pred_check_branch
    %39 = sbr.rel (0) target = $region21
  $region20: #{mask2former_forward.3} parent=0 // pred_region
    _
  $region21: #{mask2former_forward.3} parent=0 // pred_fallthru
    _
  // Predicated region
  $region22: #{mask2former_forward.3} parent=0 // pred_check
    _
  $region23: #{mask2former_forward.3} parent=0 // pred_check_branch
    %41 = sbr.rel (0) target = $region25
  $region24: #{mask2former_forward.3} parent=0 // pred_region
    _
  $region25: #{mask2former_forward.3} parent=0 // pred_fallthru
    _
  // Predicated region
  $region26: #{mask2former_forward.3} parent=0 // pred_check
    _
  $region27: #{mask2former_forward.3} parent=0 // pred_check_branch
    %43 = sbr.rel (0) target = $region29
  $region28: #{mask2former_forward.3} parent=0 // pred_region
    _
  $region29: #{mask2former_forward.3} parent=0 // pred_fallthru
    _
  // Predicated region
  $region30: #{mask2former_forward.3} parent=0 // pred_check
    _
  $region31: #{mask2former_forward.3} parent=0 // pred_check_branch
    %45 = sbr.rel (0) target = $region33
  $region32: #{mask2former_forward.3} parent=0 // pred_region
    _
  $region33: #{mask2former_forward.3} parent=0 // pred_fallthru
    _
  // Predicated region
  $region34: #{mask2former_forward.3} parent=0 // pred_check
    _
  $region35: #{mask2former_forward.3} parent=0 // pred_check_branch
    %47 = sbr.rel (0) target = $region37
  $region36: #{mask2former_forward.3} parent=0 // pred_region
    _
  $region37: #{mask2former_forward.3} parent=0 // pred_fallthru
    _
  // Predicated region
  $region38: #{mask2former_forward.3} parent=0 // pred_check
    _
  $region39: #{mask2former_forward.3} parent=0 // pred_check_branch
    %49 = sbr.rel (0) target = $region41
  $region40: #{mask2former_forward.3} parent=0 // pred_region
    _
  $region41: #{mask2former_forward.3} parent=0 // pred_fallthru
    _
  // Predicated region
  $region42: #{mask2former_forward.3} parent=0 // pred_check
    _
  $region43: #{mask2former_forward.3} parent=0 // pred_check_branch
    %51 = sbr.rel (0) target = $region45
  $region44: #{mask2former_forward.3} parent=0 // pred_region
    _
  $region45: #{mask2former_forward.3} parent=0 // pred_fallthru
    _
  // Predicated region
  $region46: #{mask2former_forward.3} parent=0 // pred_check
    _
  $region47: #{mask2former_forward.3} parent=0 // pred_check_branch
    %53 = sbr.rel (0) target = $region49
  $region48: #{mask2former_forward.3} parent=0 // pred_region
    _
  $region49: #{mask2former_forward.3} parent=0 // pred_fallthru
    _
  // Predicated region
  $region50: #{mask2former_forward.3} parent=0 // pred_check
    _
  $region51: #{mask2former_forward.3} parent=0 // pred_check_branch
    %55 = sbr.rel (0) target = $region53
  $region52: #{mask2former_forward.3} parent=0 // pred_region
    _
  $region53: #{mask2former_forward.3} parent=0 // pred_fallthru
    _
  // Predicated region
  $region54: #{mask2former_forward.3} parent=0 // pred_check
    _
  $region55: #{mask2former_forward.3} parent=0 // pred_check_branch
    %57 = sbr.rel (0) target = $region57
  $region56: #{mask2former_forward.3} parent=0 // pred_region
    _
  $region57: #{mask2former_forward.3} parent=0 // pred_fallthru
    _
  // Predicated region
  $region58: #{mask2former_forward.3} parent=0 // pred_check
    _
  $region59: #{mask2former_forward.3} parent=0 // pred_check_branch
    %59 = sbr.rel (0) target = $region61
  $region60: #{mask2former_forward.3} parent=0 // pred_region
    _
  $region61: #{mask2former_forward.3} parent=0 // pred_fallthru
    _
  // Predicated region
  $region62: #{mask2former_forward.3} parent=0 // pred_check
    _
  $region63: #{mask2former_forward.3} parent=0 // pred_check_branch
    %61 = sbr.rel (0) target = $region65
  $region64: #{mask2former_forward.3} parent=0 // pred_region
    _
  $region65: #{mask2former_forward.3} parent=0 // pred_fallthru
    _
  // Predicated region
  $region66: #{mask2former_forward.3} parent=0 // pred_check
    _
  $region67: #{mask2former_forward.3} parent=0 // pred_check_branch
    %63 = sbr.rel (0) target = $region69
  $region68: #{mask2former_forward.3} parent=0 // pred_region
    _
  $region69: #{mask2former_forward.3} parent=0 // pred_fallthru
    _
  // Predicated region
  $region70: #{mask2former_forward.3} parent=0 // pred_check
    _
  $region71: #{mask2former_forward.3} parent=0 // pred_check_branch
    %65 = sbr.rel (0) target = $region73
  $region72: #{mask2former_forward.3} parent=0 // pred_region
    _
  $region73: #{mask2former_forward.3} parent=0 // pred_fallthru
    _
  // Predicated region
  $region74: #{mask2former_forward.3} parent=0 // pred_check
    _
  $region75: #{mask2former_forward.3} parent=0 // pred_check_branch
    %67 = sbr.rel (0) target = $region77
  $region76: #{mask2former_forward.3} parent=0 // pred_region
    _
  $region77: #{mask2former_forward.3} parent=0 // pred_fallthru
    _
  // Predicated region
  $region78: #{mask2former_forward.3} parent=0 // pred_check
    _
  $region79: #{mask2former_forward.3} parent=0 // pred_check_branch
    %69 = sbr.rel (0) target = $region81
  $region80: #{mask2former_forward.3} parent=0 // pred_region
    _
  $region81: #{mask2former_forward.3} parent=0 // pred_fallthru
    _
  // Predicated region
  $region82: #{mask2former_forward.3} parent=0 // pred_check
    _
  $region83: #{mask2former_forward.3} parent=0 // pred_check_branch
    %71 = sbr.rel (0) target = $region85
  $region84: #{mask2former_forward.3} parent=0 // pred_region
    _
  $region85: #{mask2former_forward.3} parent=0 // pred_fallthru
    _
  // Predicated region
  $region86: #{mask2former_forward.3} parent=0 // pred_check
    _
  $region87: #{mask2former_forward.3} parent=0 // pred_check_branch
    %73 = sbr.rel (0) target = $region89
  $region88: #{mask2former_forward.3} parent=0 // pred_region
    _
  $region89: #{mask2former_forward.3} parent=0 // pred_fallthru
    _
  // Predicated region
  $region90: #{mask2former_forward.3} parent=0 // pred_check
    _
  $region91: #{mask2former_forward.3} parent=0 // pred_check_branch
    %75 = sbr.rel (0) target = $region93
  $region92: #{mask2former_forward.3} parent=0 // pred_region
    _
  $region93: #{mask2former_forward.3} parent=0 // pred_fallthru
    _
  // Predicated region
  $region94: #{mask2former_forward.3} parent=0 // pred_check
    _
  $region95: #{mask2former_forward.3} parent=0 // pred_check_branch
    %77 = sbr.rel (0) target = $region97
  $region96: #{mask2former_forward.3} parent=0 // pred_region
    _
  $region97: #{mask2former_forward.3} parent=0 // pred_fallthru
    _
  // Predicated region
  $region98: #{mask2former_forward.3} parent=0 // pred_check
    _
  $region99: #{mask2former_forward.3} parent=0 // pred_check_branch
    %79 = sbr.rel (0) target = $region101
  $region100: #{mask2former_forward.3} parent=0 // pred_region
    _
  $region101: #{mask2former_forward.3} parent=0 // pred_fallthru
    _
  %v81 = vld [vmem:[%s0] sm:$0xff]
  %v82 = vld [vmem:[%s0 + $0x8] sm:$0xff]
  %v83 = vld [vmem:[%s0 + $0x10] sm:$0xff]
  %v84 = vld [vmem:[%s0 + $0x18] sm:$0xff]
  %v85 = vld [vmem:[%s4] sm:$0xf]
  %v86 = vld [vmem:[%s4 + $0x4] sm:$0xf]
  %v87 = vld [vmem:[%s4 + $0x8] sm:$0xf]
  %v88 = vld [vmem:[%s4 + $0xc] sm:$0xf]
  %v89 = vld [vmem:[%s4 + $0x10] sm:$0xf]
  %v90 = vld [vmem:[%s4 + $0x14] sm:$0xf]
  %v91 = vld [vmem:[%s4 + $0x18] sm:$0xf]
  %v92 = vld [vmem:[%s4 + $0x1c] sm:$0xf]
  %v93 = vld [vmem:[%s4 + $0x20] sm:$0xf]
  %v94 = vld [vmem:[%s4 + $0x24] sm:$0xf]
  %v95 = vld [vmem:[%s4 + $0x28] sm:$0xf]
  %v96 = vld [vmem:[%s4 + $0x2c] sm:$0xf]
  %v97 = vld [vmem:[%s4 + $0x30] sm:$0xf]
  %v98 = vld [vmem:[%s4 + $0x34] sm:$0xf]
  %v99 = vld [vmem:[%s4 + $0x38] sm:$0xf]
  %v100 = vld [vmem:[%s4 + $0x3c] sm:$0xf]
  %v101 = vld [vmem:[%s4 + $0x40] sm:$0xf]
  %v102 = vld [vmem:[%s4 + $0x44] sm:$0xf]
  %v103 = vld [vmem:[%s5] sm:$0x1]
  %v105 = vlaneseq
  %v106 = vshrl.u32 %v105, 7
  %v107 = vsub.s32 0, %v106
  %v108 = vrot.slane %v103, %v107
  %v114 = vunpack.c.l.b16 %v81
  %v115 = vunpack.c.h.b16 %v81
  %v116 = vunpack.c.l.b16 %v82
  %v117 = vunpack.c.h.b16 %v82
  %v118 = vunpack.c.l.b16 %v83
  %v119 = vunpack.c.h.b16 %v83
  %v120 = vunpack.c.l.b16 %v84
  %v121 = vunpack.c.h.b16 %v84
  %v122 = vpack.c.b16 %v116, %v114
  %v123 = vpack.c.b16 %v117, %v115
  %v124 = vpack.c.b16 %v120, %v118
  %v125 = vpack.c.b16 %v121, %v119
  %v146 = vunpack.c.l.b16 %v85
  %v147 = vunpack.c.l.b16 %v86
  %v148 = vunpack.c.l.b16 %v87
  %v149 = vunpack.c.l.b16 %v88
  %v150 = vunpack.c.l.b16 %v89
  %v151 = vunpack.c.l.b16 %v90
  %v152 = vunpack.c.l.b16 %v91
  %v153 = vunpack.c.l.b16 %v92
  %v154 = vunpack.c.l.b16 %v93
  %v155 = vunpack.c.l.b16 %v94
  %v156 = vunpack.c.l.b16 %v95
  %v157 = vunpack.c.l.b16 %v96
  %v158 = vunpack.c.l.b16 %v97
  %v159 = vunpack.c.l.b16 %v98
  %v160 = vunpack.c.l.b16 %v99
  %v161 = vunpack.c.l.b16 %v100
  %v162 = vunpack.c.l.b16 %v101
  %v163 = vunpack.c.l.b16 %v102
  %v164 = vpack.c.b16 %v147, %v146
  %v165 = vpack.c.b16 %v149, %v148
  %v166 = vpack.c.b16 %v151, %v150
  %v167 = vpack.c.b16 %v153, %v152
  %v168 = vpack.c.b16 %v155, %v154
  %v169 = vpack.c.b16 %v157, %v156
  %v170 = vpack.c.b16 %v159, %v158
  %v171 = vpack.c.b16 %v161, %v160
  %v172 = vpack.c.b16 %v163, %v162
  %vm182 = vcmask 130048
  %v184 = vsel %vm182, %v123, 0
  %v187 = vsel %vm182, %v125, 0
  %189 = vmatprep.subr.bf16.mxu0 0
  %190 = vmatpush1.bf16.msra.mxu0 %v171
  %191 = vmatprep.subr.bf16.mxu0 0
  %192 = vmatpush1.bf16.msra.mxu0 %v170
  %193 = vmatprep.subr.bf16.mxu0 0
  %194 = vmatpush1.bf16.msra.mxu0 %v169
  %195 = vmatprep.subr.bf16.mxu0 0
  %196 = vmatpush1.bf16.msra.mxu0 %v168
  %197 = vmatprep.subr.bf16.mxu0 0
  %198 = vmatpush1.bf16.msra.mxu0 %v167
  %199 = vmatprep.subr.bf16.mxu0 0
  %200 = vmatpush1.bf16.msra.mxu0 %v166
  %201 = vmatprep.subr.bf16.mxu0 0
  %202 = vmatpush1.bf16.msra.mxu0 %v165
  %203 = vmatprep.subr.bf16.mxu0 0
  %204 = vmatpush1.bf16.msra.mxu0 %v164
  %205 = vmatprep.subr.bf16.mxu0 0
  %206 = vmatpush2.bf16.msra.mxu0 0
  %207 = vmatprep.subr.bf16.mxu0 0
  %208 = vmatpush2.bf16.msra.mxu0 0
  %209 = vmatprep.subr.bf16.mxu0 0
  %210 = vmatpush2.bf16.msra.mxu0 0
  %211 = vmatprep.subr.bf16.mxu0 0
  %212 = vmatpush2.bf16.msra.mxu0 0
  %213 = vmatprep.subr.bf16.mxu0 0
  %214 = vmatpush2.bf16.msra.mxu0 0
  %215 = vmatprep.subr.bf16.mxu0 0
  %216 = vmatpush2.bf16.msra.mxu0 0
  %217 = vmatprep.subr.bf16.mxu0 0
  %218 = vmatpush2.bf16.msra.mxu0 0
  %219 = vmatprep.subr.bf16.mxu0 0
  %220 = vmatpush2.bf16.msra.mxu0 %v172
  %221 = vmatprep.mubr.bf16.mxu0 %v184
  %222 = vmatmul.mubr.bf16.gmra.mxu0 %v122
  %v223 = vpop.f32.mrf.mxu0
  %v224 = vadd.f32 %v108, %v223
  %v225 = vpop.f32.mrf.mxu0
  %v226 = vpop.f32.mrf.mxu0
  %v227 = vadd.f32 %v108, %v226
  %v228 = vpop.f32.mrf.mxu0
  %229 = vmatprep.mubr.bf16.mxu0 %v187
  %230 = vmatmul.mubr.bf16.gmra.mxu0 %v124
  %v231 = vpop.f32.mrf.mxu0
  %v232 = vadd.f32 %v108, %v231
  %v233 = vpop.f32.mrf.mxu0
  %v234 = vpop.f32.mrf.mxu0
  %v235 = vadd.f32 %v108, %v234
  %v236 = vpop.f32.mrf.mxu0
  %237 = vdwg.mxu0
  %v238 = vmax.f32 %v224, 0.0
  %v239 = vmax.f32 %v227, 0.0
  %v240 = vmax.f32 %v232, 0.0
  %v241 = vmax.f32 %v235, 0.0
  %v242 = vld [vmem:[%s6] sm:$0xf]
  %v243 = vld [vmem:[%s6 + $0x4] sm:$0xf]
  %v244 = vld [vmem:[%s6 + $0x8] sm:$0xf]
  %v245 = vld [vmem:[%s6 + $0xc] sm:$0xf]
  %v246 = vld [vmem:[%s7] sm:$0x1]
  %v247 = vpack.c.bf16 %v239, %v238
  %v248 = vpack.c.bf16 %v241, %v240
  %v250 = vlaneseq
  %v251 = vshrl.u32 %v250, 7
  %v252 = vsub.s32 0, %v251
  %v253 = vrot.slane %v246, %v252
  %v259 = vunpack.c.l.b16 %v242
  %v260 = vunpack.c.l.b16 %v243
  %v261 = vunpack.c.l.b16 %v244
  %v262 = vunpack.c.l.b16 %v245
  %v263 = vpack.c.b16 %v260, %v259
  %v264 = vpack.c.b16 %v262, %v261
  %vm267 = vcmask 261120
  %v269 = vsel %vm267, %v247, 0
  %v272 = vsel %vm267, %v248, 0
  %274 = vmatprep.subr.bf16.mxu0 0
  %275 = vmatpush1.bf16.msra.mxu0 0
  %276 = vmatprep.subr.bf16.mxu0 0
  %277 = vmatpush1.bf16.msra.mxu0 0
  %278 = vmatprep.subr.bf16.mxu0 0
  %279 = vmatpush1.bf16.msra.mxu0 0
  %280 = vmatprep.subr.bf16.mxu0 0
  %281 = vmatpush1.bf16.msra.mxu0 0
  %282 = vmatprep.subr.bf16.mxu0 0
  %283 = vmatpush1.bf16.msra.mxu0 0
  %284 = vmatprep.subr.bf16.mxu0 0
  %285 = vmatpush1.bf16.msra.mxu0 0
  %286 = vmatprep.subr.bf16.mxu0 0
  %287 = vmatpush1.bf16.msra.mxu0 %v264
  %288 = vmatprep.subr.bf16.mxu0 0
  %289 = vmatpush1.bf16.msra.mxu0 %v263
  %290 = vmatprep.subr.bf16.mxu0 0
  %291 = vmatpush2.bf16.msra.mxu0 0
  %292 = vmatprep.subr.bf16.mxu0 0
  %293 = vmatpush2.bf16.msra.mxu0 0
  %294 = vmatprep.subr.bf16.mxu0 0
  %295 = vmatpush2.bf16.msra.mxu0 0
  %296 = vmatprep.subr.bf16.mxu0 0
  %297 = vmatpush2.bf16.msra.mxu0 0
  %298 = vmatprep.subr.bf16.mxu0 0
  %299 = vmatpush2.bf16.msra.mxu0 0
  %300 = vmatprep.subr.bf16.mxu0 0
  %301 = vmatpush2.bf16.msra.mxu0 0
  %302 = vmatprep.subr.bf16.mxu0 0
  %303 = vmatpush2.bf16.msra.mxu0 0
  %304 = vmatprep.subr.bf16.mxu0 0
  %305 = vmatpush2.bf16.msra.mxu0 0
  %306 = vmatprep.mubr.bf16.mxu0 0
  %307 = vmatmul.mubr.bf16.gmra.mxu0 %v269
  %v308 = vpop.f32.mrf.mxu0
  %v309 = vadd.f32 %v253, %v308
  %v310 = vpop.f32.mrf.mxu0
  %v311 = vpop.f32.mrf.mxu0
  %v312 = vadd.f32 %v253, %v311
  %v313 = vpop.f32.mrf.mxu0
  %314 = vmatprep.mubr.bf16.mxu0 0
  %315 = vmatmul.mubr.bf16.gmra.mxu0 %v272
  %v316 = vpop.f32.mrf.mxu0
  %v317 = vadd.f32 %v253, %v316
  %v318 = vpop.f32.mrf.mxu0
  %v319 = vpop.f32.mrf.mxu0
  %v320 = vadd.f32 %v253, %v319
  %v321 = vpop.f32.mrf.mxu0
  %322 = vdwg.mxu0
  %v323 = vld [vmem:[%s1] sm:$0xff]
  %v324 = vld [vmem:[%s1 + $0x8] sm:$0xf]
  %v325 = vld [vmem:[%s1 + $0xc] sm:$0xff]
  %v326 = vld [vmem:[%s1 + $0x14] sm:$0xf]
  %v327 = vld [vmem:[%s1 + $0x18] sm:$0xff]
  %v328 = vld [vmem:[%s1 + $0x20] sm:$0xf]
  %v329 = vld [vmem:[%s1 + $0x24] sm:$0xff]
  %v330 = vld [vmem:[%s1 + $0x2c] sm:$0xf]
  %v331 = vld [vmem:[%s1 + $0x30] sm:$0xff]
  %v332 = vld [vmem:[%s1 + $0x38] sm:$0xf]
  %v333 = vld [vmem:[%s1 + $0x3c] sm:$0xff]
  %v334 = vld [vmem:[%s1 + $0x44] sm:$0xf]
  %v335 = vld [vmem:[%s1 + $0x48] sm:$0xff]
  %v336 = vld [vmem:[%s1 + $0x50] sm:$0xf]
  %v337 = vld [vmem:[%s1 + $0x54] sm:$0xff]
  %v338 = vld [vmem:[%s1 + $0x5c] sm:$0xf]
  %v339 = vld [vmem:[%s1 + $0x60] sm:$0xff]
  %v340 = vld [vmem:[%s1 + $0x68] sm:$0xf]
  %v341 = vld [vmem:[%s1 + $0x6c] sm:$0xff]
  %v342 = vld [vmem:[%s1 + $0x74] sm:$0xf]
  %v343 = vld [vmem:[%s1 + $0x78] sm:$0xff]
  %v344 = vld [vmem:[%s1 + $0x80] sm:$0xf]
  %v345 = vld [vmem:[%s1 + $0x84] sm:$0xff]
  %v346 = vld [vmem:[%s1 + $0x8c] sm:$0xf]
  %v347 = vld [vmem:[%s1 + $0x90] sm:$0xff]
  %v348 = vld [vmem:[%s1 + $0x98] sm:$0xf]
  %v349 = vld [vmem:[%s1 + $0x9c] sm:$0xff]
  %v350 = vld [vmem:[%s1 + $0xa4] sm:$0xf]
  %v351 = vld [vmem:[%s1 + $0xa8] sm:$0xff]
  %v352 = vld [vmem:[%s1 + $0xb0] sm:$0xf]
  %v353 = vld [vmem:[%s1 + $0xb4] sm:$0xff]
  %v354 = vld [vmem:[%s1 + $0xbc] sm:$0xf]
  %v355 = vld [vmem:[%s8] sm:$0xf]
  %v356 = vld [vmem:[%s8 + $0x4] sm:$0xf]
  %v357 = vld [vmem:[%s8 + $0x8] sm:$0xf]
  %v358 = vld [vmem:[%s8 + $0xc] sm:$0xf]
  %v359 = vld [vmem:[%s8 + $0x10] sm:$0xf]
  %v360 = vld [vmem:[%s8 + $0x14] sm:$0xf]
  %v361 = vld [vmem:[%s8 + $0x18] sm:$0xf]
  %v362 = vld [vmem:[%s8 + $0x1c] sm:$0xf]
  %v363 = vld [vmem:[%s8 + $0x20] sm:$0xf]
  %v364 = vld [vmem:[%s8 + $0x24] sm:$0xf]
  %v365 = vld [vmem:[%s8 + $0x28] sm:$0xf]
  %v366 = vld [vmem:[%s8 + $0x2c] sm:$0xf]
  %v367 = vld [vmem:[%s8 + $0x30] sm:$0xf]
  %v368 = vld [vmem:[%s8 + $0x34] sm:$0xf]
  %v369 = vld [vmem:[%s8 + $0x38] sm:$0xf]
  %v370 = vld [vmem:[%s8 + $0x3c] sm:$0xf]
  %v371 = vld [vmem:[%s8 + $0x40] sm:$0xf]
  %v372 = vld [vmem:[%s8 + $0x44] sm:$0xf]
  %v373 = vld [vmem:[%s8 + $0x48] sm:$0xf]
  %v374 = vld [vmem:[%s8 + $0x4c] sm:$0xf]
  %v375 = vld [vmem:[%s8 + $0x50] sm:$0xf]
  %v376 = vld [vmem:[%s8 + $0x54] sm:$0xf]
  %v377 = vld [vmem:[%s8 + $0x58] sm:$0xf]
  %v378 = vld [vmem:[%s8 + $0x5c] sm:$0xf]
  %v379 = vld [vmem:[%s8 + $0x60] sm:$0xf]
  %v380 = vld [vmem:[%s8 + $0x64] sm:$0xf]
  %v381 = vld [vmem:[%s8 + $0x68] sm:$0xf]
  %v382 = vld [vmem:[%s8 + $0x6c] sm:$0xf]
  %v383 = vld [vmem:[%s8 + $0x70] sm:$0xf]
  %v384 = vld [vmem:[%s8 + $0x74] sm:$0xf]
  %v385 = vld [vmem:[%s8 + $0x78] sm:$0xf]
  %v386 = vld [vmem:[%s8 + $0x7c] sm:$0xf]
  %v387 = vld [vmem:[%s8 + $0x80] sm:$0xf]
  %v388 = vld [vmem:[%s8 + $0x84] sm:$0xf]
  %v389 = vld [vmem:[%s8 + $0x88] sm:$0xf]
  %v390 = vld [vmem:[%s8 + $0x8c] sm:$0xf]
  %v391 = vld [vmem:[%s9] sm:$0x1]
  %v393 = vlaneseq
  %v394 = vshrl.u32 %v393, 7
  %v395 = vsub.s32 0, %v394
  %v396 = vrot.slane %v391, %v395
  %v430 = vunpack.c.l.b16 %v323
  %v431 = vunpack.c.h.b16 %v323
  %v432 = vunpack.c.l.b16 %v324
  %v433 = vunpack.c.l.b16 %v325
  %v434 = vunpack.c.h.b16 %v325
  %v435 = vunpack.c.l.b16 %v326
  %v436 = vunpack.c.l.b16 %v327
  %v437 = vunpack.c.h.b16 %v327
  %v438 = vunpack.c.l.b16 %v328
  %v439 = vunpack.c.l.b16 %v329
  %v440 = vunpack.c.h.b16 %v329
  %v441 = vunpack.c.l.b16 %v330
  %v442 = vunpack.c.l.b16 %v331
  %v443 = vunpack.c.h.b16 %v331
  %v444 = vunpack.c.l.b16 %v332
  %v445 = vunpack.c.l.b16 %v333
  %v446 = vunpack.c.h.b16 %v333
  %v447 = vunpack.c.l.b16 %v334
  %v448 = vunpack.c.l.b16 %v335
  %v449 = vunpack.c.h.b16 %v335
  %v450 = vunpack.c.l.b16 %v336
  %v451 = vunpack.c.l.b16 %v337
  %v452 = vunpack.c.h.b16 %v337
  %v453 = vunpack.c.l.b16 %v338
  %v454 = vunpack.c.l.b16 %v339
  %v455 = vunpack.c.h.b16 %v339
  %v456 = vunpack.c.l.b16 %v340
  %v457 = vunpack.c.l.b16 %v341
  %v458 = vunpack.c.h.b16 %v341
  %v459 = vunpack.c.l.b16 %v342
  %v460 = vunpack.c.l.b16 %v343
  %v461 = vunpack.c.h.b16 %v343
  %v462 = vunpack.c.l.b16 %v344
  %v463 = vunpack.c.l.b16 %v345
  %v464 = vunpack.c.h.b16 %v345
  %v465 = vunpack.c.l.b16 %v346
  %v466 = vunpack.c.l.b16 %v347
  %v467 = vunpack.c.h.b16 %v347
  %v468 = vunpack.c.l.b16 %v348
  %v469 = vunpack.c.l.b16 %v349
  %v470 = vunpack.c.h.b16 %v349
  %v471 = vunpack.c.l.b16 %v350
  %v472 = vunpack.c.l.b16 %v351
  %v473 = vunpack.c.h.b16 %v351
  %v474 = vunpack.c.l.b16 %v352
  %v475 = vunpack.c.l.b16 %v353
  %v476 = vunpack.c.h.b16 %v353
  %v477 = vunpack.c.l.b16 %v354
  %v478 = vpack.c.b16 %v433, %v430
  %v479 = vpack.c.b16 %v434, %v431
  %v480 = vpack.c.b16 %v435, %v432
  %v481 = vpack.c.b16 %v439, %v436
  %v482 = vpack.c.b16 %v440, %v437
  %v483 = vpack.c.b16 %v441, %v438
  %v484 = vpack.c.b16 %v445, %v442
  %v485 = vpack.c.b16 %v446, %v443
  %v486 = vpack.c.b16 %v447, %v444
  %v487 = vpack.c.b16 %v451, %v448
  %v488 = vpack.c.b16 %v452, %v449
  %v489 = vpack.c.b16 %v453, %v450
  %v490 = vpack.c.b16 %v457, %v454
  %v491 = vpack.c.b16 %v458, %v455
  %v492 = vpack.c.b16 %v459, %v456
  %v493 = vpack.c.b16 %v463, %v460
  %v494 = vpack.c.b16 %v464, %v461
  %v495 = vpack.c.b16 %v465, %v462
  %v496 = vpack.c.b16 %v469, %v466
  %v497 = vpack.c.b16 %v470, %v467
  %v498 = vpack.c.b16 %v471, %v468
  %v499 = vpack.c.b16 %v475, %v472
  %v500 = vpack.c.b16 %v476, %v473
  %v501 = vpack.c.b16 %v477, %v474
  %v554 = vunpack.c.l.b16 %v355
  %v555 = vunpack.c.l.b16 %v356
  %v556 = vunpack.c.l.b16 %v357
  %v557 = vunpack.c.l.b16 %v358
  %v558 = vunpack.c.l.b16 %v359
  %v559 = vunpack.c.l.b16 %v360
  %v560 = vunpack.c.l.b16 %v361
  %v561 = vunpack.c.l.b16 %v362
  %v562 = vunpack.c.l.b16 %v363
  %v563 = vunpack.c.l.b16 %v364
  %v564 = vunpack.c.l.b16 %v365
  %v565 = vunpack.c.l.b16 %v366
  %v566 = vunpack.c.l.b16 %v367
  %v567 = vunpack.c.l.b16 %v368
  %v568 = vunpack.c.l.b16 %v369
  %v569 = vunpack.c.l.b16 %v370
  %v570 = vunpack.c.l.b16 %v371
  %v571 = vunpack.c.l.b16 %v372
  %v572 = vunpack.c.l.b16 %v373
  %v573 = vunpack.c.l.b16 %v374
  %v574 = vunpack.c.l.b16 %v375
  %v575 = vunpack.c.l.b16 %v376
  %v576 = vunpack.c.l.b16 %v377
  %v577 = vunpack.c.l.b16 %v378
  %v578 = vunpack.c.l.b16 %v379
  %v579 = vunpack.c.l.b16 %v380
  %v580 = vunpack.c.l.b16 %v381
  %v581 = vunpack.c.l.b16 %v382
  %v582 = vunpack.c.l.b16 %v383
  %v583 = vunpack.c.l.b16 %v384
  %v584 = vunpack.c.l.b16 %v385
  %v585 = vunpack.c.l.b16 %v386
  %v586 = vunpack.c.l.b16 %v387
  %v587 = vunpack.c.l.b16 %v388
  %v588 = vunpack.c.l.b16 %v389
  %v589 = vunpack.c.l.b16 %v390
  %v590 = vpack.c.b16 %v555, %v554
  %v591 = vpack.c.b16 %v557, %v556
  %v592 = vpack.c.b16 %v559, %v558
  %v593 = vpack.c.b16 %v561, %v560
  %v594 = vpack.c.b16 %v563, %v562
  %v595 = vpack.c.b16 %v565, %v564
  %v596 = vpack.c.b16 %v567, %v566
  %v597 = vpack.c.b16 %v569, %v568
  %v598 = vpack.c.b16 %v571, %v570
  %v599 = vpack.c.b16 %v573, %v572
  %v600 = vpack.c.b16 %v575, %v574
  %v601 = vpack.c.b16 %v577, %v576
  %v602 = vpack.c.b16 %v579, %v578
  %v603 = vpack.c.b16 %v581, %v580
  %v604 = vpack.c.b16 %v583, %v582
  %v605 = vpack.c.b16 %v585, %v584
  %v606 = vpack.c.b16 %v587, %v586
  %v607 = vpack.c.b16 %v589, %v588
  %v627 = vsel %vm267, %v480, 0
  %v630 = vsel %vm267, %v483, 0
  %v633 = vsel %vm267, %v486, 0
  %v636 = vsel %vm267, %v489, 0
  %v639 = vsel %vm267, %v492, 0
  %v642 = vsel %vm267, %v495, 0
  %v645 = vsel %vm267, %v498, 0
  %v648 = vsel %vm267, %v501, 0
  %650 = vmatprep.subr.bf16.mxu0 0
  %651 = vmatpush1.bf16.msra.mxu0 %v597
  %652 = vmatprep.subr.bf16.mxu0 0
  %653 = vmatpush1.bf16.msra.mxu0 %v596
  %654 = vmatprep.subr.bf16.mxu0 0
  %655 = vmatpush1.bf16.msra.mxu0 %v595
  %656 = vmatprep.subr.bf16.mxu0 0
  %657 = vmatpush1.bf16.msra.mxu0 %v594
  %658 = vmatprep.subr.bf16.mxu0 0
  %659 = vmatpush1.bf16.msra.mxu0 %v593
  %660 = vmatprep.subr.bf16.mxu0 0
  %661 = vmatpush1.bf16.msra.mxu0 %v592
  %662 = vmatprep.subr.bf16.mxu0 0
  %663 = vmatpush1.bf16.msra.mxu0 %v591
  %664 = vmatprep.subr.bf16.mxu0 0
  %665 = vmatpush1.bf16.msra.mxu0 %v590
  %666 = vmatprep.subr.bf16.mxu0 0
  %667 = vmatpush2.bf16.msra.mxu0 %v605
  %668 = vmatprep.subr.bf16.mxu0 0
  %669 = vmatpush2.bf16.msra.mxu0 %v604
  %670 = vmatprep.subr.bf16.mxu0 0
  %671 = vmatpush2.bf16.msra.mxu0 %v603
  %672 = vmatprep.subr.bf16.mxu0 0
  %673 = vmatpush2.bf16.msra.mxu0 %v602
  %674 = vmatprep.subr.bf16.mxu0 0
  %675 = vmatpush2.bf16.msra.mxu0 %v601
  %676 = vmatprep.subr.bf16.mxu0 0
  %677 = vmatpush2.bf16.msra.mxu0 %v600
  %678 = vmatprep.subr.bf16.mxu0 0
  %679 = vmatpush2.bf16.msra.mxu0 %v599
  %680 = vmatprep.subr.bf16.mxu0 0
  %681 = vmatpush2.bf16.msra.mxu0 %v598
  %682 = vmatprep.mubr.bf16.mxu0 %v479
  %683 = vmatmul.mubr.bf16.gmra.mxu0 %v478
  %v684 = vpop.f32.mrf.mxu0
  %v685 = vadd.f32 %v396, %v684
  %v686 = vpop.f32.mrf.mxu0
  %v687 = vpop.f32.mrf.mxu0
  %v688 = vadd.f32 %v396, %v687
  %v689 = vpop.f32.mrf.mxu0
  %690 = vmatprep.mubr.bf16.mxu0 %v482
  %691 = vmatmul.mubr.bf16.gmra.mxu0 %v481
  %v692 = vpop.f32.mrf.mxu0
  %v693 = vadd.f32 %v396, %v692
  %v694 = vpop.f32.mrf.mxu0
  %v695 = vpop.f32.mrf.mxu0
  %v696 = vadd.f32 %v396, %v695
  %v697 = vpop.f32.mrf.mxu0
  %698 = vmatprep.mubr.bf16.mxu0 %v485
  %699 = vmatmul.mubr.bf16.gmra.mxu0 %v484
  %v700 = vpop.f32.mrf.mxu0
  %v701 = vadd.f32 %v396, %v700
  %v702 = vpop.f32.mrf.mxu0
  %v703 = vpop.f32.mrf.mxu0
  %v704 = vadd.f32 %v396, %v703
  %v705 = vpop.f32.mrf.mxu0
  %706 = vmatprep.mubr.bf16.mxu0 %v488
  %707 = vmatmul.mubr.bf16.gmra.mxu0 %v487
  %v708 = vpop.f32.mrf.mxu0
  %v709 = vadd.f32 %v396, %v708
  %v710 = vpop.f32.mrf.mxu0
  %v711 = vpop.f32.mrf.mxu0
  %v712 = vadd.f32 %v396, %v711
  %v713 = vpop.f32.mrf.mxu0
  %714 = vmatprep.mubr.bf16.mxu0 %v491
  %715 = vmatmul.mubr.bf16.gmra.mxu0 %v490
  %v716 = vpop.f32.mrf.mxu0
  %v717 = vadd.f32 %v396, %v716
  %v718 = vpop.f32.mrf.mxu0
  %v719 = vpop.f32.mrf.mxu0
  %v720 = vadd.f32 %v396, %v719
  %v721 = vpop.f32.mrf.mxu0
  %722 = vmatprep.mubr.bf16.mxu0 %v494
  %723 = vmatmul.mubr.bf16.gmra.mxu0 %v493
  %v724 = vpop.f32.mrf.mxu0
  %v725 = vadd.f32 %v396, %v724
  %v726 = vpop.f32.mrf.mxu0
  %v727 = vpop.f32.mrf.mxu0
  %v728 = vadd.f32 %v396, %v727
  %v729 = vpop.f32.mrf.mxu0
  %730 = vmatprep.mubr.bf16.mxu0 %v497
  %731 = vmatmul.mubr.bf16.gmra.mxu0 %v496
  %v732 = vpop.f32.mrf.mxu0
  %v733 = vadd.f32 %v396, %v732
  %v734 = vpop.f32.mrf.mxu0
  %v735 = vpop.f32.mrf.mxu0
  %v736 = vadd.f32 %v396, %v735
  %v737 = vpop.f32.mrf.mxu0
  %738 = vmatprep.mubr.bf16.mxu0 %v500
  %739 = vmatmul.mubr.bf16.gmra.mxu0 %v499
  %v740 = vpop.f32.mrf.mxu0
  %v741 = vadd.f32 %v396, %v740
  %v742 = vpop.f32.mrf.mxu0
  %v743 = vpop.f32.mrf.mxu0
  %v744 = vadd.f32 %v396, %v743
  %v745 = vpop.f32.mrf.mxu0
  %746 = vdwg.mxu0
  %747 = vmatprep.subr.bf16.mxu0 0
  %748 = vmatpush1.bf16.msra.mxu0 0
  %749 = vmatprep.subr.bf16.mxu0 0
  %750 = vmatpush1.bf16.msra.mxu0 0
  %751 = vmatprep.subr.bf16.mxu0 0
  %752 = vmatpush1.bf16.msra.mxu0 0
  %753 = vmatprep.subr.bf16.mxu0 0
  %754 = vmatpush1.bf16.msra.mxu0 0
  %755 = vmatprep.subr.bf16.mxu0 0
  %756 = vmatpush1.bf16.msra.mxu0 0
  %757 = vmatprep.subr.bf16.mxu0 0
  %758 = vmatpush1.bf16.msra.mxu0 0
  %759 = vmatprep.subr.bf16.mxu0 0
  %760 = vmatpush1.bf16.msra.mxu0 %v607
  %761 = vmatprep.subr.bf16.mxu0 0
  %762 = vmatpush1.bf16.msra.mxu0 %v606
  %763 = vmatprep.subr.bf16.mxu0 0
  %764 = vmatpush2.bf16.msra.mxu0 0
  %765 = vmatprep.subr.bf16.mxu0 0
  %766 = vmatpush2.bf16.msra.mxu0 0
  %767 = vmatprep.subr.bf16.mxu0 0
  %768 = vmatpush2.bf16.msra.mxu0 0
  %769 = vmatprep.subr.bf16.mxu0 0
  %770 = vmatpush2.bf16.msra.mxu0 0
  %771 = vmatprep.subr.bf16.mxu0 0
  %772 = vmatpush2.bf16.msra.mxu0 0
  %773 = vmatprep.subr.bf16.mxu0 0
  %774 = vmatpush2.bf16.msra.mxu0 0
  %775 = vmatprep.subr.bf16.mxu0 0
  %776 = vmatpush2.bf16.msra.mxu0 0
  %777 = vmatprep.subr.bf16.mxu0 0
  %778 = vmatpush2.bf16.msra.mxu0 0
  %779 = vmatprep.mubr.bf16.mxu0 0
  %780 = vmatmul.mubr.bf16.gmra.mxu0 %v627
  %v781 = vpop.f32.mrf.mxu0
  %v782 = vadd.f32 %v685, %v781
  %v783 = vpop.f32.mrf.mxu0
  %v784 = vpop.f32.mrf.mxu0
  %v785 = vadd.f32 %v688, %v784
  %v786 = vpop.f32.mrf.mxu0
  %787 = vmatprep.mubr.bf16.mxu0 0
  %788 = vmatmul.mubr.bf16.gmra.mxu0 %v630
  %v789 = vpop.f32.mrf.mxu0
  %v790 = vadd.f32 %v693, %v789
  %v791 = vpop.f32.mrf.mxu0
  %v792 = vpop.f32.mrf.mxu0
  %v793 = vadd.f32 %v696, %v792
  %v794 = vpop.f32.mrf.mxu0
  %795 = vmatprep.mubr.bf16.mxu0 0
  %796 = vmatmul.mubr.bf16.gmra.mxu0 %v633
  %v797 = vpop.f32.mrf.mxu0
  %v798 = vadd.f32 %v701, %v797
  %v799 = vpop.f32.mrf.mxu0
  %v800 = vpop.f32.mrf.mxu0
  %v801 = vadd.f32 %v704, %v800
  %v802 = vpop.f32.mrf.mxu0
  %803 = vmatprep.mubr.bf16.mxu0 0
  %804 = vmatmul.mubr.bf16.gmra.mxu0 %v636
  %v805 = vpop.f32.mrf.mxu0
  %v806 = vadd.f32 %v709, %v805
  %v807 = vpop.f32.mrf.mxu0
  %v808 = vpop.f32.mrf.mxu0
  %v809 = vadd.f32 %v712, %v808
  %v810 = vpop.f32.mrf.mxu0
  %811 = vmatprep.mubr.bf16.mxu0 0
  %812 = vmatmul.mubr.bf16.gmra.mxu0 %v639
  %v813 = vpop.f32.mrf.mxu0
  %v814 = vadd.f32 %v717, %v813
  %v815 = vpop.f32.mrf.mxu0
  %v816 = vpop.f32.mrf.mxu0
  %v817 = vadd.f32 %v720, %v816
  %v818 = vpop.f32.mrf.mxu0
  %819 = vmatprep.mubr.bf16.mxu0 0
  %820 = vmatmul.mubr.bf16.gmra.mxu0 %v642
  %v821 = vpop.f32.mrf.mxu0
  %v822 = vadd.f32 %v725, %v821
  %v823 = vpop.f32.mrf.mxu0
  %v824 = vpop.f32.mrf.mxu0
  %v825 = vadd.f32 %v728, %v824
  %v826 = vpop.f32.mrf.mxu0
  %827 = vmatprep.mubr.bf16.mxu0 0
  %828 = vmatmul.mubr.bf16.gmra.mxu0 %v645
  %v829 = vpop.f32.mrf.mxu0
  %v830 = vadd.f32 %v733, %v829
  %v831 = vpop.f32.mrf.mxu0
  %v832 = vpop.f32.mrf.mxu0
  %v833 = vadd.f32 %v736, %v832
  %v834 = vpop.f32.mrf.mxu0
  %835 = vmatprep.mubr.bf16.mxu0 0
  %836 = vmatmul.mubr.bf16.gmra.mxu0 %v648
  %v837 = vpop.f32.mrf.mxu0
  %v838 = vadd.f32 %v741, %v837
  %v839 = vpop.f32.mrf.mxu0
  %v840 = vpop.f32.mrf.mxu0
  %v841 = vadd.f32 %v744, %v840
  %v842 = vpop.f32.mrf.mxu0
  %843 = vdwg.mxu0
  %v844 = vmax.f32 %v782, 0.0
  %v845 = vmax.f32 %v785, 0.0
  %v846 = vmax.f32 %v790, 0.0
  %v847 = vmax.f32 %v793, 0.0
  %v848 = vmax.f32 %v798, 0.0
  %v849 = vmax.f32 %v801, 0.0
  %v850 = vmax.f32 %v806, 0.0
  %v851 = vmax.f32 %v809, 0.0
  %v852 = vmax.f32 %v814, 0.0
  %v853 = vmax.f32 %v817, 0.0
  %v854 = vmax.f32 %v822, 0.0
  %v855 = vmax.f32 %v825, 0.0
  %v856 = vmax.f32 %v830, 0.0
  %v857 = vmax.f32 %v833, 0.0
  %v858 = vmax.f32 %v838, 0.0
  %v859 = vmax.f32 %v841, 0.0
  %v860 = vld [vmem:[%s2] sm:$0xf]
  %v861 = vld [vmem:[%s2 + $0x4] sm:$0xf]
  %v862 = vld [vmem:[%s2 + $0x8] sm:$0xf]
  %v863 = vld [vmem:[%s2 + $0xc] sm:$0xf]
  %v864 = vld [vmem:[%s2 + $0x10] sm:$0xf]
  %v865 = vld [vmem:[%s2 + $0x14] sm:$0xf]
  %v866 = vld [vmem:[%s2 + $0x18] sm:$0xf]
  %v867 = vld [vmem:[%s2 + $0x1c] sm:$0xf]
  %v868 = vld [vmem:[%s2 + $0x20] sm:$0xf]
  %v869 = vld [vmem:[%s2 + $0x24] sm:$0xf]
  %v870 = vld [vmem:[%s2 + $0x28] sm:$0xf]
  %v871 = vld [vmem:[%s2 + $0x2c] sm:$0xf]
  %v872 = vld [vmem:[%s2 + $0x30] sm:$0xf]
  %v873 = vld [vmem:[%s2 + $0x34] sm:$0xf]
  %v874 = vld [vmem:[%s2 + $0x38] sm:$0xf]
  %v875 = vld [vmem:[%s2 + $0x3c] sm:$0xf]
  %v876 = vunpack.c.l.bf16 %v860
  %v877 = vunpack.c.l.bf16 %v861
  %v878 = vunpack.c.l.bf16 %v862
  %v879 = vunpack.c.l.bf16 %v863
  %v880 = vunpack.c.l.bf16 %v864
  %v881 = vunpack.c.l.bf16 %v865
  %v882 = vunpack.c.l.bf16 %v866
  %v883 = vunpack.c.l.bf16 %v867
  %v884 = vunpack.c.l.bf16 %v868
  %v885 = vunpack.c.l.bf16 %v869
  %v886 = vunpack.c.l.bf16 %v870
  %v887 = vunpack.c.l.bf16 %v871
  %v888 = vunpack.c.l.bf16 %v872
  %v889 = vunpack.c.l.bf16 %v873
  %v890 = vunpack.c.l.bf16 %v874
  %v891 = vunpack.c.l.bf16 %v875
  %v892 = vld [vmem:[%s3] sm:$0xff]
  %v893 = vld [vmem:[%s3 + $0x8] sm:$0xff]
  %v894 = vld [vmem:[%s10] sm:$0x1]
  %v896 = vlaneseq
  %v897 = vshrl.u32 %v896, 7
  %v898 = vsub.s32 0, %v897
  %v899 = vrot.slane %v894, %v898
  %v901 = vadd.f32 %v309, %v899
  %v902 = vadd.f32 %v312, %v899
  %v903 = vadd.f32 %v317, %v899
  %v904 = vadd.f32 %v320, %v899
  %v905 = vld [vmem:[%s11] sm:$0xf]
  %v906 = vld [vmem:[%s11 + $0x4] sm:$0xf]
  %v907 = vld [vmem:[%s11 + $0x8] sm:$0xf]
  %v908 = vld [vmem:[%s11 + $0xc] sm:$0xf]
  %v909 = vld [vmem:[%s12] sm:$0x1]
  %v910 = vpack.c.bf16 %v893, %v892
  %v912 = vlaneseq
  %v913 = vshrl.u32 %v912, 7
  %v914 = vsub.s32 0, %v913
  %v915 = vrot.slane %v909, %v914
  %v921 = vunpack.c.l.b16 %v905
  %v922 = vunpack.c.l.b16 %v906
  %v923 = vunpack.c.l.b16 %v907
  %v924 = vunpack.c.l.b16 %v908
  %v925 = vpack.c.b16 %v922, %v921
  %v926 = vpack.c.b16 %v924, %v923
  %v930 = vsel %vm267, %v910, 0
  %932 = vmatprep.subr.bf16.mxu0 0
  %933 = vmatpush1.bf16.msra.mxu0 0
  %934 = vmatprep.subr.bf16.mxu0 0
  %935 = vmatpush1.bf16.msra.mxu0 0
  %936 = vmatprep.subr.bf16.mxu0 0
  %937 = vmatpush1.bf16.msra.mxu0 0
  %938 = vmatprep.subr.bf16.mxu0 0
  %939 = vmatpush1.bf16.msra.mxu0 0
  %940 = vmatprep.subr.bf16.mxu0 0
  %941 = vmatpush1.bf16.msra.mxu0 0
  %942 = vmatprep.subr.bf16.mxu0 0
  %943 = vmatpush1.bf16.msra.mxu0 0
  %944 = vmatprep.subr.bf16.mxu0 0
  %945 = vmatpush1.bf16.msra.mxu0 %v926
  %946 = vmatprep.subr.bf16.mxu0 0
  %947 = vmatpush1.bf16.msra.mxu0 %v925
  %948 = vmatprep.subr.bf16.mxu0 0
  %949 = vmatpush2.bf16.msra.mxu0 0
  %950 = vmatprep.subr.bf16.mxu0 0
  %951 = vmatpush2.bf16.msra.mxu0 0
  %952 = vmatprep.subr.bf16.mxu0 0
  %953 = vmatpush2.bf16.msra.mxu0 0
  %954 = vmatprep.subr.bf16.mxu0 0
  %955 = vmatpush2.bf16.msra.mxu0 0
  %956 = vmatprep.subr.bf16.mxu0 0
  %957 = vmatpush2.bf16.msra.mxu0 0
  %958 = vmatprep.subr.bf16.mxu0 0
  %959 = vmatpush2.bf16.msra.mxu0 0
  %960 = vmatprep.subr.bf16.mxu0 0
  %961 = vmatpush2.bf16.msra.mxu0 0
  %962 = vmatprep.subr.bf16.mxu0 0
  %963 = vmatpush2.bf16.msra.mxu0 0
  %964 = vmatprep.mubr.bf16.mxu0 0
  %965 = vmatmul.mubr.bf16.gmra.mxu0 %v930
  %v966 = vpop.f32.mrf.mxu0
  %v967 = vadd.f32 %v915, %v966
  %v968 = vpop.f32.mrf.mxu0
  %v969 = vpop.f32.mrf.mxu0
  %v970 = vadd.f32 %v915, %v969
  %v971 = vpop.f32.mrf.mxu0
  %972 = vdwg.mxu0
  %s973 = scalar_lea.vmem %s11, 16
  %v974 = vld [vmem:[%s973] sm:$0xf]
  %v975 = vld [vmem:[%s973 + $0x4] sm:$0xf]
  %v976 = vld [vmem:[%s973 + $0x8] sm:$0xf]
  %v977 = vld [vmem:[%s973 + $0xc] sm:$0xf]
  %s978 = scalar_lea.vmem %s12, 1
  %v979 = vld [vmem:[%s978] sm:$0x1]
  %v980 = vpack.c.bf16 %v902, %v901
  %v981 = vpack.c.bf16 %v904, %v903
  %v983 = vlaneseq
  %v984 = vshrl.u32 %v983, 7
  %v985 = vsub.s32 0, %v984
  %v986 = vrot.slane %v979, %v985
  %v992 = vunpack.c.l.b16 %v974
  %v993 = vunpack.c.l.b16 %v975
  %v994 = vunpack.c.l.b16 %v976
  %v995 = vunpack.c.l.b16 %v977
  %v996 = vpack.c.b16 %v993, %v992
  %v997 = vpack.c.b16 %v995, %v994
  %v1001 = vsel %vm267, %v980, 0
  %v1004 = vsel %vm267, %v981, 0
  %1006 = vmatprep.subr.bf16.mxu0 0
  %1007 = vmatpush1.bf16.msra.mxu0 0
  %1008 = vmatprep.subr.bf16.mxu0 0
  %1009 = vmatpush1.bf16.msra.mxu0 0
  %1010 = vmatprep.subr.bf16.mxu0 0
  %1011 = vmatpush1.bf16.msra.mxu0 0
  %1012 = vmatprep.subr.bf16.mxu0 0
  %1013 = vmatpush1.bf16.msra.mxu0 0
  %1014 = vmatprep.subr.bf16.mxu0 0
  %1015 = vmatpush1.bf16.msra.mxu0 0
  %1016 = vmatprep.subr.bf16.mxu0 0
  %1017 = vmatpush1.bf16.msra.mxu0 0
  %1018 = vmatprep.subr.bf16.mxu0 0
  %1019 = vmatpush1.bf16.msra.mxu0 %v997
  %1020 = vmatprep.subr.bf16.mxu0 0
  %1021 = vmatpush1.bf16.msra.mxu0 %v996
  %1022 = vmatprep.subr.bf16.mxu0 0
  %1023 = vmatpush2.bf16.msra.mxu0 0
  %1024 = vmatprep.subr.bf16.mxu0 0
  %1025 = vmatpush2.bf16.msra.mxu0 0
  %1026 = vmatprep.subr.bf16.mxu0 0
  %1027 = vmatpush2.bf16.msra.mxu0 0
  %1028 = vmatprep.subr.bf16.mxu0 0
  %1029 = vmatpush2.bf16.msra.mxu0 0
  %1030 = vmatprep.subr.bf16.mxu0 0
  %1031 = vmatpush2.bf16.msra.mxu0 0
  %1032 = vmatprep.subr.bf16.mxu0 0
  %1033 = vmatpush2.bf16.msra.mxu0 0
  %1034 = vmatprep.subr.bf16.mxu0 0
  %1035 = vmatpush2.bf16.msra.mxu0 0
  %1036 = vmatprep.subr.bf16.mxu0 0
  %1037 = vmatpush2.bf16.msra.mxu0 0
  %1038 = vmatprep.mubr.bf16.mxu0 0
  %1039 = vmatmul.mubr.bf16.gmra.mxu0 %v1001
  %v1040 = vpop.f32.mrf.mxu0
  %v1041 = vadd.f32 %v986, %v1040
  %v1042 = vpop.f32.mrf.mxu0
  %v1043 = vpop.f32.mrf.mxu0
  %v1044 = vadd.f32 %v986, %v1043
  %v1045 = vpop.f32.mrf.mxu0
  %1046 = vmatprep.mubr.bf16.mxu0 0
  %1047 = vmatmul.mubr.bf16.gmra.mxu0 %v1004
  %v1048 = vpop.f32.mrf.mxu0
  %v1049 = vadd.f32 %v986, %v1048
  %v1050 = vpop.f32.mrf.mxu0
  %v1051 = vpop.f32.mrf.mxu0
  %v1052 = vadd.f32 %v986, %v1051
  %v1053 = vpop.f32.mrf.mxu0
  %1054 = vdwg.mxu0
  %s1055 = scalar_lea.vmem %s11, 32
  %v1056 = vld [vmem:[%s1055] sm:$0xf]
  %v1057 = vld [vmem:[%s1055 + $0x4] sm:$0xf]
  %v1058 = vld [vmem:[%s1055 + $0x8] sm:$0xf]
  %v1059 = vld [vmem:[%s1055 + $0xc] sm:$0xf]
  %s1060 = scalar_lea.vmem %s12, 2
  %v1061 = vld [vmem:[%s1060] sm:$0x1]
  %v1063 = vlaneseq
  %v1064 = vshrl.u32 %v1063, 7
  %v1065 = vsub.s32 0, %v1064
  %v1066 = vrot.slane %v1061, %v1065
  %v1072 = vunpack.c.l.b16 %v1056
  %v1073 = vunpack.c.l.b16 %v1057
  %v1074 = vunpack.c.l.b16 %v1058
  %v1075 = vunpack.c.l.b16 %v1059
  %v1076 = vpack.c.b16 %v1073, %v1072
  %v1077 = vpack.c.b16 %v1075, %v1074
  %1080 = vmatprep.subr.bf16.mxu0 0
  %1081 = vmatpush1.bf16.msra.mxu0 0
  %1082 = vmatprep.subr.bf16.mxu0 0
  %1083 = vmatpush1.bf16.msra.mxu0 0
  %1084 = vmatprep.subr.bf16.mxu0 0
  %1085 = vmatpush1.bf16.msra.mxu0 0
  %1086 = vmatprep.subr.bf16.mxu0 0
  %1087 = vmatpush1.bf16.msra.mxu0 0
  %1088 = vmatprep.subr.bf16.mxu0 0
  %1089 = vmatpush1.bf16.msra.mxu0 0
  %1090 = vmatprep.subr.bf16.mxu0 0
  %1091 = vmatpush1.bf16.msra.mxu0 0
  %1092 = vmatprep.subr.bf16.mxu0 0
  %1093 = vmatpush1.bf16.msra.mxu0 %v1077
  %1094 = vmatprep.subr.bf16.mxu0 0
  %1095 = vmatpush1.bf16.msra.mxu0 %v1076
  %1096 = vmatprep.subr.bf16.mxu0 0
  %1097 = vmatpush2.bf16.msra.mxu0 0
  %1098 = vmatprep.subr.bf16.mxu0 0
  %1099 = vmatpush2.bf16.msra.mxu0 0
  %1100 = vmatprep.subr.bf16.mxu0 0
  %1101 = vmatpush2.bf16.msra.mxu0 0
  %1102 = vmatprep.subr.bf16.mxu0 0
  %1103 = vmatpush2.bf16.msra.mxu0 0
  %1104 = vmatprep.subr.bf16.mxu0 0
  %1105 = vmatpush2.bf16.msra.mxu0 0
  %1106 = vmatprep.subr.bf16.mxu0 0
  %1107 = vmatpush2.bf16.msra.mxu0 0
  %1108 = vmatprep.subr.bf16.mxu0 0
  %1109 = vmatpush2.bf16.msra.mxu0 0
  %1110 = vmatprep.subr.bf16.mxu0 0
  %1111 = vmatpush2.bf16.msra.mxu0 0
  %1112 = vmatprep.mubr.bf16.mxu0 0
  %1113 = vmatmul.mubr.bf16.gmra.mxu0 %v1001
  %v1114 = vpop.f32.mrf.mxu0
  %v1115 = vadd.f32 %v1066, %v1114
  %v1116 = vpop.f32.mrf.mxu0
  %v1117 = vpop.f32.mrf.mxu0
  %v1118 = vadd.f32 %v1066, %v1117
  %v1119 = vpop.f32.mrf.mxu0
  %1120 = vmatprep.mubr.bf16.mxu0 0
  %1121 = vmatmul.mubr.bf16.gmra.mxu0 %v1004
  %v1122 = vpop.f32.mrf.mxu0
  %v1123 = vadd.f32 %v1066, %v1122
  %v1124 = vpop.f32.mrf.mxu0
  %v1125 = vpop.f32.mrf.mxu0
  %v1126 = vadd.f32 %v1066, %v1125
  %v1127 = vpop.f32.mrf.mxu0
  %1128 = vdwg.mxu0
  %v1129 = vpack.c.bf16 %v967, %v967
  %v1130 = vpack.c.bf16 %v970, %v970
  %v1131 = vpack.c.bf16 %v1044, %v1041
  %v1132 = vpack.c.bf16 %v1052, %v1049
  %v1133 = vpack.c.bf16 %v1118, %v1115
  %v1134 = vpack.c.bf16 %v1126, %v1123
  %v1136 = vsel %vm267, %v1129, 0
  %v1139 = vsel %vm267, %v1131, 0
  %1141 = vmatprep.subr.bf16.mxu0 0
  %1142 = vmatpush1.bf16.xpose.msra.mxu0 0
  %1143 = vmatprep.subr.bf16.mxu0 0
  %1144 = vmatpush1.bf16.xpose.msra.mxu0 0
  %1145 = vmatprep.subr.bf16.mxu0 0
  %1146 = vmatpush1.bf16.xpose.msra.mxu0 0
  %1147 = vmatprep.subr.bf16.mxu0 0
  %1148 = vmatpush1.bf16.xpose.msra.mxu0 0
  %1149 = vmatprep.subr.bf16.mxu0 0
  %1150 = vmatpush1.bf16.xpose.msra.mxu0 0
  %1151 = vmatprep.subr.bf16.mxu0 0
  %1152 = vmatpush1.bf16.xpose.msra.mxu0 0
  %1153 = vmatprep.subr.bf16.mxu0 0
  %1154 = vmatpush1.bf16.xpose.msra.mxu0 0
  %1155 = vmatprep.subr.bf16.mxu0 0
  %1156 = vmatpush1.bf16.xpose.msra.mxu0 %v1139
  %1157 = vmatprep.subr.bf16.mxu0 0
  %1158 = vmatpush2.bf16.xpose.msra.mxu0 0
  %1159 = vmatprep.subr.bf16.mxu0 0
  %1160 = vmatpush2.bf16.xpose.msra.mxu0 0
  %1161 = vmatprep.subr.bf16.mxu0 0
  %1162 = vmatpush2.bf16.xpose.msra.mxu0 0
  %1163 = vmatprep.subr.bf16.mxu0 0
  %1164 = vmatpush2.bf16.xpose.msra.mxu0 0
  %1165 = vmatprep.subr.bf16.mxu0 0
  %1166 = vmatpush2.bf16.xpose.msra.mxu0 0
  %1167 = vmatprep.subr.bf16.mxu0 0
  %1168 = vmatpush2.bf16.xpose.msra.mxu0 0
  %1169 = vmatprep.subr.bf16.mxu0 0
  %1170 = vmatpush2.bf16.xpose.msra.mxu0 0
  %1171 = vmatprep.subr.bf16.mxu0 0
  %1172 = vmatpush2.bf16.xpose.msra.mxu0 0
  %1173 = vmatprep.mubr.bf16.mxu0 0
  %1174 = vmatmul.mubr.bf16.gmra.mxu0 %v1136
  %v1175 = vpop.f32.mrf.mxu0
  %v1176 = vadd.f32 0.0, %v1175
  %v1177 = vpop.f32.mrf.mxu0
  %v1178 = vpop.f32.mrf.mxu0
  %v1179 = vpop.f32.mrf.mxu0
  %1180 = vdwg.mxu0
  %v1182 = vsel %vm267, %v1130, 0
  %v1185 = vsel %vm267, %v1132, 0
  %1187 = vmatprep.subr.bf16.mxu0 0
  %1188 = vmatpush1.bf16.xpose.msra.mxu0 0
  %1189 = vmatprep.subr.bf16.mxu0 0
  %1190 = vmatpush1.bf16.xpose.msra.mxu0 0
  %1191 = vmatprep.subr.bf16.mxu0 0
  %1192 = vmatpush1.bf16.xpose.msra.mxu0 0
  %1193 = vmatprep.subr.bf16.mxu0 0
  %1194 = vmatpush1.bf16.xpose.msra.mxu0 0
  %1195 = vmatprep.subr.bf16.mxu0 0
  %1196 = vmatpush1.bf16.xpose.msra.mxu0 0
  %1197 = vmatprep.subr.bf16.mxu0 0
  %1198 = vmatpush1.bf16.xpose.msra.mxu0 0
  %1199 = vmatprep.subr.bf16.mxu0 0
  %1200 = vmatpush1.bf16.xpose.msra.mxu0 0
  %1201 = vmatprep.subr.bf16.mxu0 0
  %1202 = vmatpush1.bf16.xpose.msra.mxu0 %v1185
  %1203 = vmatprep.subr.bf16.mxu0 0
  %1204 = vmatpush2.bf16.xpose.msra.mxu0 0
  %1205 = vmatprep.subr.bf16.mxu0 0
  %1206 = vmatpush2.bf16.xpose.msra.mxu0 0
  %1207 = vmatprep.subr.bf16.mxu0 0
  %1208 = vmatpush2.bf16.xpose.msra.mxu0 0
  %1209 = vmatprep.subr.bf16.mxu0 0
  %1210 = vmatpush2.bf16.xpose.msra.mxu0 0
  %1211 = vmatprep.subr.bf16.mxu0 0
  %1212 = vmatpush2.bf16.xpose.msra.mxu0 0
  %1213 = vmatprep.subr.bf16.mxu0 0
  %1214 = vmatpush2.bf16.xpose.msra.mxu0 0
  %1215 = vmatprep.subr.bf16.mxu0 0
  %1216 = vmatpush2.bf16.xpose.msra.mxu0 0
  %1217 = vmatprep.subr.bf16.mxu0 0
  %1218 = vmatpush2.bf16.xpose.msra.mxu0 0
  %1219 = vmatprep.mubr.bf16.mxu0 0
  %1220 = vmatmul.mubr.bf16.gmra.mxu0 %v1182
  %v1221 = vpop.f32.mrf.mxu0
  %v1222 = vadd.f32 0.0, %v1221
  %v1223 = vpop.f32.mrf.mxu0
  %v1224 = vpop.f32.mrf.mxu0
  %v1225 = vpop.f32.mrf.mxu0
  %1226 = vdwg.mxu0
  %v1227 = vmul.f32 %v1176, 0.17677669
  %v1228 = vmul.f32 %v1222, 0.17677669
  %v1229 = vsel %vm182, %v1227, -inf
  %1230 = vmax.xlane.f32.xlu0 %v1229
  %v1231 = vpop.xlane.xlu0 %1230
  %v1232 = vsel %vm182, %v1228, -inf
  %1233 = vmax.xlane.f32.xlu0 %v1232
  %v1234 = vpop.xlane.xlu0 %1233
  %v1235 = vsub.f32 %v1227, %v1231
  %v1236 = vsub.f32 %v1228, %v1234
  %v1237 = vmul.f32 %v1235, 1.442695
  %v1238 = vpow.pop %v1237
  %v1239 = vmul.f32 %v1236, 1.442695
  %v1240 = vpow.pop %v1239
  %v1241 = vsel %vm182, %v1238, 0.0
  %1242 = vadd.xlane.f32.xlu0 %v1241
  %v1243 = vpop.xlane.xlu0 %1242
  %v1244 = vsel %vm182, %v1240, 0.0
  %1245 = vadd.xlane.f32.xlu0 %v1244
  %v1246 = vpop.xlane.xlu0 %1245
  %v1247 = vrcp.pop %v1243
  %v1248 = vrcp.pop %v1246
  %v1249 = vmul.f32 %v1238, %v1247
  %v1250 = vmul.f32 %v1240, %v1248
  %v1251 = vpack.c.bf16 %v1249, %v1249
  %v1252 = vpack.c.bf16 %v1250, %v1250
  %v1254 = vsel %vm182, %v1251, 0
  %1256 = vmatprep.subr.bf16.mxu0 0
  %1257 = vmatpush1.bf16.msra.mxu0 0
  %1258 = vmatprep.subr.bf16.mxu0 0
  %1259 = vmatpush1.bf16.msra.mxu0 0
  %1260 = vmatprep.subr.bf16.mxu0 0
  %1261 = vmatpush1.bf16.msra.mxu0 0
  %1262 = vmatprep.subr.bf16.mxu0 0
  %1263 = vmatpush1.bf16.msra.mxu0 0
  %1264 = vmatprep.subr.bf16.mxu0 0
  %1265 = vmatpush1.bf16.msra.mxu0 0
  %1266 = vmatprep.subr.bf16.mxu0 0
  %1267 = vmatpush1.bf16.msra.mxu0 0
  %1268 = vmatprep.subr.bf16.mxu0 0
  %1269 = vmatpush1.bf16.msra.mxu0 0
  %1270 = vmatprep.subr.bf16.mxu0 0
  %1271 = vmatpush1.bf16.msra.mxu0 %v1133
  %1272 = vmatprep.subr.bf16.mxu0 0
  %1273 = vmatpush2.bf16.msra.mxu0 0
  %1274 = vmatprep.subr.bf16.mxu0 0
  %1275 = vmatpush2.bf16.msra.mxu0 0
  %1276 = vmatprep.subr.bf16.mxu0 0
  %1277 = vmatpush2.bf16.msra.mxu0 0
  %1278 = vmatprep.subr.bf16.mxu0 0
  %1279 = vmatpush2.bf16.msra.mxu0 0
  %1280 = vmatprep.subr.bf16.mxu0 0
  %1281 = vmatpush2.bf16.msra.mxu0 0
  %1282 = vmatprep.subr.bf16.mxu0 0
  %1283 = vmatpush2.bf16.msra.mxu0 0
  %1284 = vmatprep.subr.bf16.mxu0 0
  %1285 = vmatpush2.bf16.msra.mxu0 0
  %1286 = vmatprep.subr.bf16.mxu0 0
  %1287 = vmatpush2.bf16.msra.mxu0 0
  %1288 = vmatprep.mubr.bf16.mxu0 0
  %1289 = vmatmul.mubr.bf16.gmra.mxu0 %v1254
  %v1290 = vpop.f32.mrf.mxu0
  %v1291 = vadd.f32 0.0, %v1290
  %v1292 = vpop.f32.mrf.mxu0
  %v1293 = vpop.f32.mrf.mxu0
  %v1294 = vpop.f32.mrf.mxu0
  %1295 = vdwg.mxu0
  %v1297 = vsel %vm182, %v1252, 0
  %1299 = vmatprep.subr.bf16.mxu0 0
  %1300 = vmatpush1.bf16.msra.mxu0 0
  %1301 = vmatprep.subr.bf16.mxu0 0
  %1302 = vmatpush1.bf16.msra.mxu0 0
  %1303 = vmatprep.subr.bf16.mxu0 0
  %1304 = vmatpush1.bf16.msra.mxu0 0
  %1305 = vmatprep.subr.bf16.mxu0 0
  %1306 = vmatpush1.bf16.msra.mxu0 0
  %1307 = vmatprep.subr.bf16.mxu0 0
  %1308 = vmatpush1.bf16.msra.mxu0 0
  %1309 = vmatprep.subr.bf16.mxu0 0
  %1310 = vmatpush1.bf16.msra.mxu0 0
  %1311 = vmatprep.subr.bf16.mxu0 0
  %1312 = vmatpush1.bf16.msra.mxu0 0
  %1313 = vmatprep.subr.bf16.mxu0 0
  %1314 = vmatpush1.bf16.msra.mxu0 %v1134
  %1315 = vmatprep.subr.bf16.mxu0 0
  %1316 = vmatpush2.bf16.msra.mxu0 0
  %1317 = vmatprep.subr.bf16.mxu0 0
  %1318 = vmatpush2.bf16.msra.mxu0 0
  %1319 = vmatprep.subr.bf16.mxu0 0
  %1320 = vmatpush2.bf16.msra.mxu0 0
  %1321 = vmatprep.subr.bf16.mxu0 0
  %1322 = vmatpush2.bf16.msra.mxu0 0
  %1323 = vmatprep.subr.bf16.mxu0 0
  %1324 = vmatpush2.bf16.msra.mxu0 0
  %1325 = vmatprep.subr.bf16.mxu0 0
  %1326 = vmatpush2.bf16.msra.mxu0 0
  %1327 = vmatprep.subr.bf16.mxu0 0
  %1328 = vmatpush2.bf16.msra.mxu0 0
  %1329 = vmatprep.subr.bf16.mxu0 0
  %1330 = vmatpush2.bf16.msra.mxu0 0
  %1331 = vmatprep.mubr.bf16.mxu0 0
  %1332 = vmatmul.mubr.bf16.gmra.mxu0 %v1297
  %v1333 = vpop.f32.mrf.mxu0
  %v1334 = vadd.f32 0.0, %v1333
  %v1335 = vpop.f32.mrf.mxu0
  %v1336 = vpop.f32.mrf.mxu0
  %v1337 = vpop.f32.mrf.mxu0
  %1338 = vdwg.mxu0
  %s1339 = scalar_lea.vmem %s11, 48
  %v1340 = vld [vmem:[%s1339] sm:$0xf]
  %v1341 = vld [vmem:[%s1339 + $0x4] sm:$0xf]
  %v1342 = vld [vmem:[%s1339 + $0x8] sm:$0xf]
  %v1343 = vld [vmem:[%s1339 + $0xc] sm:$0xf]
  %s1344 = scalar_lea.vmem %s12, 3
  %v1345 = vld [vmem:[%s1344] sm:$0x1]
  %v1346 = vpack.c.bf16 %v1334, %v1291
  %v1348 = vlaneseq
  %v1349 = vshrl.u32 %v1348, 7
  %v1350 = vsub.s32 0, %v1349
  %v1351 = vrot.slane %v1345, %v1350
  %v1357 = vunpack.c.l.b16 %v1340
  %v1358 = vunpack.c.l.b16 %v1341
  %v1359 = vunpack.c.l.b16 %v1342
  %v1360 = vunpack.c.l.b16 %v1343
  %v1361 = vpack.c.b16 %v1358, %v1357
  %v1362 = vpack.c.b16 %v1360, %v1359
  %v1366 = vsel %vm267, %v1346, 0
  %1368 = vmatprep.subr.bf16.mxu0 0
  %1369 = vmatpush1.bf16.msra.mxu0 0
  %1370 = vmatprep.subr.bf16.mxu0 0
  %1371 = vmatpush1.bf16.msra.mxu0 0
  %1372 = vmatprep.subr.bf16.mxu0 0
  %1373 = vmatpush1.bf16.msra.mxu0 0
  %1374 = vmatprep.subr.bf16.mxu0 0
  %1375 = vmatpush1.bf16.msra.mxu0 0
  %1376 = vmatprep.subr.bf16.mxu0 0
  %1377 = vmatpush1.bf16.msra.mxu0 0
  %1378 = vmatprep.subr.bf16.mxu0 0
  %1379 = vmatpush1.bf16.msra.mxu0 0
  %1380 = vmatprep.subr.bf16.mxu0 0
  %1381 = vmatpush1.bf16.msra.mxu0 %v1362
  %1382 = vmatprep.subr.bf16.mxu0 0
  %1383 = vmatpush1.bf16.msra.mxu0 %v1361
  %1384 = vmatprep.subr.bf16.mxu0 0
  %1385 = vmatpush2.bf16.msra.mxu0 0
  %1386 = vmatprep.subr.bf16.mxu0 0
  %1387 = vmatpush2.bf16.msra.mxu0 0
  %1388 = vmatprep.subr.bf16.mxu0 0
  %1389 = vmatpush2.bf16.msra.mxu0 0
  %1390 = vmatprep.subr.bf16.mxu0 0
  %1391 = vmatpush2.bf16.msra.mxu0 0
  %1392 = vmatprep.subr.bf16.mxu0 0
  %1393 = vmatpush2.bf16.msra.mxu0 0
  %1394 = vmatprep.subr.bf16.mxu0 0
  %1395 = vmatpush2.bf16.msra.mxu0 0
  %1396 = vmatprep.subr.bf16.mxu0 0
  %1397 = vmatpush2.bf16.msra.mxu0 0
  %1398 = vmatprep.subr.bf16.mxu0 0
  %1399 = vmatpush2.bf16.msra.mxu0 0
  %1400 = vmatprep.mubr.bf16.mxu0 0
  %1401 = vmatmul.mubr.bf16.gmra.mxu0 %v1366
  %v1402 = vpop.f32.mrf.mxu0
  %v1403 = vadd.f32 %v1351, %v1402
  %v1404 = vpop.f32.mrf.mxu0
  %v1405 = vpop.f32.mrf.mxu0
  %v1406 = vadd.f32 %v1351, %v1405
  %v1407 = vpop.f32.mrf.mxu0
  %1408 = vdwg.mxu0
  %v1409 = vadd.f32 %v892, %v1403
  %v1410 = vadd.f32 %v893, %v1406
  %v1411 = vsel %vm267, %v1409, 0.0
  %1412 = vadd.xlane.f32.xlu0 %v1411
  %v1413 = vpop.xlane.xlu0 %1412
  %v1414 = vsel %vm267, %v1410, 0.0
  %1415 = vadd.xlane.f32.xlu0 %v1414
  %v1416 = vpop.xlane.xlu0 %1415
  %v1417 = vrcp.pop 32.0
  %v1418 = vmul.f32 %v1413, %v1417
  %v1419 = vmul.f32 %v1416, %v1417
  %v1420 = vsub.f32 %v1409, %v1418
  %v1421 = vsub.f32 %v1410, %v1419
  %v1422 = vmul.f32 %v1420, %v1420
  %v1423 = vmul.f32 %v1421, %v1421
  %v1424 = vsel %vm267, %v1422, 0.0
  %1425 = vadd.xlane.f32.xlu0 %v1424
  %v1426 = vpop.xlane.xlu0 %1425
  %v1427 = vsel %vm267, %v1423, 0.0
  %1428 = vadd.xlane.f32.xlu0 %v1427
  %v1429 = vpop.xlane.xlu0 %1428
  %v1430 = vmul.f32 %v1426, %v1417
  %v1431 = vmul.f32 %v1429, %v1417
  %v1432 = vadd.f32 %v1430, 1e-05
  %v1433 = vadd.f32 %v1431, 1e-05
  %v1434 = vrsqrt.pop %v1432
  %v1435 = vrsqrt.pop %v1433
  %v1436 = vmul.f32 %v1420, %v1434
  %v1437 = vmul.f32 %v1421, %v1435
  %v1438 = vld [vmem:[%s17] sm:$0x1]
  %v1440 = vlaneseq
  %v1441 = vshrl.u32 %v1440, 7
  %v1442 = vsub.s32 0, %v1441
  %v1443 = vrot.slane %v1438, %v1442
  %v1445 = vmul.f32 %v1436, %v1443
  %v1446 = vmul.f32 %v1437, %v1443
  %v1447 = vld [vmem:[%s18] sm:$0x1]
  %v1449 = vlaneseq
  %v1450 = vshrl.u32 %v1449, 7
  %v1451 = vsub.s32 0, %v1450
  %v1452 = vrot.slane %v1447, %v1451
  %v1454 = vadd.f32 %v1445, %v1452
  %v1455 = vadd.f32 %v1446, %v1452
  %s1456 = scalar_lea.vmem %s11, 64
  %v1457 = vld [vmem:[%s1456] sm:$0xf]
  %v1458 = vld [vmem:[%s1456 + $0x4] sm:$0xf]
  %v1459 = vld [vmem:[%s1456 + $0x8] sm:$0xf]
  %v1460 = vld [vmem:[%s1456 + $0xc] sm:$0xf]
  %s1461 = scalar_lea.vmem %s12, 4
  %v1462 = vld [vmem:[%s1461] sm:$0x1]
  %v1463 = vpack.c.bf16 %v1455, %v1454
  %v1465 = vlaneseq
  %v1466 = vshrl.u32 %v1465, 7
  %v1467 = vsub.s32 0, %v1466
  %v1468 = vrot.slane %v1462, %v1467
  %v1474 = vunpack.c.l.b16 %v1457
  %v1475 = vunpack.c.l.b16 %v1458
  %v1476 = vunpack.c.l.b16 %v1459
  %v1477 = vunpack.c.l.b16 %v1460
  %v1478 = vpack.c.b16 %v1475, %v1474
  %v1479 = vpack.c.b16 %v1477, %v1476
  %v1483 = vsel %vm267, %v1463, 0
  %1485 = vmatprep.subr.bf16.mxu0 0
  %1486 = vmatpush1.bf16.msra.mxu0 0
  %1487 = vmatprep.subr.bf16.mxu0 0
  %1488 = vmatpush1.bf16.msra.mxu0 0
  %1489 = vmatprep.subr.bf16.mxu0 0
  %1490 = vmatpush1.bf16.msra.mxu0 0
  %1491 = vmatprep.subr.bf16.mxu0 0
  %1492 = vmatpush1.bf16.msra.mxu0 0
  %1493 = vmatprep.subr.bf16.mxu0 0
  %1494 = vmatpush1.bf16.msra.mxu0 0
  %1495 = vmatprep.subr.bf16.mxu0 0
  %1496 = vmatpush1.bf16.msra.mxu0 0
  %1497 = vmatprep.subr.bf16.mxu0 0
  %1498 = vmatpush1.bf16.msra.mxu0 %v1479
  %1499 = vmatprep.subr.bf16.mxu0 0
  %1500 = vmatpush1.bf16.msra.mxu0 %v1478
  %1501 = vmatprep.subr.bf16.mxu0 0
  %1502 = vmatpush2.bf16.msra.mxu0 0
  %1503 = vmatprep.subr.bf16.mxu0 0
  %1504 = vmatpush2.bf16.msra.mxu0 0
  %1505 = vmatprep.subr.bf16.mxu0 0
  %1506 = vmatpush2.bf16.msra.mxu0 0
  %1507 = vmatprep.subr.bf16.mxu0 0
  %1508 = vmatpush2.bf16.msra.mxu0 0
  %1509 = vmatprep.subr.bf16.mxu0 0
  %1510 = vmatpush2.bf16.msra.mxu0 0
  %1511 = vmatprep.subr.bf16.mxu0 0
  %1512 = vmatpush2.bf16.msra.mxu0 0
  %1513 = vmatprep.subr.bf16.mxu0 0
  %1514 = vmatpush2.bf16.msra.mxu0 0
  %1515 = vmatprep.subr.bf16.mxu0 0
  %1516 = vmatpush2.bf16.msra.mxu0 0
  %1517 = vmatprep.mubr.bf16.mxu0 0
  %1518 = vmatmul.mubr.bf16.gmra.mxu0 %v1483
  %v1519 = vpop.f32.mrf.mxu0
  %v1520 = vadd.f32 %v1468, %v1519
  %v1521 = vpop.f32.mrf.mxu0
  %v1522 = vpop.f32.mrf.mxu0
  %v1523 = vadd.f32 %v1468, %v1522
  %v1524 = vpop.f32.mrf.mxu0
  %1525 = vdwg.mxu0
  %s1526 = scalar_lea.vmem %s11, 80
  %v1527 = vld [vmem:[%s1526] sm:$0xf]
  %v1528 = vld [vmem:[%s1526 + $0x4] sm:$0xf]
  %v1529 = vld [vmem:[%s1526 + $0x8] sm:$0xf]
  %v1530 = vld [vmem:[%s1526 + $0xc] sm:$0xf]
  %s1531 = scalar_lea.vmem %s12, 5
  %v1532 = vld [vmem:[%s1531] sm:$0x1]
  %v1534 = vlaneseq
  %v1535 = vshrl.u32 %v1534, 7
  %v1536 = vsub.s32 0, %v1535
  %v1537 = vrot.slane %v1532, %v1536
  %v1543 = vunpack.c.l.b16 %v1527
  %v1544 = vunpack.c.l.b16 %v1528
  %v1545 = vunpack.c.l.b16 %v1529
  %v1546 = vunpack.c.l.b16 %v1530
  %v1547 = vpack.c.b16 %v1544, %v1543
  %v1548 = vpack.c.b16 %v1546, %v1545
  %1551 = vmatprep.subr.bf16.mxu0 0
  %1552 = vmatpush1.bf16.msra.mxu0 0
  %1553 = vmatprep.subr.bf16.mxu0 0
  %1554 = vmatpush1.bf16.msra.mxu0 0
  %1555 = vmatprep.subr.bf16.mxu0 0
  %1556 = vmatpush1.bf16.msra.mxu0 0
  %1557 = vmatprep.subr.bf16.mxu0 0
  %1558 = vmatpush1.bf16.msra.mxu0 0
  %1559 = vmatprep.subr.bf16.mxu0 0
  %1560 = vmatpush1.bf16.msra.mxu0 0
  %1561 = vmatprep.subr.bf16.mxu0 0
  %1562 = vmatpush1.bf16.msra.mxu0 0
  %1563 = vmatprep.subr.bf16.mxu0 0
  %1564 = vmatpush1.bf16.msra.mxu0 %v1548
  %1565 = vmatprep.subr.bf16.mxu0 0
  %1566 = vmatpush1.bf16.msra.mxu0 %v1547
  %1567 = vmatprep.subr.bf16.mxu0 0
  %1568 = vmatpush2.bf16.msra.mxu0 0
  %1569 = vmatprep.subr.bf16.mxu0 0
  %1570 = vmatpush2.bf16.msra.mxu0 0
  %1571 = vmatprep.subr.bf16.mxu0 0
  %1572 = vmatpush2.bf16.msra.mxu0 0
  %1573 = vmatprep.subr.bf16.mxu0 0
  %1574 = vmatpush2.bf16.msra.mxu0 0
  %1575 = vmatprep.subr.bf16.mxu0 0
  %1576 = vmatpush2.bf16.msra.mxu0 0
  %1577 = vmatprep.subr.bf16.mxu0 0
  %1578 = vmatpush2.bf16.msra.mxu0 0
  %1579 = vmatprep.subr.bf16.mxu0 0
  %1580 = vmatpush2.bf16.msra.mxu0 0
  %1581 = vmatprep.subr.bf16.mxu0 0
  %1582 = vmatpush2.bf16.msra.mxu0 0
  %1583 = vmatprep.mubr.bf16.mxu0 0
  %1584 = vmatmul.mubr.bf16.gmra.mxu0 %v1483
  %v1585 = vpop.f32.mrf.mxu0
  %v1586 = vadd.f32 %v1537, %v1585
  %v1587 = vpop.f32.mrf.mxu0
  %v1588 = vpop.f32.mrf.mxu0
  %v1589 = vadd.f32 %v1537, %v1588
  %v1590 = vpop.f32.mrf.mxu0
  %1591 = vdwg.mxu0
  %s1592 = scalar_lea.vmem %s11, 96
  %v1593 = vld [vmem:[%s1592] sm:$0xf]
  %v1594 = vld [vmem:[%s1592 + $0x4] sm:$0xf]
  %v1595 = vld [vmem:[%s1592 + $0x8] sm:$0xf]
  %v1596 = vld [vmem:[%s1592 + $0xc] sm:$0xf]
  %s1597 = scalar_lea.vmem %s12, 6
  %v1598 = vld [vmem:[%s1597] sm:$0x1]
  %v1600 = vlaneseq
  %v1601 = vshrl.u32 %v1600, 7
  %v1602 = vsub.s32 0, %v1601
  %v1603 = vrot.slane %v1598, %v1602
  %v1609 = vunpack.c.l.b16 %v1593
  %v1610 = vunpack.c.l.b16 %v1594
  %v1611 = vunpack.c.l.b16 %v1595
  %v1612 = vunpack.c.l.b16 %v1596
  %v1613 = vpack.c.b16 %v1610, %v1609
  %v1614 = vpack.c.b16 %v1612, %v1611
  %1617 = vmatprep.subr.bf16.mxu0 0
  %1618 = vmatpush1.bf16.msra.mxu0 0
  %1619 = vmatprep.subr.bf16.mxu0 0
  %1620 = vmatpush1.bf16.msra.mxu0 0
  %1621 = vmatprep.subr.bf16.mxu0 0
  %1622 = vmatpush1.bf16.msra.mxu0 0
  %1623 = vmatprep.subr.bf16.mxu0 0
  %1624 = vmatpush1.bf16.msra.mxu0 0
  %1625 = vmatprep.subr.bf16.mxu0 0
  %1626 = vmatpush1.bf16.msra.mxu0 0
  %1627 = vmatprep.subr.bf16.mxu0 0
  %1628 = vmatpush1.bf16.msra.mxu0 0
  %1629 = vmatprep.subr.bf16.mxu0 0
  %1630 = vmatpush1.bf16.msra.mxu0 %v1614
  %1631 = vmatprep.subr.bf16.mxu0 0
  %1632 = vmatpush1.bf16.msra.mxu0 %v1613
  %1633 = vmatprep.subr.bf16.mxu0 0
  %1634 = vmatpush2.bf16.msra.mxu0 0
  %1635 = vmatprep.subr.bf16.mxu0 0
  %1636 = vmatpush2.bf16.msra.mxu0 0
  %1637 = vmatprep.subr.bf16.mxu0 0
  %1638 = vmatpush2.bf16.msra.mxu0 0
  %1639 = vmatprep.subr.bf16.mxu0 0
  %1640 = vmatpush2.bf16.msra.mxu0 0
  %1641 = vmatprep.subr.bf16.mxu0 0
  %1642 = vmatpush2.bf16.msra.mxu0 0
  %1643 = vmatprep.subr.bf16.mxu0 0
  %1644 = vmatpush2.bf16.msra.mxu0 0
  %1645 = vmatprep.subr.bf16.mxu0 0
  %1646 = vmatpush2.bf16.msra.mxu0 0
  %1647 = vmatprep.subr.bf16.mxu0 0
  %1648 = vmatpush2.bf16.msra.mxu0 0
  %1649 = vmatprep.mubr.bf16.mxu0 0
  %1650 = vmatmul.mubr.bf16.gmra.mxu0 %v1483
  %v1651 = vpop.f32.mrf.mxu0
  %v1652 = vadd.f32 %v1603, %v1651
  %v1653 = vpop.f32.mrf.mxu0
  %v1654 = vpop.f32.mrf.mxu0
  %v1655 = vadd.f32 %v1603, %v1654
  %v1656 = vpop.f32.mrf.mxu0
  %1657 = vdwg.mxu0
  %v1658 = vpack.c.bf16 %v1520, %v1520
  %v1659 = vpack.c.bf16 %v1523, %v1523
  %v1660 = vpack.c.bf16 %v1586, %v1586
  %v1661 = vpack.c.bf16 %v1589, %v1589
  %v1662 = vpack.c.bf16 %v1652, %v1652
  %v1663 = vpack.c.bf16 %v1655, %v1655
  %v1665 = vsel %vm267, %v1658, 0
  %v1668 = vsel %vm267, %v1660, 0
  %1670 = vmatprep.subr.bf16.mxu0 0
  %1671 = vmatpush1.bf16.xpose.msra.mxu0 0
  %1672 = vmatprep.subr.bf16.mxu0 0
  %1673 = vmatpush1.bf16.xpose.msra.mxu0 0
  %1674 = vmatprep.subr.bf16.mxu0 0
  %1675 = vmatpush1.bf16.xpose.msra.mxu0 0
  %1676 = vmatprep.subr.bf16.mxu0 0
  %1677 = vmatpush1.bf16.xpose.msra.mxu0 0
  %1678 = vmatprep.subr.bf16.mxu0 0
  %1679 = vmatpush1.bf16.xpose.msra.mxu0 0
  %1680 = vmatprep.subr.bf16.mxu0 0
  %1681 = vmatpush1.bf16.xpose.msra.mxu0 0
  %1682 = vmatprep.subr.bf16.mxu0 0
  %1683 = vmatpush1.bf16.xpose.msra.mxu0 0
  %1684 = vmatprep.subr.bf16.mxu0 0
  %1685 = vmatpush1.bf16.xpose.msra.mxu0 %v1668
  %1686 = vmatprep.subr.bf16.mxu0 0
  %1687 = vmatpush2.bf16.xpose.msra.mxu0 0
  %1688 = vmatprep.subr.bf16.mxu0 0
  %1689 = vmatpush2.bf16.xpose.msra.mxu0 0
  %1690 = vmatprep.subr.bf16.mxu0 0
  %1691 = vmatpush2.bf16.xpose.msra.mxu0 0
  %1692 = vmatprep.subr.bf16.mxu0 0
  %1693 = vmatpush2.bf16.xpose.msra.mxu0 0
  %1694 = vmatprep.subr.bf16.mxu0 0
  %1695 = vmatpush2.bf16.xpose.msra.mxu0 0
  %1696 = vmatprep.subr.bf16.mxu0 0
  %1697 = vmatpush2.bf16.xpose.msra.mxu0 0
  %1698 = vmatprep.subr.bf16.mxu0 0
  %1699 = vmatpush2.bf16.xpose.msra.mxu0 0
  %1700 = vmatprep.subr.bf16.mxu0 0
  %1701 = vmatpush2.bf16.xpose.msra.mxu0 0
  %1702 = vmatprep.mubr.bf16.mxu0 0
  %1703 = vmatmul.mubr.bf16.gmra.mxu0 %v1665
  %v1704 = vpop.f32.mrf.mxu0
  %v1705 = vadd.f32 0.0, %v1704
  %v1706 = vpop.f32.mrf.mxu0
  %v1707 = vpop.f32.mrf.mxu0
  %v1708 = vpop.f32.mrf.mxu0
  %1709 = vdwg.mxu0
  %v1711 = vsel %vm267, %v1659, 0
  %v1714 = vsel %vm267, %v1661, 0
  %1716 = vmatprep.subr.bf16.mxu0 0
  %1717 = vmatpush1.bf16.xpose.msra.mxu0 0
  %1718 = vmatprep.subr.bf16.mxu0 0
  %1719 = vmatpush1.bf16.xpose.msra.mxu0 0
  %1720 = vmatprep.subr.bf16.mxu0 0
  %1721 = vmatpush1.bf16.xpose.msra.mxu0 0
  %1722 = vmatprep.subr.bf16.mxu0 0
  %1723 = vmatpush1.bf16.xpose.msra.mxu0 0
  %1724 = vmatprep.subr.bf16.mxu0 0
  %1725 = vmatpush1.bf16.xpose.msra.mxu0 0
  %1726 = vmatprep.subr.bf16.mxu0 0
  %1727 = vmatpush1.bf16.xpose.msra.mxu0 0
  %1728 = vmatprep.subr.bf16.mxu0 0
  %1729 = vmatpush1.bf16.xpose.msra.mxu0 0
  %1730 = vmatprep.subr.bf16.mxu0 0
  %1731 = vmatpush1.bf16.xpose.msra.mxu0 %v1714
  %1732 = vmatprep.subr.bf16.mxu0 0
  %1733 = vmatpush2.bf16.xpose.msra.mxu0 0
  %1734 = vmatprep.subr.bf16.mxu0 0
  %1735 = vmatpush2.bf16.xpose.msra.mxu0 0
  %1736 = vmatprep.subr.bf16.mxu0 0
  %1737 = vmatpush2.bf16.xpose.msra.mxu0 0
  %1738 = vmatprep.subr.bf16.mxu0 0
  %1739 = vmatpush2.bf16.xpose.msra.mxu0 0
  %1740 = vmatprep.subr.bf16.mxu0 0
  %1741 = vmatpush2.bf16.xpose.msra.mxu0 0
  %1742 = vmatprep.subr.bf16.mxu0 0
  %1743 = vmatpush2.bf16.xpose.msra.mxu0 0
  %1744 = vmatprep.subr.bf16.mxu0 0
  %1745 = vmatpush2.bf16.xpose.msra.mxu0 0
  %1746 = vmatprep.subr.bf16.mxu0 0
  %1747 = vmatpush2.bf16.xpose.msra.mxu0 0
  %1748 = vmatprep.mubr.bf16.mxu0 0
  %1749 = vmatmul.mubr.bf16.gmra.mxu0 %v1711
  %v1750 = vpop.f32.mrf.mxu0
  %v1751 = vadd.f32 0.0, %v1750
  %v1752 = vpop.f32.mrf.mxu0
  %v1753 = vpop.f32.mrf.mxu0
  %v1754 = vpop.f32.mrf.mxu0
  %1755 = vdwg.mxu0
  %v1756 = vmul.f32 %v1705, 0.17677669
  %v1757 = vmul.f32 %v1751, 0.17677669
  %vm1758 = vcmask 64512
  %v1759 = vsel %vm1758, %v1756, -inf
  %1760 = vmax.xlane.f32.xlu0 %v1759
  %v1761 = vpop.xlane.xlu0 %1760
  %v1762 = vsel %vm1758, %v1757, -inf
  %1763 = vmax.xlane.f32.xlu0 %v1762
  %v1764 = vpop.xlane.xlu0 %1763
  %v1765 = vsub.f32 %v1756, %v1761
  %v1766 = vsub.f32 %v1757, %v1764
  %v1767 = vmul.f32 %v1765, 1.442695
  %v1768 = vpow.pop %v1767
  %v1769 = vmul.f32 %v1766, 1.442695
  %v1770 = vpow.pop %v1769
  %v1771 = vsel %vm1758, %v1768, 0.0
  %1772 = vadd.xlane.f32.xlu0 %v1771
  %v1773 = vpop.xlane.xlu0 %1772
  %v1774 = vsel %vm1758, %v1770, 0.0
  %1775 = vadd.xlane.f32.xlu0 %v1774
  %v1776 = vpop.xlane.xlu0 %1775
  %v1777 = vrcp.pop %v1773
  %v1778 = vrcp.pop %v1776
  %v1779 = vmul.f32 %v1768, %v1777
  %v1780 = vmul.f32 %v1770, %v1778
  %v1781 = vpack.c.bf16 %v1779, %v1779
  %v1782 = vpack.c.bf16 %v1780, %v1780
  %v1784 = vsel %vm1758, %v1781, 0
  %vm1786 = vcmask 1043456
  %v1788 = vsel %vm1786, %v1662, 0
  %1790 = vmatprep.subr.bf16.mxu0 0
  %1791 = vmatpush1.bf16.msra.mxu0 0
  %1792 = vmatprep.subr.bf16.mxu0 0
  %1793 = vmatpush1.bf16.msra.mxu0 0
  %1794 = vmatprep.subr.bf16.mxu0 0
  %1795 = vmatpush1.bf16.msra.mxu0 0
  %1796 = vmatprep.subr.bf16.mxu0 0
  %1797 = vmatpush1.bf16.msra.mxu0 0
  %1798 = vmatprep.subr.bf16.mxu0 0
  %1799 = vmatpush1.bf16.msra.mxu0 0
  %1800 = vmatprep.subr.bf16.mxu0 0
  %1801 = vmatpush1.bf16.msra.mxu0 0
  %1802 = vmatprep.subr.bf16.mxu0 0
  %1803 = vmatpush1.bf16.msra.mxu0 0
  %1804 = vmatprep.subr.bf16.mxu0 0
  %1805 = vmatpush1.bf16.msra.mxu0 %v1788
  %1806 = vmatprep.subr.bf16.mxu0 0
  %1807 = vmatpush2.bf16.msra.mxu0 0
  %1808 = vmatprep.subr.bf16.mxu0 0
  %1809 = vmatpush2.bf16.msra.mxu0 0
  %1810 = vmatprep.subr.bf16.mxu0 0
  %1811 = vmatpush2.bf16.msra.mxu0 0
  %1812 = vmatprep.subr.bf16.mxu0 0
  %1813 = vmatpush2.bf16.msra.mxu0 0
  %1814 = vmatprep.subr.bf16.mxu0 0
  %1815 = vmatpush2.bf16.msra.mxu0 0
  %1816 = vmatprep.subr.bf16.mxu0 0
  %1817 = vmatpush2.bf16.msra.mxu0 0
  %1818 = vmatprep.subr.bf16.mxu0 0
  %1819 = vmatpush2.bf16.msra.mxu0 0
  %1820 = vmatprep.subr.bf16.mxu0 0
  %1821 = vmatpush2.bf16.msra.mxu0 0
  %1822 = vmatprep.mubr.bf16.mxu0 0
  %1823 = vmatmul.mubr.bf16.gmra.mxu0 %v1784
  %v1824 = vpop.f32.mrf.mxu0
  %v1825 = vadd.f32 0.0, %v1824
  %v1826 = vpop.f32.mrf.mxu0
  %v1827 = vpop.f32.mrf.mxu0
  %v1828 = vpop.f32.mrf.mxu0
  %1829 = vdwg.mxu0
  %v1831 = vsel %vm1758, %v1782, 0
  %v1834 = vsel %vm1786, %v1663, 0
  %1836 = vmatprep.subr.bf16.mxu0 0
  %1837 = vmatpush1.bf16.msra.mxu0 0
  %1838 = vmatprep.subr.bf16.mxu0 0
  %1839 = vmatpush1.bf16.msra.mxu0 0
  %1840 = vmatprep.subr.bf16.mxu0 0
  %1841 = vmatpush1.bf16.msra.mxu0 0
  %1842 = vmatprep.subr.bf16.mxu0 0
  %1843 = vmatpush1.bf16.msra.mxu0 0
  %1844 = vmatprep.subr.bf16.mxu0 0
  %1845 = vmatpush1.bf16.msra.mxu0 0
  %1846 = vmatprep.subr.bf16.mxu0 0
  %1847 = vmatpush1.bf16.msra.mxu0 0
  %1848 = vmatprep.subr.bf16.mxu0 0
  %1849 = vmatpush1.bf16.msra.mxu0 0
  %1850 = vmatprep.subr.bf16.mxu0 0
  %1851 = vmatpush1.bf16.msra.mxu0 %v1834
  %1852 = vmatprep.subr.bf16.mxu0 0
  %1853 = vmatpush2.bf16.msra.mxu0 0
  %1854 = vmatprep.subr.bf16.mxu0 0
  %1855 = vmatpush2.bf16.msra.mxu0 0
  %1856 = vmatprep.subr.bf16.mxu0 0
  %1857 = vmatpush2.bf16.msra.mxu0 0
  %1858 = vmatprep.subr.bf16.mxu0 0
  %1859 = vmatpush2.bf16.msra.mxu0 0
  %1860 = vmatprep.subr.bf16.mxu0 0
  %1861 = vmatpush2.bf16.msra.mxu0 0
  %1862 = vmatprep.subr.bf16.mxu0 0
  %1863 = vmatpush2.bf16.msra.mxu0 0
  %1864 = vmatprep.subr.bf16.mxu0 0
  %1865 = vmatpush2.bf16.msra.mxu0 0
  %1866 = vmatprep.subr.bf16.mxu0 0
  %1867 = vmatpush2.bf16.msra.mxu0 0
  %1868 = vmatprep.mubr.bf16.mxu0 0
  %1869 = vmatmul.mubr.bf16.gmra.mxu0 %v1831
  %v1870 = vpop.f32.mrf.mxu0
  %v1871 = vadd.f32 0.0, %v1870
  %v1872 = vpop.f32.mrf.mxu0
  %v1873 = vpop.f32.mrf.mxu0
  %v1874 = vpop.f32.mrf.mxu0
  %1875 = vdwg.mxu0
  %s1876 = scalar_lea.vmem %s11, 112
  %v1877 = vld [vmem:[%s1876] sm:$0xf]
  %v1878 = vld [vmem:[%s1876 + $0x4] sm:$0xf]
  %v1879 = vld [vmem:[%s1876 + $0x8] sm:$0xf]
  %v1880 = vld [vmem:[%s1876 + $0xc] sm:$0xf]
  %s1881 = scalar_lea.vmem %s12, 7
  %v1882 = vld [vmem:[%s1881] sm:$0x1]
  %v1883 = vpack.c.bf16 %v1871, %v1825
  %v1885 = vlaneseq
  %v1886 = vshrl.u32 %v1885, 7
  %v1887 = vsub.s32 0, %v1886
  %v1888 = vrot.slane %v1882, %v1887
  %v1894 = vunpack.c.l.b16 %v1877
  %v1895 = vunpack.c.l.b16 %v1878
  %v1896 = vunpack.c.l.b16 %v1879
  %v1897 = vunpack.c.l.b16 %v1880
  %v1898 = vpack.c.b16 %v1895, %v1894
  %v1899 = vpack.c.b16 %v1897, %v1896
  %v1903 = vsel %vm267, %v1883, 0
  %1905 = vmatprep.subr.bf16.mxu0 0
  %1906 = vmatpush1.bf16.msra.mxu0 0
  %1907 = vmatprep.subr.bf16.mxu0 0
  %1908 = vmatpush1.bf16.msra.mxu0 0
  %1909 = vmatprep.subr.bf16.mxu0 0
  %1910 = vmatpush1.bf16.msra.mxu0 0
  %1911 = vmatprep.subr.bf16.mxu0 0
  %1912 = vmatpush1.bf16.msra.mxu0 0
  %1913 = vmatprep.subr.bf16.mxu0 0
  %1914 = vmatpush1.bf16.msra.mxu0 0
  %1915 = vmatprep.subr.bf16.mxu0 0
  %1916 = vmatpush1.bf16.msra.mxu0 0
  %1917 = vmatprep.subr.bf16.mxu0 0
  %1918 = vmatpush1.bf16.msra.mxu0 %v1899
  %1919 = vmatprep.subr.bf16.mxu0 0
  %1920 = vmatpush1.bf16.msra.mxu0 %v1898
  %1921 = vmatprep.subr.bf16.mxu0 0
  %1922 = vmatpush2.bf16.msra.mxu0 0
  %1923 = vmatprep.subr.bf16.mxu0 0
  %1924 = vmatpush2.bf16.msra.mxu0 0
  %1925 = vmatprep.subr.bf16.mxu0 0
  %1926 = vmatpush2.bf16.msra.mxu0 0
  %1927 = vmatprep.subr.bf16.mxu0 0
  %1928 = vmatpush2.bf16.msra.mxu0 0
  %1929 = vmatprep.subr.bf16.mxu0 0
  %1930 = vmatpush2.bf16.msra.mxu0 0
  %1931 = vmatprep.subr.bf16.mxu0 0
  %1932 = vmatpush2.bf16.msra.mxu0 0
  %1933 = vmatprep.subr.bf16.mxu0 0
  %1934 = vmatpush2.bf16.msra.mxu0 0
  %1935 = vmatprep.subr.bf16.mxu0 0
  %1936 = vmatpush2.bf16.msra.mxu0 0
  %1937 = vmatprep.mubr.bf16.mxu0 0
  %1938 = vmatmul.mubr.bf16.gmra.mxu0 %v1903
  %v1939 = vpop.f32.mrf.mxu0
  %v1940 = vadd.f32 %v1888, %v1939
  %v1941 = vpop.f32.mrf.mxu0
  %v1942 = vpop.f32.mrf.mxu0
  %v1943 = vadd.f32 %v1888, %v1942
  %v1944 = vpop.f32.mrf.mxu0
  %1945 = vdwg.mxu0
  %v1946 = vadd.f32 %v1454, %v1940
  %v1947 = vadd.f32 %v1455, %v1943
  %v1948 = vsel %vm267, %v1946, 0.0
  %1949 = vadd.xlane.f32.xlu0 %v1948
  %v1950 = vpop.xlane.xlu0 %1949
  %v1951 = vsel %vm267, %v1947, 0.0
  %1952 = vadd.xlane.f32.xlu0 %v1951
  %v1953 = vpop.xlane.xlu0 %1952
  %v1954 = vmul.f32 %v1950, %v1417
  %v1955 = vmul.f32 %v1953, %v1417
  %v1956 = vsub.f32 %v1946, %v1954
  %v1957 = vsub.f32 %v1947, %v1955
  %v1958 = vmul.f32 %v1956, %v1956
  %v1959 = vmul.f32 %v1957, %v1957
  %v1960 = vsel %vm267, %v1958, 0.0
  %1961 = vadd.xlane.f32.xlu0 %v1960
  %v1962 = vpop.xlane.xlu0 %1961
  %v1963 = vsel %vm267, %v1959, 0.0
  %1964 = vadd.xlane.f32.xlu0 %v1963
  %v1965 = vpop.xlane.xlu0 %1964
  %v1966 = vmul.f32 %v1962, %v1417
  %v1967 = vmul.f32 %v1965, %v1417
  %v1968 = vadd.f32 %v1966, 1e-05
  %v1969 = vadd.f32 %v1967, 1e-05
  %v1970 = vrsqrt.pop %v1968
  %v1971 = vrsqrt.pop %v1969
  %v1972 = vmul.f32 %v1956, %v1970
  %v1973 = vmul.f32 %v1957, %v1971
  %s1974 = scalar_lea.vmem %s17, 1
  %v1975 = vld [vmem:[%s1974] sm:$0x1]
  %v1977 = vlaneseq
  %v1978 = vshrl.u32 %v1977, 7
  %v1979 = vsub.s32 0, %v1978
  %v1980 = vrot.slane %v1975, %v1979
  %v1982 = vmul.f32 %v1972, %v1980
  %v1983 = vmul.f32 %v1973, %v1980
  %s1984 = scalar_lea.vmem %s18, 1
  %v1985 = vld [vmem:[%s1984] sm:$0x1]
  %v1987 = vlaneseq
  %v1988 = vshrl.u32 %v1987, 7
  %v1989 = vsub.s32 0, %v1988
  %v1990 = vrot.slane %v1985, %v1989
  %v1992 = vadd.f32 %v1982, %v1990
  %v1993 = vadd.f32 %v1983, %v1990
  %v1994 = vld [vmem:[%s13] sm:$0xf]
  %v1995 = vld [vmem:[%s13 + $0x4] sm:$0xf]
  %v1996 = vld [vmem:[%s13 + $0x8] sm:$0xf]
  %v1997 = vld [vmem:[%s13 + $0xc] sm:$0xf]
  %v1998 = vld [vmem:[%s14] sm:$0x1]
  %v1999 = vpack.c.bf16 %v1993, %v1992
  %v2001 = vlaneseq
  %v2002 = vshrl.u32 %v2001, 7
  %v2003 = vsub.s32 0, %v2002
  %v2004 = vrot.slane %v1998, %v2003
  %v2010 = vunpack.c.l.b16 %v1994
  %v2011 = vunpack.c.l.b16 %v1995
  %v2012 = vunpack.c.l.b16 %v1996
  %v2013 = vunpack.c.l.b16 %v1997
  %v2014 = vpack.c.b16 %v2011, %v2010
  %v2015 = vpack.c.b16 %v2013, %v2012
  %v2019 = vsel %vm267, %v1999, 0
  %2021 = vmatprep.subr.bf16.mxu0 0
  %2022 = vmatpush1.bf16.msra.mxu0 0
  %2023 = vmatprep.subr.bf16.mxu0 0
  %2024 = vmatpush1.bf16.msra.mxu0 0
  %2025 = vmatprep.subr.bf16.mxu0 0
  %2026 = vmatpush1.bf16.msra.mxu0 0
  %2027 = vmatprep.subr.bf16.mxu0 0
  %2028 = vmatpush1.bf16.msra.mxu0 0
  %2029 = vmatprep.subr.bf16.mxu0 0
  %2030 = vmatpush1.bf16.msra.mxu0 0
  %2031 = vmatprep.subr.bf16.mxu0 0
  %2032 = vmatpush1.bf16.msra.mxu0 0
  %2033 = vmatprep.subr.bf16.mxu0 0
  %2034 = vmatpush1.bf16.msra.mxu0 %v2015
  %2035 = vmatprep.subr.bf16.mxu0 0
  %2036 = vmatpush1.bf16.msra.mxu0 %v2014
  %2037 = vmatprep.subr.bf16.mxu0 0
  %2038 = vmatpush2.bf16.msra.mxu0 0
  %2039 = vmatprep.subr.bf16.mxu0 0
  %2040 = vmatpush2.bf16.msra.mxu0 0
  %2041 = vmatprep.subr.bf16.mxu0 0
  %2042 = vmatpush2.bf16.msra.mxu0 0
  %2043 = vmatprep.subr.bf16.mxu0 0
  %2044 = vmatpush2.bf16.msra.mxu0 0
  %2045 = vmatprep.subr.bf16.mxu0 0
  %2046 = vmatpush2.bf16.msra.mxu0 0
  %2047 = vmatprep.subr.bf16.mxu0 0
  %2048 = vmatpush2.bf16.msra.mxu0 0
  %2049 = vmatprep.subr.bf16.mxu0 0
  %2050 = vmatpush2.bf16.msra.mxu0 0
  %2051 = vmatprep.subr.bf16.mxu0 0
  %2052 = vmatpush2.bf16.msra.mxu0 0
  %2053 = vmatprep.mubr.bf16.mxu0 0
  %2054 = vmatmul.mubr.bf16.gmra.mxu0 %v2019
  %v2055 = vpop.f32.mrf.mxu0
  %v2056 = vadd.f32 %v2004, %v2055
  %v2057 = vpop.f32.mrf.mxu0
  %v2058 = vpop.f32.mrf.mxu0
  %v2059 = vadd.f32 %v2004, %v2058
  %v2060 = vpop.f32.mrf.mxu0
  %2061 = vdwg.mxu0
  %v2062 = vmax.f32 %v2056, 0.0
  %v2063 = vmax.f32 %v2059, 0.0
  %v2064 = vld [vmem:[%s15] sm:$0xf]
  %v2065 = vld [vmem:[%s15 + $0x4] sm:$0xf]
  %v2066 = vld [vmem:[%s15 + $0x8] sm:$0xf]
  %v2067 = vld [vmem:[%s15 + $0xc] sm:$0xf]
  %v2068 = vld [vmem:[%s15 + $0x10] sm:$0xf]
  %v2069 = vld [vmem:[%s15 + $0x14] sm:$0xf]
  %v2070 = vld [vmem:[%s15 + $0x18] sm:$0xf]
  %v2071 = vld [vmem:[%s15 + $0x1c] sm:$0xf]
  %v2072 = vld [vmem:[%s16] sm:$0x1]
  %v2073 = vpack.c.bf16 %v2063, %v2062
  %v2075 = vlaneseq
  %v2076 = vshrl.u32 %v2075, 7
  %v2077 = vsub.s32 0, %v2076
  %v2078 = vrot.slane %v2072, %v2077
  %v2088 = vunpack.c.l.b16 %v2064
  %v2089 = vunpack.c.l.b16 %v2065
  %v2090 = vunpack.c.l.b16 %v2066
  %v2091 = vunpack.c.l.b16 %v2067
  %v2092 = vunpack.c.l.b16 %v2068
  %v2093 = vunpack.c.l.b16 %v2069
  %v2094 = vunpack.c.l.b16 %v2070
  %v2095 = vunpack.c.l.b16 %v2071
  %v2096 = vpack.c.b16 %v2089, %v2088
  %v2097 = vpack.c.b16 %v2091, %v2090
  %v2098 = vpack.c.b16 %v2093, %v2092
  %v2099 = vpack.c.b16 %v2095, %v2094
  %vm2104 = vcmask 523264
  %v2106 = vsel %vm2104, %v2073, 0
  %2108 = vmatprep.subr.bf16.mxu0 0
  %2109 = vmatpush1.bf16.msra.mxu0 0
  %2110 = vmatprep.subr.bf16.mxu0 0
  %2111 = vmatpush1.bf16.msra.mxu0 0
  %2112 = vmatprep.subr.bf16.mxu0 0
  %2113 = vmatpush1.bf16.msra.mxu0 0
  %2114 = vmatprep.subr.bf16.mxu0 0
  %2115 = vmatpush1.bf16.msra.mxu0 0
  %2116 = vmatprep.subr.bf16.mxu0 0
  %2117 = vmatpush1.bf16.msra.mxu0 %v2099
  %2118 = vmatprep.subr.bf16.mxu0 0
  %2119 = vmatpush1.bf16.msra.mxu0 %v2098
  %2120 = vmatprep.subr.bf16.mxu0 0
  %2121 = vmatpush1.bf16.msra.mxu0 %v2097
  %2122 = vmatprep.subr.bf16.mxu0 0
  %2123 = vmatpush1.bf16.msra.mxu0 %v2096
  %2124 = vmatprep.subr.bf16.mxu0 0
  %2125 = vmatpush2.bf16.msra.mxu0 0
  %2126 = vmatprep.subr.bf16.mxu0 0
  %2127 = vmatpush2.bf16.msra.mxu0 0
  %2128 = vmatprep.subr.bf16.mxu0 0
  %2129 = vmatpush2.bf16.msra.mxu0 0
  %2130 = vmatprep.subr.bf16.mxu0 0
  %2131 = vmatpush2.bf16.msra.mxu0 0
  %2132 = vmatprep.subr.bf16.mxu0 0
  %2133 = vmatpush2.bf16.msra.mxu0 0
  %2134 = vmatprep.subr.bf16.mxu0 0
  %2135 = vmatpush2.bf16.msra.mxu0 0
  %2136 = vmatprep.subr.bf16.mxu0 0
  %2137 = vmatpush2.bf16.msra.mxu0 0
  %2138 = vmatprep.subr.bf16.mxu0 0
  %2139 = vmatpush2.bf16.msra.mxu0 0
  %2140 = vmatprep.mubr.bf16.mxu0 0
  %2141 = vmatmul.mubr.bf16.gmra.mxu0 %v2106
  %v2142 = vpop.f32.mrf.mxu0
  %v2143 = vadd.f32 %v2078, %v2142
  %v2144 = vpop.f32.mrf.mxu0
  %v2145 = vpop.f32.mrf.mxu0
  %v2146 = vadd.f32 %v2078, %v2145
  %v2147 = vpop.f32.mrf.mxu0
  %2148 = vdwg.mxu0
  %v2149 = vadd.f32 %v1992, %v2143
  %v2150 = vadd.f32 %v1993, %v2146
  %v2151 = vsel %vm267, %v2149, 0.0
  %2152 = vadd.xlane.f32.xlu0 %v2151
  %v2153 = vpop.xlane.xlu0 %2152
  %v2154 = vsel %vm267, %v2150, 0.0
  %2155 = vadd.xlane.f32.xlu0 %v2154
  %v2156 = vpop.xlane.xlu0 %2155
  %v2157 = vmul.f32 %v2153, %v1417
  %v2158 = vmul.f32 %v2156, %v1417
  %v2159 = vsub.f32 %v2149, %v2157
  %v2160 = vsub.f32 %v2150, %v2158
  %v2161 = vmul.f32 %v2159, %v2159
  %v2162 = vmul.f32 %v2160, %v2160
  %v2163 = vsel %vm267, %v2161, 0.0
  %2164 = vadd.xlane.f32.xlu0 %v2163
  %v2165 = vpop.xlane.xlu0 %2164
  %v2166 = vsel %vm267, %v2162, 0.0
  %2167 = vadd.xlane.f32.xlu0 %v2166
  %v2168 = vpop.xlane.xlu0 %2167
  %v2169 = vmul.f32 %v2165, %v1417
  %v2170 = vmul.f32 %v2168, %v1417
  %v2171 = vadd.f32 %v2169, 1e-05
  %v2172 = vadd.f32 %v2170, 1e-05
  %v2173 = vrsqrt.pop %v2171
  %v2174 = vrsqrt.pop %v2172
  %v2175 = vmul.f32 %v2159, %v2173
  %v2176 = vmul.f32 %v2160, %v2174
  %s2177 = scalar_lea.vmem %s17, 2
  %v2178 = vld [vmem:[%s2177] sm:$0x1]
  %v2180 = vlaneseq
  %v2181 = vshrl.u32 %v2180, 7
  %v2182 = vsub.s32 0, %v2181
  %v2183 = vrot.slane %v2178, %v2182
  %v2185 = vmul.f32 %v2175, %v2183
  %v2186 = vmul.f32 %v2176, %v2183
  %s2187 = scalar_lea.vmem %s18, 2
  %v2188 = vld [vmem:[%s2187] sm:$0x1]
  %v2190 = vlaneseq
  %v2191 = vshrl.u32 %v2190, 7
  %v2192 = vsub.s32 0, %v2191
  %v2193 = vrot.slane %v2188, %v2192
  %v2195 = vadd.f32 %v2185, %v2193
  %v2196 = vadd.f32 %v2186, %v2193
  %s2197 = scalar_lea.vmem %s10, 1
  %v2198 = vld [vmem:[%s2197] sm:$0x1]
  %v2200 = vlaneseq
  %v2201 = vshrl.u32 %v2200, 7
  %v2202 = vsub.s32 0, %v2201
  %v2203 = vrot.slane %v2198, %v2202
  %v2205 = vadd.f32 %v876, %v2203
  %v2206 = vadd.f32 %v877, %v2203
  %v2207 = vadd.f32 %v878, %v2203
  %v2208 = vadd.f32 %v879, %v2203
  %v2209 = vadd.f32 %v880, %v2203
  %v2210 = vadd.f32 %v881, %v2203
  %v2211 = vadd.f32 %v882, %v2203
  %v2212 = vadd.f32 %v883, %v2203
  %v2213 = vadd.f32 %v884, %v2203
  %v2214 = vadd.f32 %v885, %v2203
  %v2215 = vadd.f32 %v886, %v2203
  %v2216 = vadd.f32 %v887, %v2203
  %v2217 = vadd.f32 %v888, %v2203
  %v2218 = vadd.f32 %v889, %v2203
  %v2219 = vadd.f32 %v890, %v2203
  %v2220 = vadd.f32 %v891, %v2203
  %s2221 = scalar_lea.vmem %s11, 128
  %v2222 = vld [vmem:[%s2221] sm:$0xf]
  %v2223 = vld [vmem:[%s2221 + $0x4] sm:$0xf]
  %v2224 = vld [vmem:[%s2221 + $0x8] sm:$0xf]
  %v2225 = vld [vmem:[%s2221 + $0xc] sm:$0xf]
  %s2226 = scalar_lea.vmem %s12, 8
  %v2227 = vld [vmem:[%s2226] sm:$0x1]
  %v2228 = vpack.c.bf16 %v2196, %v2195
  %v2230 = vlaneseq
  %v2231 = vshrl.u32 %v2230, 7
  %v2232 = vsub.s32 0, %v2231
  %v2233 = vrot.slane %v2227, %v2232
  %v2239 = vunpack.c.l.b16 %v2222
  %v2240 = vunpack.c.l.b16 %v2223
  %v2241 = vunpack.c.l.b16 %v2224
  %v2242 = vunpack.c.l.b16 %v2225
  %v2243 = vpack.c.b16 %v2240, %v2239
  %v2244 = vpack.c.b16 %v2242, %v2241
  %v2248 = vsel %vm267, %v2228, 0
  %2250 = vmatprep.subr.bf16.mxu0 0
  %2251 = vmatpush1.bf16.msra.mxu0 0
  %2252 = vmatprep.subr.bf16.mxu0 0
  %2253 = vmatpush1.bf16.msra.mxu0 0
  %2254 = vmatprep.subr.bf16.mxu0 0
  %2255 = vmatpush1.bf16.msra.mxu0 0
  %2256 = vmatprep.subr.bf16.mxu0 0
  %2257 = vmatpush1.bf16.msra.mxu0 0
  %2258 = vmatprep.subr.bf16.mxu0 0
  %2259 = vmatpush1.bf16.msra.mxu0 0
  %2260 = vmatprep.subr.bf16.mxu0 0
  %2261 = vmatpush1.bf16.msra.mxu0 0
  %2262 = vmatprep.subr.bf16.mxu0 0
  %2263 = vmatpush1.bf16.msra.mxu0 %v2244
  %2264 = vmatprep.subr.bf16.mxu0 0
  %2265 = vmatpush1.bf16.msra.mxu0 %v2243
  %2266 = vmatprep.subr.bf16.mxu0 0
  %2267 = vmatpush2.bf16.msra.mxu0 0
  %2268 = vmatprep.subr.bf16.mxu0 0
  %2269 = vmatpush2.bf16.msra.mxu0 0
  %2270 = vmatprep.subr.bf16.mxu0 0
  %2271 = vmatpush2.bf16.msra.mxu0 0
  %2272 = vmatprep.subr.bf16.mxu0 0
  %2273 = vmatpush2.bf16.msra.mxu0 0
  %2274 = vmatprep.subr.bf16.mxu0 0
  %2275 = vmatpush2.bf16.msra.mxu0 0
  %2276 = vmatprep.subr.bf16.mxu0 0
  %2277 = vmatpush2.bf16.msra.mxu0 0
  %2278 = vmatprep.subr.bf16.mxu0 0
  %2279 = vmatpush2.bf16.msra.mxu0 0
  %2280 = vmatprep.subr.bf16.mxu0 0
  %2281 = vmatpush2.bf16.msra.mxu0 0
  %2282 = vmatprep.mubr.bf16.mxu0 0
  %2283 = vmatmul.mubr.bf16.gmra.mxu0 %v2248
  %v2284 = vpop.f32.mrf.mxu0
  %v2285 = vadd.f32 %v2233, %v2284
  %v2286 = vpop.f32.mrf.mxu0
  %v2287 = vpop.f32.mrf.mxu0
  %v2288 = vadd.f32 %v2233, %v2287
  %v2289 = vpop.f32.mrf.mxu0
  %2290 = vdwg.mxu0
  %s2291 = scalar_lea.vmem %s11, 144
  %v2292 = vld [vmem:[%s2291] sm:$0xf]
  %v2293 = vld [vmem:[%s2291 + $0x4] sm:$0xf]
  %v2294 = vld [vmem:[%s2291 + $0x8] sm:$0xf]
  %v2295 = vld [vmem:[%s2291 + $0xc] sm:$0xf]
  %s2296 = scalar_lea.vmem %s12, 9
  %v2297 = vld [vmem:[%s2296] sm:$0x1]
  %v2298 = vpack.c.bf16 %v2206, %v2205
  %v2299 = vpack.c.bf16 %v2208, %v2207
  %v2300 = vpack.c.bf16 %v2210, %v2209
  %v2301 = vpack.c.bf16 %v2212, %v2211
  %v2302 = vpack.c.bf16 %v2214, %v2213
  %v2303 = vpack.c.bf16 %v2216, %v2215
  %v2304 = vpack.c.bf16 %v2218, %v2217
  %v2305 = vpack.c.bf16 %v2220, %v2219
  %v2307 = vlaneseq
  %v2308 = vshrl.u32 %v2307, 7
  %v2309 = vsub.s32 0, %v2308
  %v2310 = vrot.slane %v2297, %v2309
  %v2316 = vunpack.c.l.b16 %v2292
  %v2317 = vunpack.c.l.b16 %v2293
  %v2318 = vunpack.c.l.b16 %v2294
  %v2319 = vunpack.c.l.b16 %v2295
  %v2320 = vpack.c.b16 %v2317, %v2316
  %v2321 = vpack.c.b16 %v2319, %v2318
  %v2325 = vsel %vm267, %v2298, 0
  %v2328 = vsel %vm267, %v2299, 0
  %v2331 = vsel %vm267, %v2300, 0
  %v2334 = vsel %vm267, %v2301, 0
  %v2337 = vsel %vm267, %v2302, 0
  %v2340 = vsel %vm267, %v2303, 0
  %v2343 = vsel %vm267, %v2304, 0
  %v2346 = vsel %vm267, %v2305, 0
  %2348 = vmatprep.subr.bf16.mxu0 0
  %2349 = vmatpush1.bf16.msra.mxu0 0
  %2350 = vmatprep.subr.bf16.mxu0 0
  %2351 = vmatpush1.bf16.msra.mxu0 0
  %2352 = vmatprep.subr.bf16.mxu0 0
  %2353 = vmatpush1.bf16.msra.mxu0 0
  %2354 = vmatprep.subr.bf16.mxu0 0
  %2355 = vmatpush1.bf16.msra.mxu0 0
  %2356 = vmatprep.subr.bf16.mxu0 0
  %2357 = vmatpush1.bf16.msra.mxu0 0
  %2358 = vmatprep.subr.bf16.mxu0 0
  %2359 = vmatpush1.bf16.msra.mxu0 0
  %2360 = vmatprep.subr.bf16.mxu0 0
  %2361 = vmatpush1.bf16.msra.mxu0 %v2321
  %2362 = vmatprep.subr.bf16.mxu0 0
  %2363 = vmatpush1.bf16.msra.mxu0 %v2320
  %2364 = vmatprep.subr.bf16.mxu0 0
  %2365 = vmatpush2.bf16.msra.mxu0 0
  %2366 = vmatprep.subr.bf16.mxu0 0
  %2367 = vmatpush2.bf16.msra.mxu0 0
  %2368 = vmatprep.subr.bf16.mxu0 0
  %2369 = vmatpush2.bf16.msra.mxu0 0
  %2370 = vmatprep.subr.bf16.mxu0 0
  %2371 = vmatpush2.bf16.msra.mxu0 0
  %2372 = vmatprep.subr.bf16.mxu0 0
  %2373 = vmatpush2.bf16.msra.mxu0 0
  %2374 = vmatprep.subr.bf16.mxu0 0
  %2375 = vmatpush2.bf16.msra.mxu0 0
  %2376 = vmatprep.subr.bf16.mxu0 0
  %2377 = vmatpush2.bf16.msra.mxu0 0
  %2378 = vmatprep.subr.bf16.mxu0 0
  %2379 = vmatpush2.bf16.msra.mxu0 0
  %2380 = vmatprep.mubr.bf16.mxu0 0
  %2381 = vmatmul.mubr.bf16.gmra.mxu0 %v2325
  %v2382 = vpop.f32.mrf.mxu0
  %v2383 = vadd.f32 %v2310, %v2382
  %v2384 = vpop.f32.mrf.mxu0
  %v2385 = vpop.f32.mrf.mxu0
  %v2386 = vadd.f32 %v2310, %v2385
  %v2387 = vpop.f32.mrf.mxu0
  %2388 = vmatprep.mubr.bf16.mxu0 0
  %2389 = vmatmul.mubr.bf16.gmra.mxu0 %v2328
  %v2390 = vpop.f32.mrf.mxu0
  %v2391 = vadd.f32 %v2310, %v2390
  %v2392 = vpop.f32.mrf.mxu0
  %v2393 = vpop.f32.mrf.mxu0
  %v2394 = vadd.f32 %v2310, %v2393
  %v2395 = vpop.f32.mrf.mxu0
  %2396 = vmatprep.mubr.bf16.mxu0 0
  %2397 = vmatmul.mubr.bf16.gmra.mxu0 %v2331
  %v2398 = vpop.f32.mrf.mxu0
  %v2399 = vadd.f32 %v2310, %v2398
  %v2400 = vpop.f32.mrf.mxu0
  %v2401 = vpop.f32.mrf.mxu0
  %v2402 = vadd.f32 %v2310, %v2401
  %v2403 = vpop.f32.mrf.mxu0
  %2404 = vmatprep.mubr.bf16.mxu0 0
  %2405 = vmatmul.mubr.bf16.gmra.mxu0 %v2334
  %v2406 = vpop.f32.mrf.mxu0
  %v2407 = vadd.f32 %v2310, %v2406
  %v2408 = vpop.f32.mrf.mxu0
  %v2409 = vpop.f32.mrf.mxu0
  %v2410 = vadd.f32 %v2310, %v2409
  %v2411 = vpop.f32.mrf.mxu0
  %2412 = vmatprep.mubr.bf16.mxu0 0
  %2413 = vmatmul.mubr.bf16.gmra.mxu0 %v2337
  %v2414 = vpop.f32.mrf.mxu0
  %v2415 = vadd.f32 %v2310, %v2414
  %v2416 = vpop.f32.mrf.mxu0
  %v2417 = vpop.f32.mrf.mxu0
  %v2418 = vadd.f32 %v2310, %v2417
  %v2419 = vpop.f32.mrf.mxu0
  %2420 = vmatprep.mubr.bf16.mxu0 0
  %2421 = vmatmul.mubr.bf16.gmra.mxu0 %v2340
  %v2422 = vpop.f32.mrf.mxu0
  %v2423 = vadd.f32 %v2310, %v2422
  %v2424 = vpop.f32.mrf.mxu0
  %v2425 = vpop.f32.mrf.mxu0
  %v2426 = vadd.f32 %v2310, %v2425
  %v2427 = vpop.f32.mrf.mxu0
  %2428 = vmatprep.mubr.bf16.mxu0 0
  %2429 = vmatmul.mubr.bf16.gmra.mxu0 %v2343
  %v2430 = vpop.f32.mrf.mxu0
  %v2431 = vadd.f32 %v2310, %v2430
  %v2432 = vpop.f32.mrf.mxu0
  %v2433 = vpop.f32.mrf.mxu0
  %v2434 = vadd.f32 %v2310, %v2433
  %v2435 = vpop.f32.mrf.mxu0
  %2436 = vmatprep.mubr.bf16.mxu0 0
  %2437 = vmatmul.mubr.bf16.gmra.mxu0 %v2346
  %v2438 = vpop.f32.mrf.mxu0
  %v2439 = vadd.f32 %v2310, %v2438
  %v2440 = vpop.f32.mrf.mxu0
  %v2441 = vpop.f32.mrf.mxu0
  %v2442 = vadd.f32 %v2310, %v2441
  %v2443 = vpop.f32.mrf.mxu0
  %2444 = vdwg.mxu0
  %s2445 = scalar_lea.vmem %s11, 160
  %v2446 = vld [vmem:[%s2445] sm:$0xf]
  %v2447 = vld [vmem:[%s2445 + $0x4] sm:$0xf]
  %v2448 = vld [vmem:[%s2445 + $0x8] sm:$0xf]
  %v2449 = vld [vmem:[%s2445 + $0xc] sm:$0xf]
  %s2450 = scalar_lea.vmem %s12, 10
  %v2451 = vld [vmem:[%s2450] sm:$0x1]
  %v2453 = vlaneseq
  %v2454 = vshrl.u32 %v2453, 7
  %v2455 = vsub.s32 0, %v2454
  %v2456 = vrot.slane %v2451, %v2455
  %v2462 = vunpack.c.l.b16 %v2446
  %v2463 = vunpack.c.l.b16 %v2447
  %v2464 = vunpack.c.l.b16 %v2448
  %v2465 = vunpack.c.l.b16 %v2449
  %v2466 = vpack.c.b16 %v2463, %v2462
  %v2467 = vpack.c.b16 %v2465, %v2464
  %2470 = vmatprep.subr.bf16.mxu0 0
  %2471 = vmatpush1.bf16.msra.mxu0 0
  %2472 = vmatprep.subr.bf16.mxu0 0
  %2473 = vmatpush1.bf16.msra.mxu0 0
  %2474 = vmatprep.subr.bf16.mxu0 0
  %2475 = vmatpush1.bf16.msra.mxu0 0
  %2476 = vmatprep.subr.bf16.mxu0 0
  %2477 = vmatpush1.bf16.msra.mxu0 0
  %2478 = vmatprep.subr.bf16.mxu0 0
  %2479 = vmatpush1.bf16.msra.mxu0 0
  %2480 = vmatprep.subr.bf16.mxu0 0
  %2481 = vmatpush1.bf16.msra.mxu0 0
  %2482 = vmatprep.subr.bf16.mxu0 0
  %2483 = vmatpush1.bf16.msra.mxu0 %v2467
  %2484 = vmatprep.subr.bf16.mxu0 0
  %2485 = vmatpush1.bf16.msra.mxu0 %v2466
  %2486 = vmatprep.subr.bf16.mxu0 0
  %2487 = vmatpush2.bf16.msra.mxu0 0
  %2488 = vmatprep.subr.bf16.mxu0 0
  %2489 = vmatpush2.bf16.msra.mxu0 0
  %2490 = vmatprep.subr.bf16.mxu0 0
  %2491 = vmatpush2.bf16.msra.mxu0 0
  %2492 = vmatprep.subr.bf16.mxu0 0
  %2493 = vmatpush2.bf16.msra.mxu0 0
  %2494 = vmatprep.subr.bf16.mxu0 0
  %2495 = vmatpush2.bf16.msra.mxu0 0
  %2496 = vmatprep.subr.bf16.mxu0 0
  %2497 = vmatpush2.bf16.msra.mxu0 0
  %2498 = vmatprep.subr.bf16.mxu0 0
  %2499 = vmatpush2.bf16.msra.mxu0 0
  %2500 = vmatprep.subr.bf16.mxu0 0
  %2501 = vmatpush2.bf16.msra.mxu0 0
  %2502 = vmatprep.mubr.bf16.mxu0 0
  %2503 = vmatmul.mubr.bf16.gmra.mxu0 %v2325
  %v2504 = vpop.f32.mrf.mxu0
  %v2505 = vadd.f32 %v2456, %v2504
  %v2506 = vpop.f32.mrf.mxu0
  %v2507 = vpop.f32.mrf.mxu0
  %v2508 = vadd.f32 %v2456, %v2507
  %v2509 = vpop.f32.mrf.mxu0
  %2510 = vmatprep.mubr.bf16.mxu0 0
  %2511 = vmatmul.mubr.bf16.gmra.mxu0 %v2328
  %v2512 = vpop.f32.mrf.mxu0
  %v2513 = vadd.f32 %v2456, %v2512
  %v2514 = vpop.f32.mrf.mxu0
  %v2515 = vpop.f32.mrf.mxu0
  %v2516 = vadd.f32 %v2456, %v2515
  %v2517 = vpop.f32.mrf.mxu0
  %2518 = vmatprep.mubr.bf16.mxu0 0
  %2519 = vmatmul.mubr.bf16.gmra.mxu0 %v2331
  %v2520 = vpop.f32.mrf.mxu0
  %v2521 = vadd.f32 %v2456, %v2520
  %v2522 = vpop.f32.mrf.mxu0
  %v2523 = vpop.f32.mrf.mxu0
  %v2524 = vadd.f32 %v2456, %v2523
  %v2525 = vpop.f32.mrf.mxu0
  %2526 = vmatprep.mubr.bf16.mxu0 0
  %2527 = vmatmul.mubr.bf16.gmra.mxu0 %v2334
  %v2528 = vpop.f32.mrf.mxu0
  %v2529 = vadd.f32 %v2456, %v2528
  %v2530 = vpop.f32.mrf.mxu0
  %v2531 = vpop.f32.mrf.mxu0
  %v2532 = vadd.f32 %v2456, %v2531
  %v2533 = vpop.f32.mrf.mxu0
  %2534 = vmatprep.mubr.bf16.mxu0 0
  %2535 = vmatmul.mubr.bf16.gmra.mxu0 %v2337
  %v2536 = vpop.f32.mrf.mxu0
  %v2537 = vadd.f32 %v2456, %v2536
  %v2538 = vpop.f32.mrf.mxu0
  %v2539 = vpop.f32.mrf.mxu0
  %v2540 = vadd.f32 %v2456, %v2539
  %v2541 = vpop.f32.mrf.mxu0
  %2542 = vmatprep.mubr.bf16.mxu0 0
  %2543 = vmatmul.mubr.bf16.gmra.mxu0 %v2340
  %v2544 = vpop.f32.mrf.mxu0
  %v2545 = vadd.f32 %v2456, %v2544
  %v2546 = vpop.f32.mrf.mxu0
  %v2547 = vpop.f32.mrf.mxu0
  %v2548 = vadd.f32 %v2456, %v2547
  %v2549 = vpop.f32.mrf.mxu0
  %2550 = vmatprep.mubr.bf16.mxu0 0
  %2551 = vmatmul.mubr.bf16.gmra.mxu0 %v2343
  %v2552 = vpop.f32.mrf.mxu0
  %v2553 = vadd.f32 %v2456, %v2552
  %v2554 = vpop.f32.mrf.mxu0
  %v2555 = vpop.f32.mrf.mxu0
  %v2556 = vadd.f32 %v2456, %v2555
  %v2557 = vpop.f32.mrf.mxu0
  %2558 = vmatprep.mubr.bf16.mxu0 0
  %2559 = vmatmul.mubr.bf16.gmra.mxu0 %v2346
  %v2560 = vpop.f32.mrf.mxu0
  %v2561 = vadd.f32 %v2456, %v2560
  %v2562 = vpop.f32.mrf.mxu0
  %v2563 = vpop.f32.mrf.mxu0
  %v2564 = vadd.f32 %v2456, %v2563
  %v2565 = vpop.f32.mrf.mxu0
  %2566 = vdwg.mxu0
  %v2567 = vpack.c.bf16 %v2285, %v2285
  %v2568 = vpack.c.bf16 %v2288, %v2288
  %v2569 = vpack.c.bf16 %v2386, %v2383
  %v2570 = vpack.c.bf16 %v2394, %v2391
  %v2571 = vpack.c.bf16 %v2402, %v2399
  %v2572 = vpack.c.bf16 %v2410, %v2407
  %v2573 = vpack.c.bf16 %v2418, %v2415
  %v2574 = vpack.c.bf16 %v2426, %v2423
  %v2575 = vpack.c.bf16 %v2434, %v2431
  %v2576 = vpack.c.bf16 %v2442, %v2439
  %v2577 = vpack.c.bf16 %v2508, %v2505
  %v2578 = vpack.c.bf16 %v2516, %v2513
  %v2579 = vpack.c.bf16 %v2524, %v2521
  %v2580 = vpack.c.bf16 %v2532, %v2529
  %v2581 = vpack.c.bf16 %v2540, %v2537
  %v2582 = vpack.c.bf16 %v2548, %v2545
  %v2583 = vpack.c.bf16 %v2556, %v2553
  %v2584 = vpack.c.bf16 %v2564, %v2561
  %v2586 = vsel %vm267, %v2567, 0
  %v2589 = vsel %vm267, %v2569, 0
  %v2592 = vsel %vm267, %v2570, 0
  %v2595 = vsel %vm267, %v2571, 0
  %v2598 = vsel %vm267, %v2572, 0
  %2600 = vmatprep.subr.bf16.mxu0 0
  %2601 = vmatpush1.bf16.xpose.msra.mxu0 0
  %2602 = vmatprep.subr.bf16.mxu0 0
  %2603 = vmatpush1.bf16.xpose.msra.mxu0 0
  %2604 = vmatprep.subr.bf16.mxu0 0
  %2605 = vmatpush1.bf16.xpose.msra.mxu0 0
  %2606 = vmatprep.subr.bf16.mxu0 0
  %2607 = vmatpush1.bf16.xpose.msra.mxu0 0
  %2608 = vmatprep.subr.bf16.mxu0 0
  %2609 = vmatpush1.bf16.xpose.msra.mxu0 %v2598
  %2610 = vmatprep.subr.bf16.mxu0 0
  %2611 = vmatpush1.bf16.xpose.msra.mxu0 %v2595
  %2612 = vmatprep.subr.bf16.mxu0 0
  %2613 = vmatpush1.bf16.xpose.msra.mxu0 %v2592
  %2614 = vmatprep.subr.bf16.mxu0 0
  %2615 = vmatpush1.bf16.xpose.msra.mxu0 %v2589
  %2616 = vmatprep.subr.bf16.mxu0 0
  %2617 = vmatpush2.bf16.xpose.msra.mxu0 0
  %2618 = vmatprep.subr.bf16.mxu0 0
  %2619 = vmatpush2.bf16.xpose.msra.mxu0 0
  %2620 = vmatprep.subr.bf16.mxu0 0
  %2621 = vmatpush2.bf16.xpose.msra.mxu0 0
  %2622 = vmatprep.subr.bf16.mxu0 0
  %2623 = vmatpush2.bf16.xpose.msra.mxu0 0
  %2624 = vmatprep.subr.bf16.mxu0 0
  %2625 = vmatpush2.bf16.xpose.msra.mxu0 0
  %2626 = vmatprep.subr.bf16.mxu0 0
  %2627 = vmatpush2.bf16.xpose.msra.mxu0 0
  %2628 = vmatprep.subr.bf16.mxu0 0
  %2629 = vmatpush2.bf16.xpose.msra.mxu0 0
  %2630 = vmatprep.subr.bf16.mxu0 0
  %2631 = vmatpush2.bf16.xpose.msra.mxu0 0
  %2632 = vmatprep.mubr.bf16.mxu0 0
  %2633 = vmatmul.mubr.bf16.gmra.mxu0 %v2586
  %v2634 = vpop.f32.mrf.mxu0
  %v2635 = vadd.f32 0.0, %v2634
  %v2636 = vpop.f32.mrf.mxu0
  %v2637 = vpop.f32.mrf.mxu0
  %v2638 = vpop.f32.mrf.mxu0
  %2639 = vdwg.mxu0
  %v2641 = vsel %vm267, %v2568, 0
  %v2644 = vsel %vm267, %v2573, 0
  %v2647 = vsel %vm267, %v2574, 0
  %v2650 = vsel %vm267, %v2575, 0
  %v2653 = vsel %vm267, %v2576, 0
  %2655 = vmatprep.subr.bf16.mxu0 0
  %2656 = vmatpush1.bf16.xpose.msra.mxu0 0
  %2657 = vmatprep.subr.bf16.mxu0 0
  %2658 = vmatpush1.bf16.xpose.msra.mxu0 0
  %2659 = vmatprep.subr.bf16.mxu0 0
  %2660 = vmatpush1.bf16.xpose.msra.mxu0 0
  %2661 = vmatprep.subr.bf16.mxu0 0
  %2662 = vmatpush1.bf16.xpose.msra.mxu0 0
  %2663 = vmatprep.subr.bf16.mxu0 0
  %2664 = vmatpush1.bf16.xpose.msra.mxu0 %v2653
  %2665 = vmatprep.subr.bf16.mxu0 0
  %2666 = vmatpush1.bf16.xpose.msra.mxu0 %v2650
  %2667 = vmatprep.subr.bf16.mxu0 0
  %2668 = vmatpush1.bf16.xpose.msra.mxu0 %v2647
  %2669 = vmatprep.subr.bf16.mxu0 0
  %2670 = vmatpush1.bf16.xpose.msra.mxu0 %v2644
  %2671 = vmatprep.subr.bf16.mxu0 0
  %2672 = vmatpush2.bf16.xpose.msra.mxu0 0
  %2673 = vmatprep.subr.bf16.mxu0 0
  %2674 = vmatpush2.bf16.xpose.msra.mxu0 0
  %2675 = vmatprep.subr.bf16.mxu0 0
  %2676 = vmatpush2.bf16.xpose.msra.mxu0 0
  %2677 = vmatprep.subr.bf16.mxu0 0
  %2678 = vmatpush2.bf16.xpose.msra.mxu0 0
  %2679 = vmatprep.subr.bf16.mxu0 0
  %2680 = vmatpush2.bf16.xpose.msra.mxu0 0
  %2681 = vmatprep.subr.bf16.mxu0 0
  %2682 = vmatpush2.bf16.xpose.msra.mxu0 0
  %2683 = vmatprep.subr.bf16.mxu0 0
  %2684 = vmatpush2.bf16.xpose.msra.mxu0 0
  %2685 = vmatprep.subr.bf16.mxu0 0
  %2686 = vmatpush2.bf16.xpose.msra.mxu0 0
  %2687 = vmatprep.mubr.bf16.mxu0 0
  %2688 = vmatmul.mubr.bf16.gmra.mxu0 %v2641
  %v2689 = vpop.f32.mrf.mxu0
  %v2690 = vadd.f32 0.0, %v2689
  %v2691 = vpop.f32.mrf.mxu0
  %v2692 = vpop.f32.mrf.mxu0
  %v2693 = vpop.f32.mrf.mxu0
  %2694 = vdwg.mxu0
  %v2695 = vmul.f32 %v2635, 0.17677669
  %v2696 = vmul.f32 %v2690, 0.17677669
  %v2697 = vsel %vm2104, %v2695, -inf
  %2698 = vmax.xlane.f32.xlu0 %v2697
  %v2699 = vpop.xlane.xlu0 %2698
  %v2700 = vsel %vm2104, %v2696, -inf
  %2701 = vmax.xlane.f32.xlu0 %v2700
  %v2702 = vpop.xlane.xlu0 %2701
  %v2703 = vsub.f32 %v2695, %v2699
  %v2704 = vsub.f32 %v2696, %v2702
  %v2705 = vmul.f32 %v2703, 1.442695
  %v2706 = vpow.pop %v2705
  %v2707 = vmul.f32 %v2704, 1.442695
  %v2708 = vpow.pop %v2707
  %v2709 = vsel %vm2104, %v2706, 0.0
  %2710 = vadd.xlane.f32.xlu0 %v2709
  %v2711 = vpop.xlane.xlu0 %2710
  %v2712 = vsel %vm2104, %v2708, 0.0
  %2713 = vadd.xlane.f32.xlu0 %v2712
  %v2714 = vpop.xlane.xlu0 %2713
  %v2715 = vrcp.pop %v2711
  %v2716 = vrcp.pop %v2714
  %v2717 = vmul.f32 %v2706, %v2715
  %v2718 = vmul.f32 %v2708, %v2716
  %v2719 = vpack.c.bf16 %v2717, %v2717
  %v2720 = vpack.c.bf16 %v2718, %v2718
  %v2722 = vsel %vm2104, %v2719, 0
  %2724 = vmatprep.subr.bf16.mxu0 0
  %2725 = vmatpush1.bf16.msra.mxu0 0
  %2726 = vmatprep.subr.bf16.mxu0 0
  %2727 = vmatpush1.bf16.msra.mxu0 0
  %2728 = vmatprep.subr.bf16.mxu0 0
  %2729 = vmatpush1.bf16.msra.mxu0 0
  %2730 = vmatprep.subr.bf16.mxu0 0
  %2731 = vmatpush1.bf16.msra.mxu0 0
  %2732 = vmatprep.subr.bf16.mxu0 0
  %2733 = vmatpush1.bf16.msra.mxu0 %v2580
  %2734 = vmatprep.subr.bf16.mxu0 0
  %2735 = vmatpush1.bf16.msra.mxu0 %v2579
  %2736 = vmatprep.subr.bf16.mxu0 0
  %2737 = vmatpush1.bf16.msra.mxu0 %v2578
  %2738 = vmatprep.subr.bf16.mxu0 0
  %2739 = vmatpush1.bf16.msra.mxu0 %v2577
  %2740 = vmatprep.subr.bf16.mxu0 0
  %2741 = vmatpush2.bf16.msra.mxu0 0
  %2742 = vmatprep.subr.bf16.mxu0 0
  %2743 = vmatpush2.bf16.msra.mxu0 0
  %2744 = vmatprep.subr.bf16.mxu0 0
  %2745 = vmatpush2.bf16.msra.mxu0 0
  %2746 = vmatprep.subr.bf16.mxu0 0
  %2747 = vmatpush2.bf16.msra.mxu0 0
  %2748 = vmatprep.subr.bf16.mxu0 0
  %2749 = vmatpush2.bf16.msra.mxu0 0
  %2750 = vmatprep.subr.bf16.mxu0 0
  %2751 = vmatpush2.bf16.msra.mxu0 0
  %2752 = vmatprep.subr.bf16.mxu0 0
  %2753 = vmatpush2.bf16.msra.mxu0 0
  %2754 = vmatprep.subr.bf16.mxu0 0
  %2755 = vmatpush2.bf16.msra.mxu0 0
  %2756 = vmatprep.mubr.bf16.mxu0 0
  %2757 = vmatmul.mubr.bf16.gmra.mxu0 %v2722
  %v2758 = vpop.f32.mrf.mxu0
  %v2759 = vadd.f32 0.0, %v2758
  %v2760 = vpop.f32.mrf.mxu0
  %v2761 = vpop.f32.mrf.mxu0
  %v2762 = vpop.f32.mrf.mxu0
  %2763 = vdwg.mxu0
  %v2765 = vsel %vm2104, %v2720, 0
  %2767 = vmatprep.subr.bf16.mxu0 0
  %2768 = vmatpush1.bf16.msra.mxu0 0
  %2769 = vmatprep.subr.bf16.mxu0 0
  %2770 = vmatpush1.bf16.msra.mxu0 0
  %2771 = vmatprep.subr.bf16.mxu0 0
  %2772 = vmatpush1.bf16.msra.mxu0 0
  %2773 = vmatprep.subr.bf16.mxu0 0
  %2774 = vmatpush1.bf16.msra.mxu0 0
  %2775 = vmatprep.subr.bf16.mxu0 0
  %2776 = vmatpush1.bf16.msra.mxu0 %v2584
  %2777 = vmatprep.subr.bf16.mxu0 0
  %2778 = vmatpush1.bf16.msra.mxu0 %v2583
  %2779 = vmatprep.subr.bf16.mxu0 0
  %2780 = vmatpush1.bf16.msra.mxu0 %v2582
  %2781 = vmatprep.subr.bf16.mxu0 0
  %2782 = vmatpush1.bf16.msra.mxu0 %v2581
  %2783 = vmatprep.subr.bf16.mxu0 0
  %2784 = vmatpush2.bf16.msra.mxu0 0
  %2785 = vmatprep.subr.bf16.mxu0 0
  %2786 = vmatpush2.bf16.msra.mxu0 0
  %2787 = vmatprep.subr.bf16.mxu0 0
  %2788 = vmatpush2.bf16.msra.mxu0 0
  %2789 = vmatprep.subr.bf16.mxu0 0
  %2790 = vmatpush2.bf16.msra.mxu0 0
  %2791 = vmatprep.subr.bf16.mxu0 0
  %2792 = vmatpush2.bf16.msra.mxu0 0
  %2793 = vmatprep.subr.bf16.mxu0 0
  %2794 = vmatpush2.bf16.msra.mxu0 0
  %2795 = vmatprep.subr.bf16.mxu0 0
  %2796 = vmatpush2.bf16.msra.mxu0 0
  %2797 = vmatprep.subr.bf16.mxu0 0
  %2798 = vmatpush2.bf16.msra.mxu0 0
  %2799 = vmatprep.mubr.bf16.mxu0 0
  %2800 = vmatmul.mubr.bf16.gmra.mxu0 %v2765
  %v2801 = vpop.f32.mrf.mxu0
  %v2802 = vadd.f32 0.0, %v2801
  %v2803 = vpop.f32.mrf.mxu0
  %v2804 = vpop.f32.mrf.mxu0
  %v2805 = vpop.f32.mrf.mxu0
  %2806 = vdwg.mxu0
  %s2807 = scalar_lea.vmem %s11, 176
  %v2808 = vld [vmem:[%s2807] sm:$0xf]
  %v2809 = vld [vmem:[%s2807 + $0x4] sm:$0xf]
  %v2810 = vld [vmem:[%s2807 + $0x8] sm:$0xf]
  %v2811 = vld [vmem:[%s2807 + $0xc] sm:$0xf]
  %s2812 = scalar_lea.vmem %s12, 11
  %v2813 = vld [vmem:[%s2812] sm:$0x1]
  %v2814 = vpack.c.bf16 %v2802, %v2759
  %v2816 = vlaneseq
  %v2817 = vshrl.u32 %v2816, 7
  %v2818 = vsub.s32 0, %v2817
  %v2819 = vrot.slane %v2813, %v2818
  %v2825 = vunpack.c.l.b16 %v2808
  %v2826 = vunpack.c.l.b16 %v2809
  %v2827 = vunpack.c.l.b16 %v2810
  %v2828 = vunpack.c.l.b16 %v2811
  %v2829 = vpack.c.b16 %v2826, %v2825
  %v2830 = vpack.c.b16 %v2828, %v2827
  %v2834 = vsel %vm267, %v2814, 0
  %2836 = vmatprep.subr.bf16.mxu0 0
  %2837 = vmatpush1.bf16.msra.mxu0 0
  %2838 = vmatprep.subr.bf16.mxu0 0
  %2839 = vmatpush1.bf16.msra.mxu0 0
  %2840 = vmatprep.subr.bf16.mxu0 0
  %2841 = vmatpush1.bf16.msra.mxu0 0
  %2842 = vmatprep.subr.bf16.mxu0 0
  %2843 = vmatpush1.bf16.msra.mxu0 0
  %2844 = vmatprep.subr.bf16.mxu0 0
  %2845 = vmatpush1.bf16.msra.mxu0 0
  %2846 = vmatprep.subr.bf16.mxu0 0
  %2847 = vmatpush1.bf16.msra.mxu0 0
  %2848 = vmatprep.subr.bf16.mxu0 0
  %2849 = vmatpush1.bf16.msra.mxu0 %v2830
  %2850 = vmatprep.subr.bf16.mxu0 0
  %2851 = vmatpush1.bf16.msra.mxu0 %v2829
  %2852 = vmatprep.subr.bf16.mxu0 0
  %2853 = vmatpush2.bf16.msra.mxu0 0
  %2854 = vmatprep.subr.bf16.mxu0 0
  %2855 = vmatpush2.bf16.msra.mxu0 0
  %2856 = vmatprep.subr.bf16.mxu0 0
  %2857 = vmatpush2.bf16.msra.mxu0 0
  %2858 = vmatprep.subr.bf16.mxu0 0
  %2859 = vmatpush2.bf16.msra.mxu0 0
  %2860 = vmatprep.subr.bf16.mxu0 0
  %2861 = vmatpush2.bf16.msra.mxu0 0
  %2862 = vmatprep.subr.bf16.mxu0 0
  %2863 = vmatpush2.bf16.msra.mxu0 0
  %2864 = vmatprep.subr.bf16.mxu0 0
  %2865 = vmatpush2.bf16.msra.mxu0 0
  %2866 = vmatprep.subr.bf16.mxu0 0
  %2867 = vmatpush2.bf16.msra.mxu0 0
  %2868 = vmatprep.mubr.bf16.mxu0 0
  %2869 = vmatmul.mubr.bf16.gmra.mxu0 %v2834
  %v2870 = vpop.f32.mrf.mxu0
  %v2871 = vadd.f32 %v2819, %v2870
  %v2872 = vpop.f32.mrf.mxu0
  %v2873 = vpop.f32.mrf.mxu0
  %v2874 = vadd.f32 %v2819, %v2873
  %v2875 = vpop.f32.mrf.mxu0
  %2876 = vdwg.mxu0
  %v2877 = vadd.f32 %v2195, %v2871
  %v2878 = vadd.f32 %v2196, %v2874
  %v2879 = vsel %vm267, %v2877, 0.0
  %2880 = vadd.xlane.f32.xlu0 %v2879
  %v2881 = vpop.xlane.xlu0 %2880
  %v2882 = vsel %vm267, %v2878, 0.0
  %2883 = vadd.xlane.f32.xlu0 %v2882
  %v2884 = vpop.xlane.xlu0 %2883
  %v2885 = vmul.f32 %v2881, %v1417
  %v2886 = vmul.f32 %v2884, %v1417
  %v2887 = vsub.f32 %v2877, %v2885
  %v2888 = vsub.f32 %v2878, %v2886
  %v2889 = vmul.f32 %v2887, %v2887
  %v2890 = vmul.f32 %v2888, %v2888
  %v2891 = vsel %vm267, %v2889, 0.0
  %2892 = vadd.xlane.f32.xlu0 %v2891
  %v2893 = vpop.xlane.xlu0 %2892
  %v2894 = vsel %vm267, %v2890, 0.0
  %2895 = vadd.xlane.f32.xlu0 %v2894
  %v2896 = vpop.xlane.xlu0 %2895
  %v2897 = vmul.f32 %v2893, %v1417
  %v2898 = vmul.f32 %v2896, %v1417
  %v2899 = vadd.f32 %v2897, 1e-05
  %v2900 = vadd.f32 %v2898, 1e-05
  %v2901 = vrsqrt.pop %v2899
  %v2902 = vrsqrt.pop %v2900
  %v2903 = vmul.f32 %v2887, %v2901
  %v2904 = vmul.f32 %v2888, %v2902
  %s2905 = scalar_lea.vmem %s17, 3
  %v2906 = vld [vmem:[%s2905] sm:$0x1]
  %v2908 = vlaneseq
  %v2909 = vshrl.u32 %v2908, 7
  %v2910 = vsub.s32 0, %v2909
  %v2911 = vrot.slane %v2906, %v2910
  %v2913 = vmul.f32 %v2903, %v2911
  %v2914 = vmul.f32 %v2904, %v2911
  %s2915 = scalar_lea.vmem %s18, 3
  %v2916 = vld [vmem:[%s2915] sm:$0x1]
  %v2918 = vlaneseq
  %v2919 = vshrl.u32 %v2918, 7
  %v2920 = vsub.s32 0, %v2919
  %v2921 = vrot.slane %v2916, %v2920
  %v2923 = vadd.f32 %v2913, %v2921
  %v2924 = vadd.f32 %v2914, %v2921
  %s2925 = scalar_lea.vmem %s11, 192
  %v2926 = vld [vmem:[%s2925] sm:$0xf]
  %v2927 = vld [vmem:[%s2925 + $0x4] sm:$0xf]
  %v2928 = vld [vmem:[%s2925 + $0x8] sm:$0xf]
  %v2929 = vld [vmem:[%s2925 + $0xc] sm:$0xf]
  %s2930 = scalar_lea.vmem %s12, 12
  %v2931 = vld [vmem:[%s2930] sm:$0x1]
  %v2932 = vpack.c.bf16 %v2924, %v2923
  %v2934 = vlaneseq
  %v2935 = vshrl.u32 %v2934, 7
  %v2936 = vsub.s32 0, %v2935
  %v2937 = vrot.slane %v2931, %v2936
  %v2943 = vunpack.c.l.b16 %v2926
  %v2944 = vunpack.c.l.b16 %v2927
  %v2945 = vunpack.c.l.b16 %v2928
  %v2946 = vunpack.c.l.b16 %v2929
  %v2947 = vpack.c.b16 %v2944, %v2943
  %v2948 = vpack.c.b16 %v2946, %v2945
  %v2952 = vsel %vm267, %v2932, 0
  %2954 = vmatprep.subr.bf16.mxu0 0
  %2955 = vmatpush1.bf16.msra.mxu0 0
  %2956 = vmatprep.subr.bf16.mxu0 0
  %2957 = vmatpush1.bf16.msra.mxu0 0
  %2958 = vmatprep.subr.bf16.mxu0 0
  %2959 = vmatpush1.bf16.msra.mxu0 0
  %2960 = vmatprep.subr.bf16.mxu0 0
  %2961 = vmatpush1.bf16.msra.mxu0 0
  %2962 = vmatprep.subr.bf16.mxu0 0
  %2963 = vmatpush1.bf16.msra.mxu0 0
  %2964 = vmatprep.subr.bf16.mxu0 0
  %2965 = vmatpush1.bf16.msra.mxu0 0
  %2966 = vmatprep.subr.bf16.mxu0 0
  %2967 = vmatpush1.bf16.msra.mxu0 %v2948
  %2968 = vmatprep.subr.bf16.mxu0 0
  %2969 = vmatpush1.bf16.msra.mxu0 %v2947
  %2970 = vmatprep.subr.bf16.mxu0 0
  %2971 = vmatpush2.bf16.msra.mxu0 0
  %2972 = vmatprep.subr.bf16.mxu0 0
  %2973 = vmatpush2.bf16.msra.mxu0 0
  %2974 = vmatprep.subr.bf16.mxu0 0
  %2975 = vmatpush2.bf16.msra.mxu0 0
  %2976 = vmatprep.subr.bf16.mxu0 0
  %2977 = vmatpush2.bf16.msra.mxu0 0
  %2978 = vmatprep.subr.bf16.mxu0 0
  %2979 = vmatpush2.bf16.msra.mxu0 0
  %2980 = vmatprep.subr.bf16.mxu0 0
  %2981 = vmatpush2.bf16.msra.mxu0 0
  %2982 = vmatprep.subr.bf16.mxu0 0
  %2983 = vmatpush2.bf16.msra.mxu0 0
  %2984 = vmatprep.subr.bf16.mxu0 0
  %2985 = vmatpush2.bf16.msra.mxu0 0
  %2986 = vmatprep.mubr.bf16.mxu0 0
  %2987 = vmatmul.mubr.bf16.gmra.mxu0 %v2952
  %v2988 = vpop.f32.mrf.mxu0
  %v2989 = vadd.f32 %v2937, %v2988
  %v2990 = vpop.f32.mrf.mxu0
  %v2991 = vpop.f32.mrf.mxu0
  %v2992 = vadd.f32 %v2937, %v2991
  %v2993 = vpop.f32.mrf.mxu0
  %2994 = vdwg.mxu0
  %s2995 = scalar_lea.vmem %s11, 208
  %v2996 = vld [vmem:[%s2995] sm:$0xf]
  %v2997 = vld [vmem:[%s2995 + $0x4] sm:$0xf]
  %v2998 = vld [vmem:[%s2995 + $0x8] sm:$0xf]
  %v2999 = vld [vmem:[%s2995 + $0xc] sm:$0xf]
  %s3000 = scalar_lea.vmem %s12, 13
  %v3001 = vld [vmem:[%s3000] sm:$0x1]
  %v3003 = vlaneseq
  %v3004 = vshrl.u32 %v3003, 7
  %v3005 = vsub.s32 0, %v3004
  %v3006 = vrot.slane %v3001, %v3005
  %v3012 = vunpack.c.l.b16 %v2996
  %v3013 = vunpack.c.l.b16 %v2997
  %v3014 = vunpack.c.l.b16 %v2998
  %v3015 = vunpack.c.l.b16 %v2999
  %v3016 = vpack.c.b16 %v3013, %v3012
  %v3017 = vpack.c.b16 %v3015, %v3014
  %3020 = vmatprep.subr.bf16.mxu0 0
  %3021 = vmatpush1.bf16.msra.mxu0 0
  %3022 = vmatprep.subr.bf16.mxu0 0
  %3023 = vmatpush1.bf16.msra.mxu0 0
  %3024 = vmatprep.subr.bf16.mxu0 0
  %3025 = vmatpush1.bf16.msra.mxu0 0
  %3026 = vmatprep.subr.bf16.mxu0 0
  %3027 = vmatpush1.bf16.msra.mxu0 0
  %3028 = vmatprep.subr.bf16.mxu0 0
  %3029 = vmatpush1.bf16.msra.mxu0 0
  %3030 = vmatprep.subr.bf16.mxu0 0
  %3031 = vmatpush1.bf16.msra.mxu0 0
  %3032 = vmatprep.subr.bf16.mxu0 0
  %3033 = vmatpush1.bf16.msra.mxu0 %v3017
  %3034 = vmatprep.subr.bf16.mxu0 0
  %3035 = vmatpush1.bf16.msra.mxu0 %v3016
  %3036 = vmatprep.subr.bf16.mxu0 0
  %3037 = vmatpush2.bf16.msra.mxu0 0
  %3038 = vmatprep.subr.bf16.mxu0 0
  %3039 = vmatpush2.bf16.msra.mxu0 0
  %3040 = vmatprep.subr.bf16.mxu0 0
  %3041 = vmatpush2.bf16.msra.mxu0 0
  %3042 = vmatprep.subr.bf16.mxu0 0
  %3043 = vmatpush2.bf16.msra.mxu0 0
  %3044 = vmatprep.subr.bf16.mxu0 0
  %3045 = vmatpush2.bf16.msra.mxu0 0
  %3046 = vmatprep.subr.bf16.mxu0 0
  %3047 = vmatpush2.bf16.msra.mxu0 0
  %3048 = vmatprep.subr.bf16.mxu0 0
  %3049 = vmatpush2.bf16.msra.mxu0 0
  %3050 = vmatprep.subr.bf16.mxu0 0
  %3051 = vmatpush2.bf16.msra.mxu0 0
  %3052 = vmatprep.mubr.bf16.mxu0 0
  %3053 = vmatmul.mubr.bf16.gmra.mxu0 %v2952
  %v3054 = vpop.f32.mrf.mxu0
  %v3055 = vadd.f32 %v3006, %v3054
  %v3056 = vpop.f32.mrf.mxu0
  %v3057 = vpop.f32.mrf.mxu0
  %v3058 = vadd.f32 %v3006, %v3057
  %v3059 = vpop.f32.mrf.mxu0
  %3060 = vdwg.mxu0
  %s3061 = scalar_lea.vmem %s11, 224
  %v3062 = vld [vmem:[%s3061] sm:$0xf]
  %v3063 = vld [vmem:[%s3061 + $0x4] sm:$0xf]
  %v3064 = vld [vmem:[%s3061 + $0x8] sm:$0xf]
  %v3065 = vld [vmem:[%s3061 + $0xc] sm:$0xf]
  %s3066 = scalar_lea.vmem %s12, 14
  %v3067 = vld [vmem:[%s3066] sm:$0x1]
  %v3069 = vlaneseq
  %v3070 = vshrl.u32 %v3069, 7
  %v3071 = vsub.s32 0, %v3070
  %v3072 = vrot.slane %v3067, %v3071
  %v3078 = vunpack.c.l.b16 %v3062
  %v3079 = vunpack.c.l.b16 %v3063
  %v3080 = vunpack.c.l.b16 %v3064
  %v3081 = vunpack.c.l.b16 %v3065
  %v3082 = vpack.c.b16 %v3079, %v3078
  %v3083 = vpack.c.b16 %v3081, %v3080
  %3086 = vmatprep.subr.bf16.mxu0 0
  %3087 = vmatpush1.bf16.msra.mxu0 0
  %3088 = vmatprep.subr.bf16.mxu0 0
  %3089 = vmatpush1.bf16.msra.mxu0 0
  %3090 = vmatprep.subr.bf16.mxu0 0
  %3091 = vmatpush1.bf16.msra.mxu0 0
  %3092 = vmatprep.subr.bf16.mxu0 0
  %3093 = vmatpush1.bf16.msra.mxu0 0
  %3094 = vmatprep.subr.bf16.mxu0 0
  %3095 = vmatpush1.bf16.msra.mxu0 0
  %3096 = vmatprep.subr.bf16.mxu0 0
  %3097 = vmatpush1.bf16.msra.mxu0 0
  %3098 = vmatprep.subr.bf16.mxu0 0
  %3099 = vmatpush1.bf16.msra.mxu0 %v3083
  %3100 = vmatprep.subr.bf16.mxu0 0
  %3101 = vmatpush1.bf16.msra.mxu0 %v3082
  %3102 = vmatprep.subr.bf16.mxu0 0
  %3103 = vmatpush2.bf16.msra.mxu0 0
  %3104 = vmatprep.subr.bf16.mxu0 0
  %3105 = vmatpush2.bf16.msra.mxu0 0
  %3106 = vmatprep.subr.bf16.mxu0 0
  %3107 = vmatpush2.bf16.msra.mxu0 0
  %3108 = vmatprep.subr.bf16.mxu0 0
  %3109 = vmatpush2.bf16.msra.mxu0 0
  %3110 = vmatprep.subr.bf16.mxu0 0
  %3111 = vmatpush2.bf16.msra.mxu0 0
  %3112 = vmatprep.subr.bf16.mxu0 0
  %3113 = vmatpush2.bf16.msra.mxu0 0
  %3114 = vmatprep.subr.bf16.mxu0 0
  %3115 = vmatpush2.bf16.msra.mxu0 0
  %3116 = vmatprep.subr.bf16.mxu0 0
  %3117 = vmatpush2.bf16.msra.mxu0 0
  %3118 = vmatprep.mubr.bf16.mxu0 0
  %3119 = vmatmul.mubr.bf16.gmra.mxu0 %v2952
  %v3120 = vpop.f32.mrf.mxu0
  %v3121 = vadd.f32 %v3072, %v3120
  %v3122 = vpop.f32.mrf.mxu0
  %v3123 = vpop.f32.mrf.mxu0
  %v3124 = vadd.f32 %v3072, %v3123
  %v3125 = vpop.f32.mrf.mxu0
  %3126 = vdwg.mxu0
  %v3127 = vpack.c.bf16 %v2989, %v2989
  %v3128 = vpack.c.bf16 %v2992, %v2992
  %v3129 = vpack.c.bf16 %v3055, %v3055
  %v3130 = vpack.c.bf16 %v3058, %v3058
  %v3131 = vpack.c.bf16 %v3121, %v3121
  %v3132 = vpack.c.bf16 %v3124, %v3124
  %v3134 = vsel %vm267, %v3127, 0
  %v3137 = vsel %vm267, %v3129, 0
  %3139 = vmatprep.subr.bf16.mxu0 0
  %3140 = vmatpush1.bf16.xpose.msra.mxu0 0
  %3141 = vmatprep.subr.bf16.mxu0 0
  %3142 = vmatpush1.bf16.xpose.msra.mxu0 0
  %3143 = vmatprep.subr.bf16.mxu0 0
  %3144 = vmatpush1.bf16.xpose.msra.mxu0 0
  %3145 = vmatprep.subr.bf16.mxu0 0
  %3146 = vmatpush1.bf16.xpose.msra.mxu0 0
  %3147 = vmatprep.subr.bf16.mxu0 0
  %3148 = vmatpush1.bf16.xpose.msra.mxu0 0
  %3149 = vmatprep.subr.bf16.mxu0 0
  %3150 = vmatpush1.bf16.xpose.msra.mxu0 0
  %3151 = vmatprep.subr.bf16.mxu0 0
  %3152 = vmatpush1.bf16.xpose.msra.mxu0 0
  %3153 = vmatprep.subr.bf16.mxu0 0
  %3154 = vmatpush1.bf16.xpose.msra.mxu0 %v3137
  %3155 = vmatprep.subr.bf16.mxu0 0
  %3156 = vmatpush2.bf16.xpose.msra.mxu0 0
  %3157 = vmatprep.subr.bf16.mxu0 0
  %3158 = vmatpush2.bf16.xpose.msra.mxu0 0
  %3159 = vmatprep.subr.bf16.mxu0 0
  %3160 = vmatpush2.bf16.xpose.msra.mxu0 0
  %3161 = vmatprep.subr.bf16.mxu0 0
  %3162 = vmatpush2.bf16.xpose.msra.mxu0 0
  %3163 = vmatprep.subr.bf16.mxu0 0
  %3164 = vmatpush2.bf16.xpose.msra.mxu0 0
  %3165 = vmatprep.subr.bf16.mxu0 0
  %3166 = vmatpush2.bf16.xpose.msra.mxu0 0
  %3167 = vmatprep.subr.bf16.mxu0 0
  %3168 = vmatpush2.bf16.xpose.msra.mxu0 0
  %3169 = vmatprep.subr.bf16.mxu0 0
  %3170 = vmatpush2.bf16.xpose.msra.mxu0 0
  %3171 = vmatprep.mubr.bf16.mxu0 0
  %3172 = vmatmul.mubr.bf16.gmra.mxu0 %v3134
  %v3173 = vpop.f32.mrf.mxu0
  %v3174 = vadd.f32 0.0, %v3173
  %v3175 = vpop.f32.mrf.mxu0
  %v3176 = vpop.f32.mrf.mxu0
  %v3177 = vpop.f32.mrf.mxu0
  %3178 = vdwg.mxu0
  %v3180 = vsel %vm267, %v3128, 0
  %v3183 = vsel %vm267, %v3130, 0
  %3185 = vmatprep.subr.bf16.mxu0 0
  %3186 = vmatpush1.bf16.xpose.msra.mxu0 0
  %3187 = vmatprep.subr.bf16.mxu0 0
  %3188 = vmatpush1.bf16.xpose.msra.mxu0 0
  %3189 = vmatprep.subr.bf16.mxu0 0
  %3190 = vmatpush1.bf16.xpose.msra.mxu0 0
  %3191 = vmatprep.subr.bf16.mxu0 0
  %3192 = vmatpush1.bf16.xpose.msra.mxu0 0
  %3193 = vmatprep.subr.bf16.mxu0 0
  %3194 = vmatpush1.bf16.xpose.msra.mxu0 0
  %3195 = vmatprep.subr.bf16.mxu0 0
  %3196 = vmatpush1.bf16.xpose.msra.mxu0 0
  %3197 = vmatprep.subr.bf16.mxu0 0
  %3198 = vmatpush1.bf16.xpose.msra.mxu0 0
  %3199 = vmatprep.subr.bf16.mxu0 0
  %3200 = vmatpush1.bf16.xpose.msra.mxu0 %v3183
  %3201 = vmatprep.subr.bf16.mxu0 0
  %3202 = vmatpush2.bf16.xpose.msra.mxu0 0
  %3203 = vmatprep.subr.bf16.mxu0 0
  %3204 = vmatpush2.bf16.xpose.msra.mxu0 0
  %3205 = vmatprep.subr.bf16.mxu0 0
  %3206 = vmatpush2.bf16.xpose.msra.mxu0 0
  %3207 = vmatprep.subr.bf16.mxu0 0
  %3208 = vmatpush2.bf16.xpose.msra.mxu0 0
  %3209 = vmatprep.subr.bf16.mxu0 0
  %3210 = vmatpush2.bf16.xpose.msra.mxu0 0
  %3211 = vmatprep.subr.bf16.mxu0 0
  %3212 = vmatpush2.bf16.xpose.msra.mxu0 0
  %3213 = vmatprep.subr.bf16.mxu0 0
  %3214 = vmatpush2.bf16.xpose.msra.mxu0 0
  %3215 = vmatprep.subr.bf16.mxu0 0
  %3216 = vmatpush2.bf16.xpose.msra.mxu0 0
  %3217 = vmatprep.mubr.bf16.mxu0 0
  %3218 = vmatmul.mubr.bf16.gmra.mxu0 %v3180
  %v3219 = vpop.f32.mrf.mxu0
  %v3220 = vadd.f32 0.0, %v3219
  %v3221 = vpop.f32.mrf.mxu0
  %v3222 = vpop.f32.mrf.mxu0
  %v3223 = vpop.f32.mrf.mxu0
  %3224 = vdwg.mxu0
  %v3225 = vmul.f32 %v3174, 0.17677669
  %v3226 = vmul.f32 %v3220, 0.17677669
  %v3227 = vsel %vm1758, %v3225, -inf
  %3228 = vmax.xlane.f32.xlu0 %v3227
  %v3229 = vpop.xlane.xlu0 %3228
  %v3230 = vsel %vm1758, %v3226, -inf
  %3231 = vmax.xlane.f32.xlu0 %v3230
  %v3232 = vpop.xlane.xlu0 %3231
  %v3233 = vsub.f32 %v3225, %v3229
  %v3234 = vsub.f32 %v3226, %v3232
  %v3235 = vmul.f32 %v3233, 1.442695
  %v3236 = vpow.pop %v3235
  %v3237 = vmul.f32 %v3234, 1.442695
  %v3238 = vpow.pop %v3237
  %v3239 = vsel %vm1758, %v3236, 0.0
  %3240 = vadd.xlane.f32.xlu0 %v3239
  %v3241 = vpop.xlane.xlu0 %3240
  %v3242 = vsel %vm1758, %v3238, 0.0
  %3243 = vadd.xlane.f32.xlu0 %v3242
  %v3244 = vpop.xlane.xlu0 %3243
  %v3245 = vrcp.pop %v3241
  %v3246 = vrcp.pop %v3244
  %v3247 = vmul.f32 %v3236, %v3245
  %v3248 = vmul.f32 %v3238, %v3246
  %v3249 = vpack.c.bf16 %v3247, %v3247
  %v3250 = vpack.c.bf16 %v3248, %v3248
  %v3252 = vsel %vm1758, %v3249, 0
  %v3255 = vsel %vm1786, %v3131, 0
  %3257 = vmatprep.subr.bf16.mxu0 0
  %3258 = vmatpush1.bf16.msra.mxu0 0
  %3259 = vmatprep.subr.bf16.mxu0 0
  %3260 = vmatpush1.bf16.msra.mxu0 0
  %3261 = vmatprep.subr.bf16.mxu0 0
  %3262 = vmatpush1.bf16.msra.mxu0 0
  %3263 = vmatprep.subr.bf16.mxu0 0
  %3264 = vmatpush1.bf16.msra.mxu0 0
  %3265 = vmatprep.subr.bf16.mxu0 0
  %3266 = vmatpush1.bf16.msra.mxu0 0
  %3267 = vmatprep.subr.bf16.mxu0 0
  %3268 = vmatpush1.bf16.msra.mxu0 0
  %3269 = vmatprep.subr.bf16.mxu0 0
  %3270 = vmatpush1.bf16.msra.mxu0 0
  %3271 = vmatprep.subr.bf16.mxu0 0
  %3272 = vmatpush1.bf16.msra.mxu0 %v3255
  %3273 = vmatprep.subr.bf16.mxu0 0
  %3274 = vmatpush2.bf16.msra.mxu0 0
  %3275 = vmatprep.subr.bf16.mxu0 0
  %3276 = vmatpush2.bf16.msra.mxu0 0
  %3277 = vmatprep.subr.bf16.mxu0 0
  %3278 = vmatpush2.bf16.msra.mxu0 0
  %3279 = vmatprep.subr.bf16.mxu0 0
  %3280 = vmatpush2.bf16.msra.mxu0 0
  %3281 = vmatprep.subr.bf16.mxu0 0
  %3282 = vmatpush2.bf16.msra.mxu0 0
  %3283 = vmatprep.subr.bf16.mxu0 0
  %3284 = vmatpush2.bf16.msra.mxu0 0
  %3285 = vmatprep.subr.bf16.mxu0 0
  %3286 = vmatpush2.bf16.msra.mxu0 0
  %3287 = vmatprep.subr.bf16.mxu0 0
  %3288 = vmatpush2.bf16.msra.mxu0 0
  %3289 = vmatprep.mubr.bf16.mxu0 0
  %3290 = vmatmul.mubr.bf16.gmra.mxu0 %v3252
  %v3291 = vpop.f32.mrf.mxu0
  %v3292 = vadd.f32 0.0, %v3291
  %v3293 = vpop.f32.mrf.mxu0
  %v3294 = vpop.f32.mrf.mxu0
  %v3295 = vpop.f32.mrf.mxu0
  %3296 = vdwg.mxu0
  %v3298 = vsel %vm1758, %v3250, 0
  %v3301 = vsel %vm1786, %v3132, 0
  %3303 = vmatprep.subr.bf16.mxu0 0
  %3304 = vmatpush1.bf16.msra.mxu0 0
  %3305 = vmatprep.subr.bf16.mxu0 0
  %3306 = vmatpush1.bf16.msra.mxu0 0
  %3307 = vmatprep.subr.bf16.mxu0 0
  %3308 = vmatpush1.bf16.msra.mxu0 0
  %3309 = vmatprep.subr.bf16.mxu0 0
  %3310 = vmatpush1.bf16.msra.mxu0 0
  %3311 = vmatprep.subr.bf16.mxu0 0
  %3312 = vmatpush1.bf16.msra.mxu0 0
  %3313 = vmatprep.subr.bf16.mxu0 0
  %3314 = vmatpush1.bf16.msra.mxu0 0
  %3315 = vmatprep.subr.bf16.mxu0 0
  %3316 = vmatpush1.bf16.msra.mxu0 0
  %3317 = vmatprep.subr.bf16.mxu0 0
  %3318 = vmatpush1.bf16.msra.mxu0 %v3301
  %3319 = vmatprep.subr.bf16.mxu0 0
  %3320 = vmatpush2.bf16.msra.mxu0 0
  %3321 = vmatprep.subr.bf16.mxu0 0
  %3322 = vmatpush2.bf16.msra.mxu0 0
  %3323 = vmatprep.subr.bf16.mxu0 0
  %3324 = vmatpush2.bf16.msra.mxu0 0
  %3325 = vmatprep.subr.bf16.mxu0 0
  %3326 = vmatpush2.bf16.msra.mxu0 0
  %3327 = vmatprep.subr.bf16.mxu0 0
  %3328 = vmatpush2.bf16.msra.mxu0 0
  %3329 = vmatprep.subr.bf16.mxu0 0
  %3330 = vmatpush2.bf16.msra.mxu0 0
  %3331 = vmatprep.subr.bf16.mxu0 0
  %3332 = vmatpush2.bf16.msra.mxu0 0
  %3333 = vmatprep.subr.bf16.mxu0 0
  %3334 = vmatpush2.bf16.msra.mxu0 0
  %3335 = vmatprep.mubr.bf16.mxu0 0
  %3336 = vmatmul.mubr.bf16.gmra.mxu0 %v3298
  %v3337 = vpop.f32.mrf.mxu0
  %v3338 = vadd.f32 0.0, %v3337
  %v3339 = vpop.f32.mrf.mxu0
  %v3340 = vpop.f32.mrf.mxu0
  %v3341 = vpop.f32.mrf.mxu0
  %3342 = vdwg.mxu0
  %s3343 = scalar_lea.vmem %s11, 240
  %v3344 = vld [vmem:[%s3343] sm:$0xf]
  %v3345 = vld [vmem:[%s3343 + $0x4] sm:$0xf]
  %v3346 = vld [vmem:[%s3343 + $0x8] sm:$0xf]
  %v3347 = vld [vmem:[%s3343 + $0xc] sm:$0xf]
  %s3348 = scalar_lea.vmem %s12, 15
  %v3349 = vld [vmem:[%s3348] sm:$0x1]
  %v3350 = vpack.c.bf16 %v3338, %v3292
  %v3352 = vlaneseq
  %v3353 = vshrl.u32 %v3352, 7
  %v3354 = vsub.s32 0, %v3353
  %v3355 = vrot.slane %v3349, %v3354
  %v3361 = vunpack.c.l.b16 %v3344
  %v3362 = vunpack.c.l.b16 %v3345
  %v3363 = vunpack.c.l.b16 %v3346
  %v3364 = vunpack.c.l.b16 %v3347
  %v3365 = vpack.c.b16 %v3362, %v3361
  %v3366 = vpack.c.b16 %v3364, %v3363
  %v3370 = vsel %vm267, %v3350, 0
  %3372 = vmatprep.subr.bf16.mxu0 0
  %3373 = vmatpush1.bf16.msra.mxu0 0
  %3374 = vmatprep.subr.bf16.mxu0 0
  %3375 = vmatpush1.bf16.msra.mxu0 0
  %3376 = vmatprep.subr.bf16.mxu0 0
  %3377 = vmatpush1.bf16.msra.mxu0 0
  %3378 = vmatprep.subr.bf16.mxu0 0
  %3379 = vmatpush1.bf16.msra.mxu0 0
  %3380 = vmatprep.subr.bf16.mxu0 0
  %3381 = vmatpush1.bf16.msra.mxu0 0
  %3382 = vmatprep.subr.bf16.mxu0 0
  %3383 = vmatpush1.bf16.msra.mxu0 0
  %3384 = vmatprep.subr.bf16.mxu0 0
  %3385 = vmatpush1.bf16.msra.mxu0 %v3366
  %3386 = vmatprep.subr.bf16.mxu0 0
  %3387 = vmatpush1.bf16.msra.mxu0 %v3365
  %3388 = vmatprep.subr.bf16.mxu0 0
  %3389 = vmatpush2.bf16.msra.mxu0 0
  %3390 = vmatprep.subr.bf16.mxu0 0
  %3391 = vmatpush2.bf16.msra.mxu0 0
  %3392 = vmatprep.subr.bf16.mxu0 0
  %3393 = vmatpush2.bf16.msra.mxu0 0
  %3394 = vmatprep.subr.bf16.mxu0 0
  %3395 = vmatpush2.bf16.msra.mxu0 0
  %3396 = vmatprep.subr.bf16.mxu0 0
  %3397 = vmatpush2.bf16.msra.mxu0 0
  %3398 = vmatprep.subr.bf16.mxu0 0
  %3399 = vmatpush2.bf16.msra.mxu0 0
  %3400 = vmatprep.subr.bf16.mxu0 0
  %3401 = vmatpush2.bf16.msra.mxu0 0
  %3402 = vmatprep.subr.bf16.mxu0 0
  %3403 = vmatpush2.bf16.msra.mxu0 0
  %3404 = vmatprep.mubr.bf16.mxu0 0
  %3405 = vmatmul.mubr.bf16.gmra.mxu0 %v3370
  %v3406 = vpop.f32.mrf.mxu0
  %v3407 = vadd.f32 %v3355, %v3406
  %v3408 = vpop.f32.mrf.mxu0
  %v3409 = vpop.f32.mrf.mxu0
  %v3410 = vadd.f32 %v3355, %v3409
  %v3411 = vpop.f32.mrf.mxu0
  %3412 = vdwg.mxu0
  %v3413 = vadd.f32 %v2923, %v3407
  %v3414 = vadd.f32 %v2924, %v3410
  %v3415 = vsel %vm267, %v3413, 0.0
  %3416 = vadd.xlane.f32.xlu0 %v3415
  %v3417 = vpop.xlane.xlu0 %3416
  %v3418 = vsel %vm267, %v3414, 0.0
  %3419 = vadd.xlane.f32.xlu0 %v3418
  %v3420 = vpop.xlane.xlu0 %3419
  %v3421 = vmul.f32 %v3417, %v1417
  %v3422 = vmul.f32 %v3420, %v1417
  %v3423 = vsub.f32 %v3413, %v3421
  %v3424 = vsub.f32 %v3414, %v3422
  %v3425 = vmul.f32 %v3423, %v3423
  %v3426 = vmul.f32 %v3424, %v3424
  %v3427 = vsel %vm267, %v3425, 0.0
  %3428 = vadd.xlane.f32.xlu0 %v3427
  %v3429 = vpop.xlane.xlu0 %3428
  %v3430 = vsel %vm267, %v3426, 0.0
  %3431 = vadd.xlane.f32.xlu0 %v3430
  %v3432 = vpop.xlane.xlu0 %3431
  %v3433 = vmul.f32 %v3429, %v1417
  %v3434 = vmul.f32 %v3432, %v1417
  %v3435 = vadd.f32 %v3433, 1e-05
  %v3436 = vadd.f32 %v3434, 1e-05
  %v3437 = vrsqrt.pop %v3435
  %v3438 = vrsqrt.pop %v3436
  %v3439 = vmul.f32 %v3423, %v3437
  %v3440 = vmul.f32 %v3424, %v3438
  %s3441 = scalar_lea.vmem %s17, 4
  %v3442 = vld [vmem:[%s3441] sm:$0x1]
  %v3444 = vlaneseq
  %v3445 = vshrl.u32 %v3444, 7
  %v3446 = vsub.s32 0, %v3445
  %v3447 = vrot.slane %v3442, %v3446
  %v3449 = vmul.f32 %v3439, %v3447
  %v3450 = vmul.f32 %v3440, %v3447
  %s3451 = scalar_lea.vmem %s18, 4
  %v3452 = vld [vmem:[%s3451] sm:$0x1]
  %v3454 = vlaneseq
  %v3455 = vshrl.u32 %v3454, 7
  %v3456 = vsub.s32 0, %v3455
  %v3457 = vrot.slane %v3452, %v3456
  %v3459 = vadd.f32 %v3449, %v3457
  %v3460 = vadd.f32 %v3450, %v3457
  %s3461 = scalar_lea.vmem %s13, 16
  %v3462 = vld [vmem:[%s3461] sm:$0xf]
  %v3463 = vld [vmem:[%s3461 + $0x4] sm:$0xf]
  %v3464 = vld [vmem:[%s3461 + $0x8] sm:$0xf]
  %v3465 = vld [vmem:[%s3461 + $0xc] sm:$0xf]
  %s3466 = scalar_lea.vmem %s14, 1
  %v3467 = vld [vmem:[%s3466] sm:$0x1]
  %v3468 = vpack.c.bf16 %v3460, %v3459
  %v3470 = vlaneseq
  %v3471 = vshrl.u32 %v3470, 7
  %v3472 = vsub.s32 0, %v3471
  %v3473 = vrot.slane %v3467, %v3472
  %v3479 = vunpack.c.l.b16 %v3462
  %v3480 = vunpack.c.l.b16 %v3463
  %v3481 = vunpack.c.l.b16 %v3464
  %v3482 = vunpack.c.l.b16 %v3465
  %v3483 = vpack.c.b16 %v3480, %v3479
  %v3484 = vpack.c.b16 %v3482, %v3481
  %v3488 = vsel %vm267, %v3468, 0
  %3490 = vmatprep.subr.bf16.mxu0 0
  %3491 = vmatpush1.bf16.msra.mxu0 0
  %3492 = vmatprep.subr.bf16.mxu0 0
  %3493 = vmatpush1.bf16.msra.mxu0 0
  %3494 = vmatprep.subr.bf16.mxu0 0
  %3495 = vmatpush1.bf16.msra.mxu0 0
  %3496 = vmatprep.subr.bf16.mxu0 0
  %3497 = vmatpush1.bf16.msra.mxu0 0
  %3498 = vmatprep.subr.bf16.mxu0 0
  %3499 = vmatpush1.bf16.msra.mxu0 0
  %3500 = vmatprep.subr.bf16.mxu0 0
  %3501 = vmatpush1.bf16.msra.mxu0 0
  %3502 = vmatprep.subr.bf16.mxu0 0
  %3503 = vmatpush1.bf16.msra.mxu0 %v3484
  %3504 = vmatprep.subr.bf16.mxu0 0
  %3505 = vmatpush1.bf16.msra.mxu0 %v3483
  %3506 = vmatprep.subr.bf16.mxu0 0
  %3507 = vmatpush2.bf16.msra.mxu0 0
  %3508 = vmatprep.subr.bf16.mxu0 0
  %3509 = vmatpush2.bf16.msra.mxu0 0
  %3510 = vmatprep.subr.bf16.mxu0 0
  %3511 = vmatpush2.bf16.msra.mxu0 0
  %3512 = vmatprep.subr.bf16.mxu0 0
  %3513 = vmatpush2.bf16.msra.mxu0 0
  %3514 = vmatprep.subr.bf16.mxu0 0
  %3515 = vmatpush2.bf16.msra.mxu0 0
  %3516 = vmatprep.subr.bf16.mxu0 0
  %3517 = vmatpush2.bf16.msra.mxu0 0
  %3518 = vmatprep.subr.bf16.mxu0 0
  %3519 = vmatpush2.bf16.msra.mxu0 0
  %3520 = vmatprep.subr.bf16.mxu0 0
  %3521 = vmatpush2.bf16.msra.mxu0 0
  %3522 = vmatprep.mubr.bf16.mxu0 0
  %3523 = vmatmul.mubr.bf16.gmra.mxu0 %v3488
  %v3524 = vpop.f32.mrf.mxu0
  %v3525 = vadd.f32 %v3473, %v3524
  %v3526 = vpop.f32.mrf.mxu0
  %v3527 = vpop.f32.mrf.mxu0
  %v3528 = vadd.f32 %v3473, %v3527
  %v3529 = vpop.f32.mrf.mxu0
  %3530 = vdwg.mxu0
  %v3531 = vmax.f32 %v3525, 0.0
  %v3532 = vmax.f32 %v3528, 0.0
  %s3533 = scalar_lea.vmem %s15, 32
  %v3534 = vld [vmem:[%s3533] sm:$0xf]
  %v3535 = vld [vmem:[%s3533 + $0x4] sm:$0xf]
  %v3536 = vld [vmem:[%s3533 + $0x8] sm:$0xf]
  %v3537 = vld [vmem:[%s3533 + $0xc] sm:$0xf]
  %v3538 = vld [vmem:[%s3533 + $0x10] sm:$0xf]
  %v3539 = vld [vmem:[%s3533 + $0x14] sm:$0xf]
  %v3540 = vld [vmem:[%s3533 + $0x18] sm:$0xf]
  %v3541 = vld [vmem:[%s3533 + $0x1c] sm:$0xf]
  %s3542 = scalar_lea.vmem %s16, 1
  %v3543 = vld [vmem:[%s3542] sm:$0x1]
  %v3544 = vpack.c.bf16 %v3532, %v3531
  %v3546 = vlaneseq
  %v3547 = vshrl.u32 %v3546, 7
  %v3548 = vsub.s32 0, %v3547
  %v3549 = vrot.slane %v3543, %v3548
  %v3559 = vunpack.c.l.b16 %v3534
  %v3560 = vunpack.c.l.b16 %v3535
  %v3561 = vunpack.c.l.b16 %v3536
  %v3562 = vunpack.c.l.b16 %v3537
  %v3563 = vunpack.c.l.b16 %v3538
  %v3564 = vunpack.c.l.b16 %v3539
  %v3565 = vunpack.c.l.b16 %v3540
  %v3566 = vunpack.c.l.b16 %v3541
  %v3567 = vpack.c.b16 %v3560, %v3559
  %v3568 = vpack.c.b16 %v3562, %v3561
  %v3569 = vpack.c.b16 %v3564, %v3563
  %v3570 = vpack.c.b16 %v3566, %v3565
  %v3576 = vsel %vm2104, %v3544, 0
  %3578 = vmatprep.subr.bf16.mxu0 0
  %3579 = vmatpush1.bf16.msra.mxu0 0
  %3580 = vmatprep.subr.bf16.mxu0 0
  %3581 = vmatpush1.bf16.msra.mxu0 0
  %3582 = vmatprep.subr.bf16.mxu0 0
  %3583 = vmatpush1.bf16.msra.mxu0 0
  %3584 = vmatprep.subr.bf16.mxu0 0
  %3585 = vmatpush1.bf16.msra.mxu0 0
  %3586 = vmatprep.subr.bf16.mxu0 0
  %3587 = vmatpush1.bf16.msra.mxu0 %v3570
  %3588 = vmatprep.subr.bf16.mxu0 0
  %3589 = vmatpush1.bf16.msra.mxu0 %v3569
  %3590 = vmatprep.subr.bf16.mxu0 0
  %3591 = vmatpush1.bf16.msra.mxu0 %v3568
  %3592 = vmatprep.subr.bf16.mxu0 0
  %3593 = vmatpush1.bf16.msra.mxu0 %v3567
  %3594 = vmatprep.subr.bf16.mxu0 0
  %3595 = vmatpush2.bf16.msra.mxu0 0
  %3596 = vmatprep.subr.bf16.mxu0 0
  %3597 = vmatpush2.bf16.msra.mxu0 0
  %3598 = vmatprep.subr.bf16.mxu0 0
  %3599 = vmatpush2.bf16.msra.mxu0 0
  %3600 = vmatprep.subr.bf16.mxu0 0
  %3601 = vmatpush2.bf16.msra.mxu0 0
  %3602 = vmatprep.subr.bf16.mxu0 0
  %3603 = vmatpush2.bf16.msra.mxu0 0
  %3604 = vmatprep.subr.bf16.mxu0 0
  %3605 = vmatpush2.bf16.msra.mxu0 0
  %3606 = vmatprep.subr.bf16.mxu0 0
  %3607 = vmatpush2.bf16.msra.mxu0 0
  %3608 = vmatprep.subr.bf16.mxu0 0
  %3609 = vmatpush2.bf16.msra.mxu0 0
  %3610 = vmatprep.mubr.bf16.mxu0 0
  %3611 = vmatmul.mubr.bf16.gmra.mxu0 %v3576
  %v3612 = vpop.f32.mrf.mxu0
  %v3613 = vadd.f32 %v3549, %v3612
  %v3614 = vpop.f32.mrf.mxu0
  %v3615 = vpop.f32.mrf.mxu0
  %v3616 = vadd.f32 %v3549, %v3615
  %v3617 = vpop.f32.mrf.mxu0
  %3618 = vdwg.mxu0
  %v3619 = vadd.f32 %v3459, %v3613
  %v3620 = vadd.f32 %v3460, %v3616
  %v3621 = vsel %vm267, %v3619, 0.0
  %3622 = vadd.xlane.f32.xlu0 %v3621
  %v3623 = vpop.xlane.xlu0 %3622
  %v3624 = vsel %vm267, %v3620, 0.0
  %3625 = vadd.xlane.f32.xlu0 %v3624
  %v3626 = vpop.xlane.xlu0 %3625
  %v3627 = vmul.f32 %v3623, %v1417
  %v3628 = vmul.f32 %v3626, %v1417
  %v3629 = vsub.f32 %v3619, %v3627
  %v3630 = vsub.f32 %v3620, %v3628
  %v3631 = vmul.f32 %v3629, %v3629
  %v3632 = vmul.f32 %v3630, %v3630
  %v3633 = vsel %vm267, %v3631, 0.0
  %3634 = vadd.xlane.f32.xlu0 %v3633
  %v3635 = vpop.xlane.xlu0 %3634
  %v3636 = vsel %vm267, %v3632, 0.0
  %3637 = vadd.xlane.f32.xlu0 %v3636
  %v3638 = vpop.xlane.xlu0 %3637
  %v3639 = vmul.f32 %v3635, %v1417
  %v3640 = vmul.f32 %v3638, %v1417
  %v3641 = vadd.f32 %v3639, 1e-05
  %v3642 = vadd.f32 %v3640, 1e-05
  %v3643 = vrsqrt.pop %v3641
  %v3644 = vrsqrt.pop %v3642
  %v3645 = vmul.f32 %v3629, %v3643
  %v3646 = vmul.f32 %v3630, %v3644
  %s3647 = scalar_lea.vmem %s17, 5
  %v3648 = vld [vmem:[%s3647] sm:$0x1]
  %v3650 = vlaneseq
  %v3651 = vshrl.u32 %v3650, 7
  %v3652 = vsub.s32 0, %v3651
  %v3653 = vrot.slane %v3648, %v3652
  %v3655 = vmul.f32 %v3645, %v3653
  %v3656 = vmul.f32 %v3646, %v3653
  %s3657 = scalar_lea.vmem %s18, 5
  %v3658 = vld [vmem:[%s3657] sm:$0x1]
  %v3660 = vlaneseq
  %v3661 = vshrl.u32 %v3660, 7
  %v3662 = vsub.s32 0, %v3661
  %v3663 = vrot.slane %v3658, %v3662
  %v3665 = vadd.f32 %v3655, %v3663
  %v3666 = vadd.f32 %v3656, %v3663
  %v3667 = vld [vmem:[%s19] sm:$0xf]
  %v3668 = vld [vmem:[%s19 + $0x4] sm:$0xf]
  %v3669 = vld [vmem:[%s19 + $0x8] sm:$0xf]
  %v3670 = vld [vmem:[%s19 + $0xc] sm:$0xf]
  %v3671 = vld [vmem:[%s20] sm:$0x1]
  %v3672 = vpack.c.bf16 %v3666, %v3665
  %v3674 = vlaneseq
  %v3675 = vshrl.u32 %v3674, 7
  %v3676 = vsub.s32 0, %v3675
  %v3677 = vrot.slane %v3671, %v3676
  %v3683 = vunpack.c.l.b16 %v3667
  %v3684 = vunpack.c.l.b16 %v3668
  %v3685 = vunpack.c.l.b16 %v3669
  %v3686 = vunpack.c.l.b16 %v3670
  %v3687 = vpack.c.b16 %v3684, %v3683
  %v3688 = vpack.c.b16 %v3686, %v3685
  %v3692 = vsel %vm267, %v3672, 0
  %3694 = vmatprep.subr.bf16.mxu0 0
  %3695 = vmatpush1.bf16.msra.mxu0 0
  %3696 = vmatprep.subr.bf16.mxu0 0
  %3697 = vmatpush1.bf16.msra.mxu0 0
  %3698 = vmatprep.subr.bf16.mxu0 0
  %3699 = vmatpush1.bf16.msra.mxu0 0
  %3700 = vmatprep.subr.bf16.mxu0 0
  %3701 = vmatpush1.bf16.msra.mxu0 0
  %3702 = vmatprep.subr.bf16.mxu0 0
  %3703 = vmatpush1.bf16.msra.mxu0 0
  %3704 = vmatprep.subr.bf16.mxu0 0
  %3705 = vmatpush1.bf16.msra.mxu0 0
  %3706 = vmatprep.subr.bf16.mxu0 0
  %3707 = vmatpush1.bf16.msra.mxu0 %v3688
  %3708 = vmatprep.subr.bf16.mxu0 0
  %3709 = vmatpush1.bf16.msra.mxu0 %v3687
  %3710 = vmatprep.subr.bf16.mxu0 0
  %3711 = vmatpush2.bf16.msra.mxu0 0
  %3712 = vmatprep.subr.bf16.mxu0 0
  %3713 = vmatpush2.bf16.msra.mxu0 0
  %3714 = vmatprep.subr.bf16.mxu0 0
  %3715 = vmatpush2.bf16.msra.mxu0 0
  %3716 = vmatprep.subr.bf16.mxu0 0
  %3717 = vmatpush2.bf16.msra.mxu0 0
  %3718 = vmatprep.subr.bf16.mxu0 0
  %3719 = vmatpush2.bf16.msra.mxu0 0
  %3720 = vmatprep.subr.bf16.mxu0 0
  %3721 = vmatpush2.bf16.msra.mxu0 0
  %3722 = vmatprep.subr.bf16.mxu0 0
  %3723 = vmatpush2.bf16.msra.mxu0 0
  %3724 = vmatprep.subr.bf16.mxu0 0
  %3725 = vmatpush2.bf16.msra.mxu0 0
  %3726 = vmatprep.mubr.bf16.mxu0 0
  %3727 = vmatmul.mubr.bf16.gmra.mxu0 %v3692
  %v3728 = vpop.f32.mrf.mxu0
  %v3729 = vadd.f32 %v3677, %v3728
  %v3730 = vpop.f32.mrf.mxu0
  %v3731 = vpop.f32.mrf.mxu0
  %v3732 = vadd.f32 %v3677, %v3731
  %v3733 = vpop.f32.mrf.mxu0
  %3734 = vdwg.mxu0
  %v3735 = vld [vmem:[%s21] sm:$0xf]
  %v3736 = vld [vmem:[%s21 + $0x4] sm:$0xf]
  %v3737 = vld [vmem:[%s21 + $0x8] sm:$0xf]
  %v3738 = vld [vmem:[%s21 + $0xc] sm:$0xf]
  %v3739 = vld [vmem:[%s22] sm:$0x1]
  %v3741 = vlaneseq
  %v3742 = vshrl.u32 %v3741, 7
  %v3743 = vsub.s32 0, %v3742
  %v3744 = vrot.slane %v3739, %v3743
  %v3750 = vunpack.c.l.b16 %v3735
  %v3751 = vunpack.c.l.b16 %v3736
  %v3752 = vunpack.c.l.b16 %v3737
  %v3753 = vunpack.c.l.b16 %v3738
  %v3754 = vpack.c.b16 %v3751, %v3750
  %v3755 = vpack.c.b16 %v3753, %v3752
  %3758 = vmatprep.subr.bf16.mxu0 0
  %3759 = vmatpush1.bf16.msra.mxu0 0
  %3760 = vmatprep.subr.bf16.mxu0 0
  %3761 = vmatpush1.bf16.msra.mxu0 0
  %3762 = vmatprep.subr.bf16.mxu0 0
  %3763 = vmatpush1.bf16.msra.mxu0 0
  %3764 = vmatprep.subr.bf16.mxu0 0
  %3765 = vmatpush1.bf16.msra.mxu0 0
  %3766 = vmatprep.subr.bf16.mxu0 0
  %3767 = vmatpush1.bf16.msra.mxu0 0
  %3768 = vmatprep.subr.bf16.mxu0 0
  %3769 = vmatpush1.bf16.msra.mxu0 0
  %3770 = vmatprep.subr.bf16.mxu0 0
  %3771 = vmatpush1.bf16.msra.mxu0 %v3755
  %3772 = vmatprep.subr.bf16.mxu0 0
  %3773 = vmatpush1.bf16.msra.mxu0 %v3754
  %3774 = vmatprep.subr.bf16.mxu0 0
  %3775 = vmatpush2.bf16.msra.mxu0 0
  %3776 = vmatprep.subr.bf16.mxu0 0
  %3777 = vmatpush2.bf16.msra.mxu0 0
  %3778 = vmatprep.subr.bf16.mxu0 0
  %3779 = vmatpush2.bf16.msra.mxu0 0
  %3780 = vmatprep.subr.bf16.mxu0 0
  %3781 = vmatpush2.bf16.msra.mxu0 0
  %3782 = vmatprep.subr.bf16.mxu0 0
  %3783 = vmatpush2.bf16.msra.mxu0 0
  %3784 = vmatprep.subr.bf16.mxu0 0
  %3785 = vmatpush2.bf16.msra.mxu0 0
  %3786 = vmatprep.subr.bf16.mxu0 0
  %3787 = vmatpush2.bf16.msra.mxu0 0
  %3788 = vmatprep.subr.bf16.mxu0 0
  %3789 = vmatpush2.bf16.msra.mxu0 0
  %3790 = vmatprep.mubr.bf16.mxu0 0
  %3791 = vmatmul.mubr.bf16.gmra.mxu0 %v3692
  %v3792 = vpop.f32.mrf.mxu0
  %v3793 = vadd.f32 %v3744, %v3792
  %v3794 = vpop.f32.mrf.mxu0
  %v3795 = vpop.f32.mrf.mxu0
  %v3796 = vadd.f32 %v3744, %v3795
  %v3797 = vpop.f32.mrf.mxu0
  %3798 = vdwg.mxu0
  %v3799 = vmax.f32 %v3793, 0.0
  %v3800 = vmax.f32 %v3796, 0.0
  %v3801 = vld [vmem:[%s23] sm:$0xf]
  %v3802 = vld [vmem:[%s23 + $0x4] sm:$0xf]
  %v3803 = vld [vmem:[%s23 + $0x8] sm:$0xf]
  %v3804 = vld [vmem:[%s23 + $0xc] sm:$0xf]
  %v3805 = vld [vmem:[%s24] sm:$0x1]
  %v3806 = vpack.c.bf16 %v3800, %v3799
  %v3808 = vlaneseq
  %v3809 = vshrl.u32 %v3808, 7
  %v3810 = vsub.s32 0, %v3809
  %v3811 = vrot.slane %v3805, %v3810
  %v3817 = vunpack.c.l.b16 %v3801
  %v3818 = vunpack.c.l.b16 %v3802
  %v3819 = vunpack.c.l.b16 %v3803
  %v3820 = vunpack.c.l.b16 %v3804
  %v3821 = vpack.c.b16 %v3818, %v3817
  %v3822 = vpack.c.b16 %v3820, %v3819
  %v3826 = vsel %vm267, %v3806, 0
  %3828 = vmatprep.subr.bf16.mxu0 0
  %3829 = vmatpush1.bf16.msra.mxu0 0
  %3830 = vmatprep.subr.bf16.mxu0 0
  %3831 = vmatpush1.bf16.msra.mxu0 0
  %3832 = vmatprep.subr.bf16.mxu0 0
  %3833 = vmatpush1.bf16.msra.mxu0 0
  %3834 = vmatprep.subr.bf16.mxu0 0
  %3835 = vmatpush1.bf16.msra.mxu0 0
  %3836 = vmatprep.subr.bf16.mxu0 0
  %3837 = vmatpush1.bf16.msra.mxu0 0
  %3838 = vmatprep.subr.bf16.mxu0 0
  %3839 = vmatpush1.bf16.msra.mxu0 0
  %3840 = vmatprep.subr.bf16.mxu0 0
  %3841 = vmatpush1.bf16.msra.mxu0 %v3822
  %3842 = vmatprep.subr.bf16.mxu0 0
  %3843 = vmatpush1.bf16.msra.mxu0 %v3821
  %3844 = vmatprep.subr.bf16.mxu0 0
  %3845 = vmatpush2.bf16.msra.mxu0 0
  %3846 = vmatprep.subr.bf16.mxu0 0
  %3847 = vmatpush2.bf16.msra.mxu0 0
  %3848 = vmatprep.subr.bf16.mxu0 0
  %3849 = vmatpush2.bf16.msra.mxu0 0
  %3850 = vmatprep.subr.bf16.mxu0 0
  %3851 = vmatpush2.bf16.msra.mxu0 0
  %3852 = vmatprep.subr.bf16.mxu0 0
  %3853 = vmatpush2.bf16.msra.mxu0 0
  %3854 = vmatprep.subr.bf16.mxu0 0
  %3855 = vmatpush2.bf16.msra.mxu0 0
  %3856 = vmatprep.subr.bf16.mxu0 0
  %3857 = vmatpush2.bf16.msra.mxu0 0
  %3858 = vmatprep.subr.bf16.mxu0 0
  %3859 = vmatpush2.bf16.msra.mxu0 0
  %3860 = vmatprep.mubr.bf16.mxu0 0
  %3861 = vmatmul.mubr.bf16.gmra.mxu0 %v3826
  %v3862 = vpop.f32.mrf.mxu0
  %v3863 = vadd.f32 %v3811, %v3862
  %v3864 = vpop.f32.mrf.mxu0
  %v3865 = vpop.f32.mrf.mxu0
  %v3866 = vadd.f32 %v3811, %v3865
  %v3867 = vpop.f32.mrf.mxu0
  %3868 = vdwg.mxu0
  %v3869 = vpack.c.bf16 %v3863, %v3863
  %v3870 = vpack.c.bf16 %v3866, %v3866
  %v3871 = vpack.c.bf16 %v845, %v844
  %v3872 = vpack.c.bf16 %v847, %v846
  %v3873 = vpack.c.bf16 %v849, %v848
  %v3874 = vpack.c.bf16 %v851, %v850
  %v3875 = vpack.c.bf16 %v853, %v852
  %v3876 = vpack.c.bf16 %v855, %v854
  %v3877 = vpack.c.bf16 %v857, %v856
  %v3878 = vpack.c.bf16 %v859, %v858
  %v3880 = vsel %vm267, %v3869, 0
  %v3883 = vsel %vm267, %v3871, 0
  %v3886 = vsel %vm267, %v3872, 0
  %v3889 = vsel %vm267, %v3873, 0
  %v3892 = vsel %vm267, %v3874, 0
  %3894 = vmatprep.subr.bf16.mxu0 0
  %3895 = vmatpush1.bf16.xpose.msra.mxu0 0
  %3896 = vmatprep.subr.bf16.mxu0 0
  %3897 = vmatpush1.bf16.xpose.msra.mxu0 0
  %3898 = vmatprep.subr.bf16.mxu0 0
  %3899 = vmatpush1.bf16.xpose.msra.mxu0 0
  %3900 = vmatprep.subr.bf16.mxu0 0
  %3901 = vmatpush1.bf16.xpose.msra.mxu0 0
  %3902 = vmatprep.subr.bf16.mxu0 0
  %3903 = vmatpush1.bf16.xpose.msra.mxu0 %v3892
  %3904 = vmatprep.subr.bf16.mxu0 0
  %3905 = vmatpush1.bf16.xpose.msra.mxu0 %v3889
  %3906 = vmatprep.subr.bf16.mxu0 0
  %3907 = vmatpush1.bf16.xpose.msra.mxu0 %v3886
  %3908 = vmatprep.subr.bf16.mxu0 0
  %3909 = vmatpush1.bf16.xpose.msra.mxu0 %v3883
  %3910 = vmatprep.subr.bf16.mxu0 0
  %3911 = vmatpush2.bf16.xpose.msra.mxu0 0
  %3912 = vmatprep.subr.bf16.mxu0 0
  %3913 = vmatpush2.bf16.xpose.msra.mxu0 0
  %3914 = vmatprep.subr.bf16.mxu0 0
  %3915 = vmatpush2.bf16.xpose.msra.mxu0 0
  %3916 = vmatprep.subr.bf16.mxu0 0
  %3917 = vmatpush2.bf16.xpose.msra.mxu0 0
  %3918 = vmatprep.subr.bf16.mxu0 0
  %3919 = vmatpush2.bf16.xpose.msra.mxu0 0
  %3920 = vmatprep.subr.bf16.mxu0 0
  %3921 = vmatpush2.bf16.xpose.msra.mxu0 0
  %3922 = vmatprep.subr.bf16.mxu0 0
  %3923 = vmatpush2.bf16.xpose.msra.mxu0 0
  %3924 = vmatprep.subr.bf16.mxu0 0
  %3925 = vmatpush2.bf16.xpose.msra.mxu0 0
  %3926 = vmatprep.mubr.bf16.mxu0 0
  %3927 = vmatmul.mubr.bf16.gmra.mxu0 %v3880
  %v3928 = vpop.f32.mrf.mxu0
  %v3929 = vadd.f32 0.0, %v3928
  %v3930 = vpop.f32.mrf.mxu0
  %v3931 = vpop.f32.mrf.mxu0
  %v3932 = vpop.f32.mrf.mxu0
  %3933 = vdwg.mxu0
  %v3935 = vsel %vm267, %v3870, 0
  %v3938 = vsel %vm267, %v3875, 0
  %v3941 = vsel %vm267, %v3876, 0
  %v3944 = vsel %vm267, %v3877, 0
  %v3947 = vsel %vm267, %v3878, 0
  %3949 = vmatprep.subr.bf16.mxu0 0
  %3950 = vmatpush1.bf16.xpose.msra.mxu0 0
  %3951 = vmatprep.subr.bf16.mxu0 0
  %3952 = vmatpush1.bf16.xpose.msra.mxu0 0
  %3953 = vmatprep.subr.bf16.mxu0 0
  %3954 = vmatpush1.bf16.xpose.msra.mxu0 0
  %3955 = vmatprep.subr.bf16.mxu0 0
  %3956 = vmatpush1.bf16.xpose.msra.mxu0 0
  %3957 = vmatprep.subr.bf16.mxu0 0
  %3958 = vmatpush1.bf16.xpose.msra.mxu0 %v3947
  %3959 = vmatprep.subr.bf16.mxu0 0
  %3960 = vmatpush1.bf16.xpose.msra.mxu0 %v3944
  %3961 = vmatprep.subr.bf16.mxu0 0
  %3962 = vmatpush1.bf16.xpose.msra.mxu0 %v3941
  %3963 = vmatprep.subr.bf16.mxu0 0
  %3964 = vmatpush1.bf16.xpose.msra.mxu0 %v3938
  %3965 = vmatprep.subr.bf16.mxu0 0
  %3966 = vmatpush2.bf16.xpose.msra.mxu0 0
  %3967 = vmatprep.subr.bf16.mxu0 0
  %3968 = vmatpush2.bf16.xpose.msra.mxu0 0
  %3969 = vmatprep.subr.bf16.mxu0 0
  %3970 = vmatpush2.bf16.xpose.msra.mxu0 0
  %3971 = vmatprep.subr.bf16.mxu0 0
  %3972 = vmatpush2.bf16.xpose.msra.mxu0 0
  %3973 = vmatprep.subr.bf16.mxu0 0
  %3974 = vmatpush2.bf16.xpose.msra.mxu0 0
  %3975 = vmatprep.subr.bf16.mxu0 0
  %3976 = vmatpush2.bf16.xpose.msra.mxu0 0
  %3977 = vmatprep.subr.bf16.mxu0 0
  %3978 = vmatpush2.bf16.xpose.msra.mxu0 0
  %3979 = vmatprep.subr.bf16.mxu0 0
  %3980 = vmatpush2.bf16.xpose.msra.mxu0 0
  %3981 = vmatprep.mubr.bf16.mxu0 0
  %3982 = vmatmul.mubr.bf16.gmra.mxu0 %v3935
  %v3983 = vpop.f32.mrf.mxu0
  %v3984 = vadd.f32 0.0, %v3983
  %v3985 = vpop.f32.mrf.mxu0
  %v3986 = vpop.f32.mrf.mxu0
  %v3987 = vpop.f32.mrf.mxu0
  %3988 = vdwg.mxu0
  %3991 = vrot.lane.b32.xlu0 %v3729, 64
  %v3992 = vpop.permute.xlu0 %3991
  %3993 = vrot.lane.b32.xlu0 %v3732, 64
  %v3994 = vpop.permute.xlu0 %3993
  %v3997 = vsel %vm2104, %v3929, %v3992
  %v3998 = vsel %vm2104, %v3984, %v3994
  %vm3999 = vcmask 556032
  %v4000 = vsel %vm3999, %v3997, 0.0
  %v4001 = vsel %vm3999, %v3998, 0.0
  %4002 = vst [vmem:[%s25] sm:$0xff] %v4000
  %4003 = vst [vmem:[%s25 + $0x8] sm:$0xff] %v4001
  // Predicated region
  $region102: #{mask2former_forward.3} parent=0 // pred_check
    _
  $region103: #{mask2former_forward.3} parent=0 // pred_check_branch
    %4005 = sbr.rel (0) target = $region105
  $region104: #{mask2former_forward.3} parent=0 // pred_region
    _
  $region105: #{mask2former_forward.3} parent=0 // pred_fallthru
    _
  // Predicated region
  $region106: #{mask2former_forward.3} parent=0 // pred_check
    _
  $region107: #{mask2former_forward.3} parent=0 // pred_check_branch
    %4007 = sbr.rel (0) target = $region109
  $region108: #{mask2former_forward.3} parent=0 // pred_region
    _
  $region109: #{mask2former_forward.3} parent=0 // pred_fallthru
    _

</llo_original>
